<compile_context>
chip_gen: v7x
topology: tpu7x:2x2x1
jax: 0.10.0
libtpu: 0.0.40
codegen_flags: <defaults>
</compile_context>

<pallas_src>
import functools

import numpy as np
import jax
import jax.numpy as jnp
from jax import lax
from jax.experimental import pallas as pl
from jax.experimental.pallas import tpu as pltpu

EPS = 1e-6


# ----------------------------- shared math helpers (pure jnp, usable in-kernel) ----------

def _erf(z):
    # Abramowitz & Stegun 7.1.26 (max abs err ~1.5e-7); only exp/mul/add -> lowers on Mosaic.
    a1, a2, a3, a4, a5 = 0.254829592, -0.284496736, 1.421413741, -1.453152027, 1.061405429
    p = 0.3275911
    s = jnp.where(z >= 0.0, 1.0, -1.0)
    az = jnp.abs(z)
    t = 1.0 / (1.0 + p * az)
    poly = ((((a5 * t + a4) * t + a3) * t + a2) * t + a1) * t
    return s * (1.0 - poly * jnp.exp(-az * az))


def _gelu(z):
    # erf-based GELU, matching torch.nn.GELU() default (up to the erf approximation above).
    return 0.5 * z * (1.0 + _erf(z * (1.0 / np.sqrt(2.0))))


def _ln_cf(x_cl, g_c1, b_c1):
    # PyTorch "channels_first" LayerNorm in (C, L) layout: reduce over the channel axis (0).
    u = jnp.mean(x_cl, axis=0, keepdims=True)
    d = x_cl - u
    s = jnp.mean(d * d, axis=0, keepdims=True)
    return d * lax.rsqrt(s + EPS) * g_c1 + b_c1


def _shift_lanes(x, s):
    # y[:, l] = x[:, l + s], zero-filled outside [0, L).  Static slice + concat (no scratch).
    if s == 0:
        return x
    C, L = x.shape
    z = jnp.zeros((C, abs(s)), x.dtype)
    if s > 0:
        return jnp.concatenate([x[:, s:], z], axis=1)
    return jnp.concatenate([z, x[:, :L + s]], axis=1)


def _dw_flat(x, w_ck, b_c1, taps, mask_l, mask_r):
    # Depthwise conv on flattened (C, L=H*W) data.
    #   taps: tuple of (k, flat_shift, edge) with edge in {-1, 0, +1}.
    #   flat_shift = dy*W + dx reads source (h+dy, w+dx); zero-fill handles the h boundary,
    #   mask_l / mask_r zero the contributions that would wrap across a row edge (dx = -1/+1).
    acc = jnp.zeros_like(x)
    for k, s, edge in taps:
        v = _shift_lanes(x, s)
        if edge == -1:
            v = v * mask_l
        elif edge == 1:
            v = v * mask_r
        acc = acc + v * w_ck[:, k:k + 1]
    return acc + b_c1


# ----------------------------- the fused Pallas kernel -----------------------------------

def _ghpa_kernel(x_ref,                                   # (1, Cin, L)
                 pxy_ref, pzx_ref, pzy_ref,               # (C4, L) interpolated param grids
                 ml_ref, mr_ref,                          # (1, L) row-edge masks (w!=0 / w!=W-1)
                 xy_dw_w, xy_dw_b, xy_pw_w, xy_pw_b,
                 zx_dw_w, zx_dw_b, zx_pw_w, zx_pw_b,
                 zy_dw_w, zy_dw_b, zy_pw_w, zy_pw_b,
                 dw_pw_w, dw_pw_b, dw_dw_w, dw_dw_b,
                 n1_g, n1_b, n2_g, n2_b,
                 ldw_dw_w, ldw_dw_b, ldw_pw_w, ldw_pw_b,
                 o_ref,                                   # (1, Cout, L)
                 mxy_s, mzx_s, mzy_s,                     # persistent VMEM scratch (C4, L)
                 *, W, C4):
    ml = ml_ref[...]
    mr = mr_ref[...]

    # tap tables: (weight index, flat shift, row-edge kind)
    taps_2d = tuple((kh * 3 + kw, (kh - 1) * W + (kw - 1), kw - 1)
                    for kh in range(3) for kw in range(3))          # depthwise 3x3
    taps_v = tuple((k, (k - 1) * W, 0) for k in range(3))           # conv1d along H
    taps_h = tuple((k, (k - 1), (k - 1)) for k in range(3))         # conv1d along W

    # ---- prep: batch-independent Hadamard multipliers, computed once into scratch --------
    @pl.when(pl.program_id(0) == 0)
    def _prep():
        # conv_xy(interp(params_xy))  -> multiplier over (c, h, w)
        t = _dw_flat(pxy_ref[...], xy_dw_w[...], xy_dw_b[...], taps_2d, ml, mr)
        mxy_s[...] = jnp.dot(xy_pw_w[...], _gelu(t),
                             preferred_element_type=jnp.float32) + xy_pw_b[...]
        # conv_zx(interp(params_zx))  -> multiplier over (c, h)   (pre-broadcast over w)
        t = _dw_flat(pzx_ref[...], zx_dw_w[...], zx_dw_b[...], taps_v, ml, mr)
        mzx_s[...] = jnp.dot(zx_pw_w[...], _gelu(t),
                             preferred_element_type=jnp.float32) + zx_pw_b[...]
        # conv_zy(interp(params_zy))  -> multiplier over (c, w)   (pre-broadcast over h)
        t = _dw_flat(pzy_ref[...], zy_dw_w[...], zy_dw_b[...], taps_h, ml, mr)
        mzy_s[...] = jnp.dot(zy_pw_w[...], _gelu(t),
                             preferred_element_type=jnp.float32) + zy_pw_b[...]

    # ---- per-batch-element main body ------------------------------------------------------
    x = x_ref[0]                                         # (Cin, L)
    xn = _ln_cf(x, n1_g[...], n1_b[...])                 # norm1 (channels_first)

    # Hadamard-product attention branches (chunk along channel rows)
    x1 = xn[0 * C4:1 * C4] * mxy_s[...]
    x2 = xn[1 * C4:2 * C4] * mzx_s[...]
    x3 = xn[2 * C4:3 * C4] * mzy_s[...]

    # dw branch: 1x1 conv (single MXU matmul) -> GELU -> depthwise 3x3
    x4 = jnp.dot(dw_pw_w[...], xn[3 * C4:4 * C4],
                 preferred_element_type=jnp.float32) + dw_pw_b[...]
    x4 = _dw_flat(_gelu(x4), dw_dw_w[...], dw_dw_b[...], taps_2d, ml, mr)

    xc = jnp.concatenate([x1, x2, x3, x4], axis=0)        # (Cin, L)
    xc = _ln_cf(xc, n2_g[...], n2_b[...])                 # norm2

    # ldw head: depthwise 3x3 -> GELU -> 1x1 (dim_in -> dim_out), lane-dense output store
    t = _gelu(_dw_flat(xc, ldw_dw_w[...], ldw_dw_b[...], taps_2d, ml, mr))
    y = jnp.dot(ldw_pw_w[...], t, preferred_element_type=jnp.float32) + ldw_pw_b[...]
    o_ref[0] = y.astype(o_ref.dtype)


# ----------------------------- glue: bilinear (align_corners=True) resize ----------------

def _interp_matrix(out_size, in_size):
    if out_size == 1:
        m = np.zeros((1, in_size), np.float64)
        m[0, 0] = 1.0
        return m.astype(np.float32)
    i = np.arange(out_size, dtype=np.float64)
    src = i * (in_size - 1) / (out_size - 1)
    i0 = np.clip(np.floor(src).astype(np.int64), 0, in_size - 1)
    i1 = np.minimum(i0 + 1, in_size - 1)
    frac = src - i0
    m = np.zeros((out_size, in_size), np.float64)
    m[np.arange(out_size), i0] += 1.0 - frac
    m[np.arange(out_size), i1] += frac
    return m.astype(np.float32)


def _bilinear_resize(img_chw, out_h, out_w):
    # TODO(synk): F.interpolate(bilinear, align_corners=True) of the tiny parameter grids is
    # expressed in plain JAX as two small interpolation matmuls (batch-independent setup).
    c, h, w = img_chw.shape
    mh = jnp.asarray(_interp_matrix(out_h, h))
    mw = jnp.asarray(_interp_matrix(out_w, w))
    return jnp.einsum('Hh,chw,Ww->cHW', mh, img_chw, mw)


# ----------------------------- wrapper ----------------------------------------------------

def ghpa_forward(x_nchw, p):
    """Pallas forward.  x_nchw: (B, dim_in, H, W) f32 -> (B, dim_out, H, W) f32."""
    B, Cin, H, W = x_nchw.shape
    C4 = Cin // 4
    Cout = p['ldw_pw_w'].shape[0]
    L = H * W

    # NCHW -> flattened (B, Cin, L): a free reshape (no HBM transpose pass).
    x_flat = x_nchw.reshape(B, Cin, L).astype(jnp.float32)

    # interpolated parameter grids (tiny, batch-independent glue), pre-broadcast to (C4, L)
    pxy = _bilinear_resize(p['params_xy'][0], H, W).reshape(C4, L)
    pzx = _bilinear_resize(p['params_zx'][0], C4, H)[0]                       # (C4, H)
    pzy = _bilinear_resize(p['params_zy'][0], C4, W)[0]                       # (C4, W)
    pzx_full = jnp.broadcast_to(pzx[:, :, None], (C4, H, W)).reshape(C4, L)
    pzy_full = jnp.broadcast_to(pzy[:, None, :], (C4, H, W)).reshape(C4, L)

    # row-edge masks for the flattened depthwise convs (valid source column for dx = -1 / +1)
    col = np.arange(L) % W
    mask_l = jnp.asarray((col != 0).astype(np.float32)[None, :])
    mask_r = jnp.asarray((col != W - 1).astype(np.float32)[None, :])

    # depthwise 3x3 weights flattened to (C, 9) for per-tap column slicing
    xy_dw_w = p['xy_dw_w'].reshape(C4, 9)
    dw_dw_w = p['dw_dw_w'].reshape(C4, 9)
    ldw_dw_w = p['ldw_dw_w'].reshape(Cin, 9)

    params_list = [pxy, pzx_full, pzy_full, mask_l, mask_r,
                   xy_dw_w, p['xy_dw_b'], p['xy_pw_w'], p['xy_pw_b'],
                   p['zx_dw_w'], p['zx_dw_b'], p['zx_pw_w'], p['zx_pw_b'],
                   p['zy_dw_w'], p['zy_dw_b'], p['zy_pw_w'], p['zy_pw_b'],
                   p['dw_pw_w'], p['dw_pw_b'], dw_dw_w, p['dw_dw_b'],
                   p['n1_g'], p['n1_b'], p['n2_g'], p['n2_b'],
                   ldw_dw_w, p['ldw_dw_b'], p['ldw_pw_w'], p['ldw_pw_b']]

    def fullspec(a):
        nd = a.ndim
        return pl.BlockSpec(tuple(a.shape), lambda b, _nd=nd: (0,) * _nd)

    kernel = functools.partial(_ghpa_kernel, W=W, C4=C4)

    y_flat = pl.pallas_call(
        kernel,
        out_shape=jax.ShapeDtypeStruct((B, Cout, L), jnp.float32),
        grid=(B,),
        in_specs=[pl.BlockSpec((1, Cin, L), lambda b: (b, 0, 0))]
                 + [fullspec(a) for a in params_list],
        out_specs=pl.BlockSpec((1, Cout, L), lambda b: (b, 0, 0)),
        scratch_shapes=[pltpu.VMEM((C4, L), jnp.float32)] * 3,
        compiler_params=pltpu.CompilerParams(
            # "arbitrary": the prep-once-into-persistent-scratch pattern needs the batch loop
            # to run sequentially on one core (safe on v5e/v6e/v7x; measured cost vs
            # "parallel" is ~0 on single-core chips).
            dimension_semantics=("arbitrary",),
            vmem_limit_bytes=64 * 1024 * 1024),
    )(x_flat, *params_list)

    # flattened NC(HW) -> NCHW: free reshape, no transpose pass.
    return y_flat.reshape(B, Cout, H, W)


# ----------------------------- plain-JAX reference (for validation) ----------------------

def _ref_dw2d(x_bhwc, w_c33, b_c1):
    C = x_bhwc.shape[-1]
    k = jnp.transpose(w_c33, (1, 2, 0))[:, :, None, :]            # (3,3,1,C) HWIO
    y = lax.conv_general_dilated(x_bhwc, k, (1, 1), 'SAME',
                                 dimension_numbers=('NHWC', 'HWIO', 'NHWC'),
                                 feature_group_count=C, precision=lax.Precision.HIGHEST)
    return y + b_c1.reshape(1, 1, 1, C)


def _ref_dw1d(x_lc, w_c3, b_c1):
    C = x_lc.shape[-1]
    k = jnp.transpose(w_c3, (1, 0))[None, :, None, :]             # (1,3,1,C) HWIO
    y = lax.conv_general_dilated(x_lc[None, None], k, (1, 1), [(0, 0), (1, 1)],
                                 dimension_numbers=('NHWC', 'HWIO', 'NHWC'),
                                 feature_group_count=C, precision=lax.Precision.HIGHEST)[0, 0]
    return y + b_c1.reshape(1, C)


def _ref_pw(x, w_oi, b_o1):
    return jnp.einsum('...i,oi->...o', x, w_oi,
                      precision=lax.Precision.HIGHEST) + b_o1.reshape(-1)


def _ref_ln(x_bhwc, g_c1, b_c1):
    u = jnp.mean(x_bhwc, -1, keepdims=True)
    d = x_bhwc - u
    s = jnp.mean(d * d, -1, keepdims=True)
    return d * lax.rsqrt(s + EPS) * g_c1.reshape(-1) + b_c1.reshape(-1)


def ghpa_reference(x_nchw, p):
    B, Cin, H, W = x_nchw.shape
    C4 = Cin // 4
    x = jnp.transpose(x_nchw, (0, 2, 3, 1)).astype(jnp.float32)
    pxy = jnp.transpose(_bilinear_resize(p['params_xy'][0], H, W), (1, 2, 0))      # (H, W, C4)
    pzx = jnp.transpose(_bilinear_resize(p['params_zx'][0], C4, H)[0], (1, 0))     # (H, C4)
    pzy = jnp.transpose(_bilinear_resize(p['params_zy'][0], C4, W)[0], (1, 0))     # (W, C4)
    m_xy = _ref_pw(_gelu(_ref_dw2d(pxy[None], p['xy_dw_w'], p['xy_dw_b'])[0]),
                   p['xy_pw_w'], p['xy_pw_b'])
    m_zx = _ref_pw(_gelu(_ref_dw1d(pzx, p['zx_dw_w'], p['zx_dw_b'])), p['zx_pw_w'], p['zx_pw_b'])
    m_zy = _ref_pw(_gelu(_ref_dw1d(pzy, p['zy_dw_w'], p['zy_dw_b'])), p['zy_pw_w'], p['zy_pw_b'])
    xn = _ref_ln(x, p['n1_g'], p['n1_b'])
    x1 = xn[..., 0:C4] * m_xy
    x2 = xn[..., C4:2 * C4] * m_zx[None, :, None, :]
    x3 = xn[..., 2 * C4:3 * C4] * m_zy[None, None, :, :]
    x4 = _gelu(_ref_pw(xn[..., 3 * C4:], p['dw_pw_w'], p['dw_pw_b']))
    x4 = _ref_dw2d(x4, p['dw_dw_w'], p['dw_dw_b'])
    xc = jnp.concatenate([x1, x2, x3, x4], -1)
    xc = _ref_ln(xc, p['n2_g'], p['n2_b'])
    t = _gelu(_ref_dw2d(xc, p['ldw_dw_w'], p['ldw_dw_b']))
    y = _ref_pw(t, p['ldw_pw_w'], p['ldw_pw_b'])
    return jnp.transpose(y, (0, 3, 1, 2))


# ----------------------------- deterministic parameter init ------------------------------

def init_params(key, dim_in, dim_out, gx=8, gy=8):
    C4 = dim_in // 4
    ks = jax.random.split(key, 28)

    def w(k, shape, scale=0.3):
        return scale * jax.random.normal(k, shape, jnp.float32)

    # The module inits params_* with ones_ and LayerNorm with (1, 0); perturb deterministically
    # so every code path is numerically exercised.
    return dict(
        params_xy=1.0 + 0.1 * jax.random.normal(ks[0], (1, C4, gx, gy), jnp.float32),
        params_zx=1.0 + 0.1 * jax.random.normal(ks[1], (1, 1, C4, gx), jnp.float32),
        params_zy=1.0 + 0.1 * jax.random.normal(ks[2], (1, 1, C4, gy), jnp.float32),
        xy_dw_w=w(ks[3], (C4, 3, 3)), xy_dw_b=w(ks[4], (C4, 1), 0.05),
        xy_pw_w=w(ks[5], (C4, C4)), xy_pw_b=w(ks[6], (C4, 1), 0.05),
        zx_dw_w=w(ks[7], (C4, 3)), zx_dw_b=w(ks[8], (C4, 1), 0.05),
        zx_pw_w=w(ks[9], (C4, C4)), zx_pw_b=w(ks[10], (C4, 1), 0.05),
        zy_dw_w=w(ks[11], (C4, 3)), zy_dw_b=w(ks[12], (C4, 1), 0.05),
        zy_pw_w=w(ks[13], (C4, C4)), zy_pw_b=w(ks[14], (C4, 1), 0.05),
        dw_pw_w=w(ks[15], (C4, C4)), dw_pw_b=w(ks[16], (C4, 1), 0.05),
        dw_dw_w=w(ks[17], (C4, 3, 3)), dw_dw_b=w(ks[18], (C4, 1), 0.05),
        n1_g=1.0 + 0.1 * jax.random.normal(ks[19], (dim_in, 1), jnp.float32),
        n1_b=0.1 * jax.random.normal(ks[20], (dim_in, 1), jnp.float32),
        n2_g=1.0 + 0.1 * jax.random.normal(ks[21], (dim_in, 1), jnp.float32),
        n2_b=0.1 * jax.random.normal(ks[22], (dim_in, 1), jnp.float32),
        ldw_dw_w=w(ks[23], (dim_in, 3, 3)), ldw_dw_b=w(ks[24], (dim_in, 1), 0.05),
        ldw_pw_w=w(ks[25], (dim_out, dim_in)), ldw_pw_b=w(ks[26], (dim_out, 1), 0.05),
    )


if __name__ == "__main__":
    B, dim_in, dim_out = 2, 16, 8
    H, W = 16, 24                                        # H != W to exercise axis conventions
    key = jax.random.PRNGKey(0)
    kx, kp = jax.random.split(key)
    params = init_params(kp, dim_in, dim_out)
    x = jax.random.normal(kx, (B, dim_in, H, W), jnp.float32)    # PyTorch NCHW input

    y = jax.block_until_ready(ghpa_forward(x, params))
    assert y.shape == (B, dim_out, H, W), y.shape

    y_ref = jax.block_until_ready(ghpa_reference(x, params))
    np.testing.assert_allclose(np.asarray(y), np.asarray(y_ref), rtol=2e-3, atol=2e-3)

    print("KERNEL_OK")
</pallas_src>

<mosaic_0001>
module attributes {stable_mosaic.version = 11 : i64} {
  func.func @_ghpa_kernel(%arg0: i32, %arg1: memref<1x16x384xf32, #tpu.memory_space<vmem>>, %arg2: memref<4x384xf32, #tpu.memory_space<vmem>>, %arg3: memref<4x384xf32, #tpu.memory_space<vmem>>, %arg4: memref<4x384xf32, #tpu.memory_space<vmem>>, %arg5: memref<1x384xf32, #tpu.memory_space<vmem>>, %arg6: memref<1x384xf32, #tpu.memory_space<vmem>>, %arg7: memref<4x9xf32, #tpu.memory_space<vmem>>, %arg8: memref<4x1xf32, #tpu.memory_space<vmem>>, %arg9: memref<4x4xf32, #tpu.memory_space<vmem>>, %arg10: memref<4x1xf32, #tpu.memory_space<vmem>>, %arg11: memref<4x3xf32, #tpu.memory_space<vmem>>, %arg12: memref<4x1xf32, #tpu.memory_space<vmem>>, %arg13: memref<4x4xf32, #tpu.memory_space<vmem>>, %arg14: memref<4x1xf32, #tpu.memory_space<vmem>>, %arg15: memref<4x3xf32, #tpu.memory_space<vmem>>, %arg16: memref<4x1xf32, #tpu.memory_space<vmem>>, %arg17: memref<4x4xf32, #tpu.memory_space<vmem>>, %arg18: memref<4x1xf32, #tpu.memory_space<vmem>>, %arg19: memref<4x4xf32, #tpu.memory_space<vmem>>, %arg20: memref<4x1xf32, #tpu.memory_space<vmem>>, %arg21: memref<4x9xf32, #tpu.memory_space<vmem>>, %arg22: memref<4x1xf32, #tpu.memory_space<vmem>>, %arg23: memref<16x1xf32, #tpu.memory_space<vmem>>, %arg24: memref<16x1xf32, #tpu.memory_space<vmem>>, %arg25: memref<16x1xf32, #tpu.memory_space<vmem>>, %arg26: memref<16x1xf32, #tpu.memory_space<vmem>>, %arg27: memref<16x9xf32, #tpu.memory_space<vmem>>, %arg28: memref<16x1xf32, #tpu.memory_space<vmem>>, %arg29: memref<8x16xf32, #tpu.memory_space<vmem>>, %arg30: memref<8x1xf32, #tpu.memory_space<vmem>>, %arg31: memref<1x8x384xf32, #tpu.memory_space<vmem>>, %arg32: memref<4x384xf32, #tpu.memory_space<vmem>>, %arg33: memref<4x384xf32, #tpu.memory_space<vmem>>, %arg34: memref<4x384xf32, #tpu.memory_space<vmem>>) attributes {dimension_semantics = [#tpu.dimension_semantics<arbitrary>], iteration_bounds = array<i64: 2>, scalar_prefetch = 0 : i64, scratch_operands = 3 : i64, tpu.core_type = #tpu.core_type<tc>, window_params = [{transform_indices = @transform_0, window_bounds = array<i64: 1, 16, 384>}, {pipeline_mode = #tpu.pipeline_mode<synchronous>, transform_indices = @transform_1, window_bounds = array<i64: 4, 384>}, {pipeline_mode = #tpu.pipeline_mode<synchronous>, transform_indices = @transform_2, window_bounds = array<i64: 4, 384>}, {pipeline_mode = #tpu.pipeline_mode<synchronous>, transform_indices = @transform_3, window_bounds = array<i64: 4, 384>}, {pipeline_mode = #tpu.pipeline_mode<synchronous>, transform_indices = @transform_4, window_bounds = array<i64: 1, 384>}, {pipeline_mode = #tpu.pipeline_mode<synchronous>, transform_indices = @transform_5, window_bounds = array<i64: 1, 384>}, {pipeline_mode = #tpu.pipeline_mode<synchronous>, transform_indices = @transform_6, window_bounds = array<i64: 4, 9>}, {pipeline_mode = #tpu.pipeline_mode<synchronous>, transform_indices = @transform_7, window_bounds = array<i64: 4, 1>}, {pipeline_mode = #tpu.pipeline_mode<synchronous>, transform_indices = @transform_8, window_bounds = array<i64: 4, 4>}, {pipeline_mode = #tpu.pipeline_mode<synchronous>, transform_indices = @transform_9, window_bounds = array<i64: 4, 1>}, {pipeline_mode = #tpu.pipeline_mode<synchronous>, transform_indices = @transform_10, window_bounds = array<i64: 4, 3>}, {pipeline_mode = #tpu.pipeline_mode<synchronous>, transform_indices = @transform_11, window_bounds = array<i64: 4, 1>}, {pipeline_mode = #tpu.pipeline_mode<synchronous>, transform_indices = @transform_12, window_bounds = array<i64: 4, 4>}, {pipeline_mode = #tpu.pipeline_mode<synchronous>, transform_indices = @transform_13, window_bounds = array<i64: 4, 1>}, {pipeline_mode = #tpu.pipeline_mode<synchronous>, transform_indices = @transform_14, window_bounds = array<i64: 4, 3>}, {pipeline_mode = #tpu.pipeline_mode<synchronous>, transform_indices = @transform_15, window_bounds = array<i64: 4, 1>}, {pipeline_mode = #tpu.pipeline_mode<synchronous>, transform_indices = @transform_16, window_bounds = array<i64: 4, 4>}, {pipeline_mode = #tpu.pipeline_mode<synchronous>, transform_indices = @transform_17, window_bounds = array<i64: 4, 1>}, {pipeline_mode = #tpu.pipeline_mode<synchronous>, transform_indices = @transform_18, window_bounds = array<i64: 4, 4>}, {pipeline_mode = #tpu.pipeline_mode<synchronous>, transform_indices = @transform_19, window_bounds = array<i64: 4, 1>}, {pipeline_mode = #tpu.pipeline_mode<synchronous>, transform_indices = @transform_20, window_bounds = array<i64: 4, 9>}, {pipeline_mode = #tpu.pipeline_mode<synchronous>, transform_indices = @transform_21, window_bounds = array<i64: 4, 1>}, {pipeline_mode = #tpu.pipeline_mode<synchronous>, transform_indices = @transform_22, window_bounds = array<i64: 16, 1>}, {pipeline_mode = #tpu.pipeline_mode<synchronous>, transform_indices = @transform_23, window_bounds = array<i64: 16, 1>}, {pipeline_mode = #tpu.pipeline_mode<synchronous>, transform_indices = @transform_24, window_bounds = array<i64: 16, 1>}, {pipeline_mode = #tpu.pipeline_mode<synchronous>, transform_indices = @transform_25, window_bounds = array<i64: 16, 1>}, {pipeline_mode = #tpu.pipeline_mode<synchronous>, transform_indices = @transform_26, window_bounds = array<i64: 16, 9>}, {pipeline_mode = #tpu.pipeline_mode<synchronous>, transform_indices = @transform_27, window_bounds = array<i64: 16, 1>}, {pipeline_mode = #tpu.pipeline_mode<synchronous>, transform_indices = @transform_28, window_bounds = array<i64: 8, 16>}, {pipeline_mode = #tpu.pipeline_mode<synchronous>, transform_indices = @transform_29, window_bounds = array<i64: 8, 1>}, {transform_indices = @transform_30, window_bounds = array<i64: 1, 8, 384>}]} {
    %c0 = arith.constant 0 : index
    %c0_0 = arith.constant 0 : index
    %0 = vector.load %arg5[%c0, %c0_0] : memref<1x384xf32, #tpu.memory_space<vmem>>, vector<1x384xf32>
    %c0_1 = arith.constant 0 : index
    %c0_2 = arith.constant 0 : index
    %1 = vector.load %arg6[%c0_1, %c0_2] : memref<1x384xf32, #tpu.memory_space<vmem>>, vector<1x384xf32>
    %c0_i32 = arith.constant 0 : i32
    %2 = arith.cmpi eq, %arg0, %c0_i32 : i32
    %3 = arith.extui %2 : i1 to i32
    %c0_i32_3 = arith.constant 0 : i32
    %4 = arith.cmpi ne, %3, %c0_i32_3 : i32
    scf.if %4 {
      %c0_101 = arith.constant 0 : index
      %c0_102 = arith.constant 0 : index
      %311 = vector.load %arg2[%c0_101, %c0_102] : memref<4x384xf32, #tpu.memory_space<vmem>>, vector<4x384xf32>
      %c0_103 = arith.constant 0 : index
      %c0_104 = arith.constant 0 : index
      %312 = vector.load %arg7[%c0_103, %c0_104] : memref<4x9xf32, #tpu.memory_space<vmem>>, vector<4x9xf32>
      %c0_105 = arith.constant 0 : index
      %c0_106 = arith.constant 0 : index
      %313 = vector.load %arg8[%c0_105, %c0_106] : memref<4x1xf32, #tpu.memory_space<vmem>>, vector<4x1xf32>
      %cst_107 = arith.constant 0.000000e+00 : f32
      %314 = vector.broadcast %cst_107 : f32 to vector<4x384xf32>
      %cst_108 = arith.constant 0.000000e+00 : f32
      %315 = vector.broadcast %cst_108 : f32 to vector<4x25xf32>
      %316 = vector.extract_strided_slice %311 {offsets = [0, 0], sizes = [4, 359], strides = [1, 1]} : vector<4x384xf32> to vector<4x359xf32>
      %317 = tpu.concatenate %315, %316 in 1 : vector<4x25xf32>, vector<4x359xf32> -> vector<4x384xf32>
      %318 = vector.broadcast %0 : vector<1x384xf32> to vector<4x384xf32>
      %319 = arith.mulf %317, %318 : vector<4x384xf32>
      %320 = vector.extract_strided_slice %312 {offsets = [0, 0], sizes = [4, 1], strides = [1, 1]} : vector<4x9xf32> to vector<4x1xf32>
      %321 = vector.broadcast %320 : vector<4x1xf32> to vector<4x384xf32>
      %322 = arith.mulf %319, %321 : vector<4x384xf32>
      %323 = arith.addf %314, %322 : vector<4x384xf32>
      %cst_109 = arith.constant 0.000000e+00 : f32
      %324 = vector.broadcast %cst_109 : f32 to vector<4x24xf32>
      %325 = vector.extract_strided_slice %311 {offsets = [0, 0], sizes = [4, 360], strides = [1, 1]} : vector<4x384xf32> to vector<4x360xf32>
      %326 = tpu.concatenate %324, %325 in 1 : vector<4x24xf32>, vector<4x360xf32> -> vector<4x384xf32>
      %327 = vector.extract_strided_slice %312 {offsets = [0, 1], sizes = [4, 1], strides = [1, 1]} : vector<4x9xf32> to vector<4x1xf32>
      %328 = vector.broadcast %327 : vector<4x1xf32> to vector<4x384xf32>
      %329 = arith.mulf %326, %328 : vector<4x384xf32>
      %330 = arith.addf %323, %329 : vector<4x384xf32>
      %cst_110 = arith.constant 0.000000e+00 : f32
      %331 = vector.broadcast %cst_110 : f32 to vector<4x23xf32>
      %332 = vector.extract_strided_slice %311 {offsets = [0, 0], sizes = [4, 361], strides = [1, 1]} : vector<4x384xf32> to vector<4x361xf32>
      %333 = tpu.concatenate %331, %332 in 1 : vector<4x23xf32>, vector<4x361xf32> -> vector<4x384xf32>
      %334 = vector.broadcast %1 : vector<1x384xf32> to vector<4x384xf32>
      %335 = arith.mulf %333, %334 : vector<4x384xf32>
      %336 = vector.extract_strided_slice %312 {offsets = [0, 2], sizes = [4, 1], strides = [1, 1]} : vector<4x9xf32> to vector<4x1xf32>
      %337 = vector.broadcast %336 : vector<4x1xf32> to vector<4x384xf32>
      %338 = arith.mulf %335, %337 : vector<4x384xf32>
      %339 = arith.addf %330, %338 : vector<4x384xf32>
      %cst_111 = arith.constant 0.000000e+00 : f32
      %340 = vector.broadcast %cst_111 : f32 to vector<4x1xf32>
      %341 = vector.extract_strided_slice %311 {offsets = [0, 0], sizes = [4, 383], strides = [1, 1]} : vector<4x384xf32> to vector<4x383xf32>
      %342 = tpu.concatenate %340, %341 in 1 : vector<4x1xf32>, vector<4x383xf32> -> vector<4x384xf32>
      %343 = vector.broadcast %0 : vector<1x384xf32> to vector<4x384xf32>
      %344 = arith.mulf %342, %343 : vector<4x384xf32>
      %345 = vector.extract_strided_slice %312 {offsets = [0, 3], sizes = [4, 1], strides = [1, 1]} : vector<4x9xf32> to vector<4x1xf32>
      %346 = vector.broadcast %345 : vector<4x1xf32> to vector<4x384xf32>
      %347 = arith.mulf %344, %346 : vector<4x384xf32>
      %348 = arith.addf %339, %347 : vector<4x384xf32>
      %349 = vector.extract_strided_slice %312 {offsets = [0, 4], sizes = [4, 1], strides = [1, 1]} : vector<4x9xf32> to vector<4x1xf32>
      %350 = vector.broadcast %349 : vector<4x1xf32> to vector<4x384xf32>
      %351 = arith.mulf %311, %350 : vector<4x384xf32>
      %352 = arith.addf %348, %351 : vector<4x384xf32>
      %cst_112 = arith.constant 0.000000e+00 : f32
      %353 = vector.broadcast %cst_112 : f32 to vector<4x1xf32>
      %354 = vector.extract_strided_slice %311 {offsets = [0, 1], sizes = [4, 383], strides = [1, 1]} : vector<4x384xf32> to vector<4x383xf32>
      %355 = tpu.concatenate %354, %353 in 1 : vector<4x383xf32>, vector<4x1xf32> -> vector<4x384xf32>
      %356 = vector.broadcast %1 : vector<1x384xf32> to vector<4x384xf32>
      %357 = arith.mulf %355, %356 : vector<4x384xf32>
      %358 = vector.extract_strided_slice %312 {offsets = [0, 5], sizes = [4, 1], strides = [1, 1]} : vector<4x9xf32> to vector<4x1xf32>
      %359 = vector.broadcast %358 : vector<4x1xf32> to vector<4x384xf32>
      %360 = arith.mulf %357, %359 : vector<4x384xf32>
      %361 = arith.addf %352, %360 : vector<4x384xf32>
      %cst_113 = arith.constant 0.000000e+00 : f32
      %362 = vector.broadcast %cst_113 : f32 to vector<4x23xf32>
      %363 = vector.extract_strided_slice %311 {offsets = [0, 23], sizes = [4, 361], strides = [1, 1]} : vector<4x384xf32> to vector<4x361xf32>
      %364 = tpu.concatenate %363, %362 in 1 : vector<4x361xf32>, vector<4x23xf32> -> vector<4x384xf32>
      %365 = vector.broadcast %0 : vector<1x384xf32> to vector<4x384xf32>
      %366 = arith.mulf %364, %365 : vector<4x384xf32>
      %367 = vector.extract_strided_slice %312 {offsets = [0, 6], sizes = [4, 1], strides = [1, 1]} : vector<4x9xf32> to vector<4x1xf32>
      %368 = vector.broadcast %367 : vector<4x1xf32> to vector<4x384xf32>
      %369 = arith.mulf %366, %368 : vector<4x384xf32>
      %370 = arith.addf %361, %369 : vector<4x384xf32>
      %cst_114 = arith.constant 0.000000e+00 : f32
      %371 = vector.broadcast %cst_114 : f32 to vector<4x24xf32>
      %372 = vector.extract_strided_slice %311 {offsets = [0, 24], sizes = [4, 360], strides = [1, 1]} : vector<4x384xf32> to vector<4x360xf32>
      %373 = tpu.concatenate %372, %371 in 1 : vector<4x360xf32>, vector<4x24xf32> -> vector<4x384xf32>
      %374 = vector.extract_strided_slice %312 {offsets = [0, 7], sizes = [4, 1], strides = [1, 1]} : vector<4x9xf32> to vector<4x1xf32>
      %375 = vector.broadcast %374 : vector<4x1xf32> to vector<4x384xf32>
      %376 = arith.mulf %373, %375 : vector<4x384xf32>
      %377 = arith.addf %370, %376 : vector<4x384xf32>
      %cst_115 = arith.constant 0.000000e+00 : f32
      %378 = vector.broadcast %cst_115 : f32 to vector<4x25xf32>
      %379 = vector.extract_strided_slice %311 {offsets = [0, 25], sizes = [4, 359], strides = [1, 1]} : vector<4x384xf32> to vector<4x359xf32>
      %380 = tpu.concatenate %379, %378 in 1 : vector<4x359xf32>, vector<4x25xf32> -> vector<4x384xf32>
      %381 = vector.broadcast %1 : vector<1x384xf32> to vector<4x384xf32>
      %382 = arith.mulf %380, %381 : vector<4x384xf32>
      %383 = vector.extract_strided_slice %312 {offsets = [0, 8], sizes = [4, 1], strides = [1, 1]} : vector<4x9xf32> to vector<4x1xf32>
      %384 = vector.broadcast %383 : vector<4x1xf32> to vector<4x384xf32>
      %385 = arith.mulf %382, %384 : vector<4x384xf32>
      %386 = arith.addf %377, %385 : vector<4x384xf32>
      %387 = vector.broadcast %313 : vector<4x1xf32> to vector<4x384xf32>
      %388 = arith.addf %386, %387 : vector<4x384xf32>
      %c0_116 = arith.constant 0 : index
      %c0_117 = arith.constant 0 : index
      %389 = vector.load %arg9[%c0_116, %c0_117] : memref<4x4xf32, #tpu.memory_space<vmem>>, vector<4x4xf32>
      %cst_118 = arith.constant 5.000000e-01 : f32
      %390 = vector.broadcast %cst_118 : f32 to vector<4x384xf32>
      %391 = arith.mulf %390, %388 : vector<4x384xf32>
      %cst_119 = arith.constant 0.707106769 : f32
      %392 = vector.broadcast %cst_119 : f32 to vector<4x384xf32>
      %393 = arith.mulf %388, %392 : vector<4x384xf32>
      %cst_120 = arith.constant 0.000000e+00 : f32
      %394 = vector.broadcast %cst_120 : f32 to vector<4x384xf32>
      %395 = arith.cmpf oge, %393, %394 : vector<4x384xf32>
      %cst_121 = arith.constant 1.000000e+00 : f32
      %cst_122 = arith.constant -1.000000e+00 : f32
      %396 = vector.broadcast %cst_121 : f32 to vector<4x384xf32>
      %397 = vector.broadcast %cst_122 : f32 to vector<4x384xf32>
      %398 = arith.select %395, %396, %397 : vector<4x384xi1>, vector<4x384xf32>
      %399 = math.absf %393 : vector<4x384xf32>
      %cst_123 = arith.constant 0.327591091 : f32
      %400 = vector.broadcast %cst_123 : f32 to vector<4x384xf32>
      %401 = arith.mulf %400, %399 : vector<4x384xf32>
      %cst_124 = arith.constant 1.000000e+00 : f32
      %402 = vector.broadcast %cst_124 : f32 to vector<4x384xf32>
      %403 = arith.addf %402, %401 : vector<4x384xf32>
      %cst_125 = arith.constant 1.000000e+00 : f32
      %404 = vector.broadcast %cst_125 : f32 to vector<4x384xf32>
      %405 = arith.divf %404, %403 : vector<4x384xf32>
      %cst_126 = arith.constant 1.06140542 : f32
      %406 = vector.broadcast %cst_126 : f32 to vector<4x384xf32>
      %407 = arith.mulf %406, %405 : vector<4x384xf32>
      %cst_127 = arith.constant -1.45315206 : f32
      %408 = vector.broadcast %cst_127 : f32 to vector<4x384xf32>
      %409 = arith.addf %407, %408 : vector<4x384xf32>
      %410 = arith.mulf %409, %405 : vector<4x384xf32>
      %cst_128 = arith.constant 1.42141378 : f32
      %411 = vector.broadcast %cst_128 : f32 to vector<4x384xf32>
      %412 = arith.addf %410, %411 : vector<4x384xf32>
      %413 = arith.mulf %412, %405 : vector<4x384xf32>
      %cst_129 = arith.constant -0.284496725 : f32
      %414 = vector.broadcast %cst_129 : f32 to vector<4x384xf32>
      %415 = arith.addf %413, %414 : vector<4x384xf32>
      %416 = arith.mulf %415, %405 : vector<4x384xf32>
      %cst_130 = arith.constant 0.254829586 : f32
      %417 = vector.broadcast %cst_130 : f32 to vector<4x384xf32>
      %418 = arith.addf %416, %417 : vector<4x384xf32>
      %419 = arith.mulf %418, %405 : vector<4x384xf32>
      %cst_131 = arith.constant 0.000000e+00 : f32
      %420 = vector.broadcast %cst_131 : f32 to vector<4x384xf32>
      %421 = arith.subf %420, %399 : vector<4x384xf32>
      %422 = arith.mulf %421, %399 : vector<4x384xf32>
      %423 = math.exp %422 : vector<4x384xf32>
      %424 = arith.mulf %419, %423 : vector<4x384xf32>
      %cst_132 = arith.constant 1.000000e+00 : f32
      %425 = vector.broadcast %cst_132 : f32 to vector<4x384xf32>
      %426 = arith.subf %425, %424 : vector<4x384xf32>
      %427 = arith.mulf %398, %426 : vector<4x384xf32>
      %cst_133 = arith.constant 1.000000e+00 : f32
      %428 = vector.broadcast %cst_133 : f32 to vector<4x384xf32>
      %429 = arith.addf %428, %427 : vector<4x384xf32>
      %430 = arith.mulf %391, %429 : vector<4x384xf32>
      %cst_134 = arith.constant dense<0.000000e+00> : vector<4x384xf32>
      %431 = tpu.matmul %389, %430, %cst_134 {dimension_numbers = #tpu.dot_dimension_numbers<[1], [0], [0], [1], [0, 0, 1, 1], [], []>} : vector<4x4xf32>, vector<4x384xf32>, vector<4x384xf32> -> vector<4x384xf32>
      %c0_135 = arith.constant 0 : index
      %c0_136 = arith.constant 0 : index
      %432 = vector.load %arg10[%c0_135, %c0_136] : memref<4x1xf32, #tpu.memory_space<vmem>>, vector<4x1xf32>
      %433 = vector.broadcast %432 : vector<4x1xf32> to vector<4x384xf32>
      %434 = arith.addf %431, %433 : vector<4x384xf32>
      %c0_137 = arith.constant 0 : index
      %c0_138 = arith.constant 0 : index
      %435 = vector.load %arg32[%c0_137, %c0_138] : memref<4x384xf32, #tpu.memory_space<vmem>>, vector<4x384xf32>
      tpu.vector_store %arg32[%c0_137, %c0_138], %434 {strides = array<i32>} : memref<4x384xf32, #tpu.memory_space<vmem>>, vector<4x384xf32>,
      %c0_139 = arith.constant 0 : index
      %c0_140 = arith.constant 0 : index
      %436 = vector.load %arg3[%c0_139, %c0_140] : memref<4x384xf32, #tpu.memory_space<vmem>>, vector<4x384xf32>
      %c0_141 = arith.constant 0 : index
      %c0_142 = arith.constant 0 : index
      %437 = vector.load %arg11[%c0_141, %c0_142] : memref<4x3xf32, #tpu.memory_space<vmem>>, vector<4x3xf32>
      %c0_143 = arith.constant 0 : index
      %c0_144 = arith.constant 0 : index
      %438 = vector.load %arg12[%c0_143, %c0_144] : memref<4x1xf32, #tpu.memory_space<vmem>>, vector<4x1xf32>
      %cst_145 = arith.constant 0.000000e+00 : f32
      %439 = vector.broadcast %cst_145 : f32 to vector<4x384xf32>
      %cst_146 = arith.constant 0.000000e+00 : f32
      %440 = vector.broadcast %cst_146 : f32 to vector<4x24xf32>
      %441 = vector.extract_strided_slice %436 {offsets = [0, 0], sizes = [4, 360], strides = [1, 1]} : vector<4x384xf32> to vector<4x360xf32>
      %442 = tpu.concatenate %440, %441 in 1 : vector<4x24xf32>, vector<4x360xf32> -> vector<4x384xf32>
      %443 = vector.extract_strided_slice %437 {offsets = [0, 0], sizes = [4, 1], strides = [1, 1]} : vector<4x3xf32> to vector<4x1xf32>
      %444 = vector.broadcast %443 : vector<4x1xf32> to vector<4x384xf32>
      %445 = arith.mulf %442, %444 : vector<4x384xf32>
      %446 = arith.addf %439, %445 : vector<4x384xf32>
      %447 = vector.extract_strided_slice %437 {offsets = [0, 1], sizes = [4, 1], strides = [1, 1]} : vector<4x3xf32> to vector<4x1xf32>
      %448 = vector.broadcast %447 : vector<4x1xf32> to vector<4x384xf32>
      %449 = arith.mulf %436, %448 : vector<4x384xf32>
      %450 = arith.addf %446, %449 : vector<4x384xf32>
      %cst_147 = arith.constant 0.000000e+00 : f32
      %451 = vector.broadcast %cst_147 : f32 to vector<4x24xf32>
      %452 = vector.extract_strided_slice %436 {offsets = [0, 24], sizes = [4, 360], strides = [1, 1]} : vector<4x384xf32> to vector<4x360xf32>
      %453 = tpu.concatenate %452, %451 in 1 : vector<4x360xf32>, vector<4x24xf32> -> vector<4x384xf32>
      %454 = vector.extract_strided_slice %437 {offsets = [0, 2], sizes = [4, 1], strides = [1, 1]} : vector<4x3xf32> to vector<4x1xf32>
      %455 = vector.broadcast %454 : vector<4x1xf32> to vector<4x384xf32>
      %456 = arith.mulf %453, %455 : vector<4x384xf32>
      %457 = arith.addf %450, %456 : vector<4x384xf32>
      %458 = vector.broadcast %438 : vector<4x1xf32> to vector<4x384xf32>
      %459 = arith.addf %457, %458 : vector<4x384xf32>
      %c0_148 = arith.constant 0 : index
      %c0_149 = arith.constant 0 : index
      %460 = vector.load %arg13[%c0_148, %c0_149] : memref<4x4xf32, #tpu.memory_space<vmem>>, vector<4x4xf32>
      %cst_150 = arith.constant 5.000000e-01 : f32
      %461 = vector.broadcast %cst_150 : f32 to vector<4x384xf32>
      %462 = arith.mulf %461, %459 : vector<4x384xf32>
      %cst_151 = arith.constant 0.707106769 : f32
      %463 = vector.broadcast %cst_151 : f32 to vector<4x384xf32>
      %464 = arith.mulf %459, %463 : vector<4x384xf32>
      %cst_152 = arith.constant 0.000000e+00 : f32
      %465 = vector.broadcast %cst_152 : f32 to vector<4x384xf32>
      %466 = arith.cmpf oge, %464, %465 : vector<4x384xf32>
      %cst_153 = arith.constant 1.000000e+00 : f32
      %cst_154 = arith.constant -1.000000e+00 : f32
      %467 = vector.broadcast %cst_153 : f32 to vector<4x384xf32>
      %468 = vector.broadcast %cst_154 : f32 to vector<4x384xf32>
      %469 = arith.select %466, %467, %468 : vector<4x384xi1>, vector<4x384xf32>
      %470 = math.absf %464 : vector<4x384xf32>
      %cst_155 = arith.constant 0.327591091 : f32
      %471 = vector.broadcast %cst_155 : f32 to vector<4x384xf32>
      %472 = arith.mulf %471, %470 : vector<4x384xf32>
      %cst_156 = arith.constant 1.000000e+00 : f32
      %473 = vector.broadcast %cst_156 : f32 to vector<4x384xf32>
      %474 = arith.addf %473, %472 : vector<4x384xf32>
      %cst_157 = arith.constant 1.000000e+00 : f32
      %475 = vector.broadcast %cst_157 : f32 to vector<4x384xf32>
      %476 = arith.divf %475, %474 : vector<4x384xf32>
      %cst_158 = arith.constant 1.06140542 : f32
      %477 = vector.broadcast %cst_158 : f32 to vector<4x384xf32>
      %478 = arith.mulf %477, %476 : vector<4x384xf32>
      %cst_159 = arith.constant -1.45315206 : f32
      %479 = vector.broadcast %cst_159 : f32 to vector<4x384xf32>
      %480 = arith.addf %478, %479 : vector<4x384xf32>
      %481 = arith.mulf %480, %476 : vector<4x384xf32>
      %cst_160 = arith.constant 1.42141378 : f32
      %482 = vector.broadcast %cst_160 : f32 to vector<4x384xf32>
      %483 = arith.addf %481, %482 : vector<4x384xf32>
      %484 = arith.mulf %483, %476 : vector<4x384xf32>
      %cst_161 = arith.constant -0.284496725 : f32
      %485 = vector.broadcast %cst_161 : f32 to vector<4x384xf32>
      %486 = arith.addf %484, %485 : vector<4x384xf32>
      %487 = arith.mulf %486, %476 : vector<4x384xf32>
      %cst_162 = arith.constant 0.254829586 : f32
      %488 = vector.broadcast %cst_162 : f32 to vector<4x384xf32>
      %489 = arith.addf %487, %488 : vector<4x384xf32>
      %490 = arith.mulf %489, %476 : vector<4x384xf32>
      %cst_163 = arith.constant 0.000000e+00 : f32
      %491 = vector.broadcast %cst_163 : f32 to vector<4x384xf32>
      %492 = arith.subf %491, %470 : vector<4x384xf32>
      %493 = arith.mulf %492, %470 : vector<4x384xf32>
      %494 = math.exp %493 : vector<4x384xf32>
      %495 = arith.mulf %490, %494 : vector<4x384xf32>
      %cst_164 = arith.constant 1.000000e+00 : f32
      %496 = vector.broadcast %cst_164 : f32 to vector<4x384xf32>
      %497 = arith.subf %496, %495 : vector<4x384xf32>
      %498 = arith.mulf %469, %497 : vector<4x384xf32>
      %cst_165 = arith.constant 1.000000e+00 : f32
      %499 = vector.broadcast %cst_165 : f32 to vector<4x384xf32>
      %500 = arith.addf %499, %498 : vector<4x384xf32>
      %501 = arith.mulf %462, %500 : vector<4x384xf32>
      %cst_166 = arith.constant dense<0.000000e+00> : vector<4x384xf32>
      %502 = tpu.matmul %460, %501, %cst_166 {dimension_numbers = #tpu.dot_dimension_numbers<[1], [0], [0], [1], [0, 0, 1, 1], [], []>} : vector<4x4xf32>, vector<4x384xf32>, vector<4x384xf32> -> vector<4x384xf32>
      %c0_167 = arith.constant 0 : index
      %c0_168 = arith.constant 0 : index
      %503 = vector.load %arg14[%c0_167, %c0_168] : memref<4x1xf32, #tpu.memory_space<vmem>>, vector<4x1xf32>
      %504 = vector.broadcast %503 : vector<4x1xf32> to vector<4x384xf32>
      %505 = arith.addf %502, %504 : vector<4x384xf32>
      %c0_169 = arith.constant 0 : index
      %c0_170 = arith.constant 0 : index
      %506 = vector.load %arg33[%c0_169, %c0_170] : memref<4x384xf32, #tpu.memory_space<vmem>>, vector<4x384xf32>
      tpu.vector_store %arg33[%c0_169, %c0_170], %505 {strides = array<i32>} : memref<4x384xf32, #tpu.memory_space<vmem>>, vector<4x384xf32>,
      %c0_171 = arith.constant 0 : index
      %c0_172 = arith.constant 0 : index
      %507 = vector.load %arg4[%c0_171, %c0_172] : memref<4x384xf32, #tpu.memory_space<vmem>>, vector<4x384xf32>
      %c0_173 = arith.constant 0 : index
      %c0_174 = arith.constant 0 : index
      %508 = vector.load %arg15[%c0_173, %c0_174] : memref<4x3xf32, #tpu.memory_space<vmem>>, vector<4x3xf32>
      %c0_175 = arith.constant 0 : index
      %c0_176 = arith.constant 0 : index
      %509 = vector.load %arg16[%c0_175, %c0_176] : memref<4x1xf32, #tpu.memory_space<vmem>>, vector<4x1xf32>
      %cst_177 = arith.constant 0.000000e+00 : f32
      %510 = vector.broadcast %cst_177 : f32 to vector<4x384xf32>
      %cst_178 = arith.constant 0.000000e+00 : f32
      %511 = vector.broadcast %cst_178 : f32 to vector<4x1xf32>
      %512 = vector.extract_strided_slice %507 {offsets = [0, 0], sizes = [4, 383], strides = [1, 1]} : vector<4x384xf32> to vector<4x383xf32>
      %513 = tpu.concatenate %511, %512 in 1 : vector<4x1xf32>, vector<4x383xf32> -> vector<4x384xf32>
      %514 = vector.broadcast %0 : vector<1x384xf32> to vector<4x384xf32>
      %515 = arith.mulf %513, %514 : vector<4x384xf32>
      %516 = vector.extract_strided_slice %508 {offsets = [0, 0], sizes = [4, 1], strides = [1, 1]} : vector<4x3xf32> to vector<4x1xf32>
      %517 = vector.broadcast %516 : vector<4x1xf32> to vector<4x384xf32>
      %518 = arith.mulf %515, %517 : vector<4x384xf32>
      %519 = arith.addf %510, %518 : vector<4x384xf32>
      %520 = vector.extract_strided_slice %508 {offsets = [0, 1], sizes = [4, 1], strides = [1, 1]} : vector<4x3xf32> to vector<4x1xf32>
      %521 = vector.broadcast %520 : vector<4x1xf32> to vector<4x384xf32>
      %522 = arith.mulf %507, %521 : vector<4x384xf32>
      %523 = arith.addf %519, %522 : vector<4x384xf32>
      %cst_179 = arith.constant 0.000000e+00 : f32
      %524 = vector.broadcast %cst_179 : f32 to vector<4x1xf32>
      %525 = vector.extract_strided_slice %507 {offsets = [0, 1], sizes = [4, 383], strides = [1, 1]} : vector<4x384xf32> to vector<4x383xf32>
      %526 = tpu.concatenate %525, %524 in 1 : vector<4x383xf32>, vector<4x1xf32> -> vector<4x384xf32>
      %527 = vector.broadcast %1 : vector<1x384xf32> to vector<4x384xf32>
      %528 = arith.mulf %526, %527 : vector<4x384xf32>
      %529 = vector.extract_strided_slice %508 {offsets = [0, 2], sizes = [4, 1], strides = [1, 1]} : vector<4x3xf32> to vector<4x1xf32>
      %530 = vector.broadcast %529 : vector<4x1xf32> to vector<4x384xf32>
      %531 = arith.mulf %528, %530 : vector<4x384xf32>
      %532 = arith.addf %523, %531 : vector<4x384xf32>
      %533 = vector.broadcast %509 : vector<4x1xf32> to vector<4x384xf32>
      %534 = arith.addf %532, %533 : vector<4x384xf32>
      %c0_180 = arith.constant 0 : index
      %c0_181 = arith.constant 0 : index
      %535 = vector.load %arg17[%c0_180, %c0_181] : memref<4x4xf32, #tpu.memory_space<vmem>>, vector<4x4xf32>
      %cst_182 = arith.constant 5.000000e-01 : f32
      %536 = vector.broadcast %cst_182 : f32 to vector<4x384xf32>
      %537 = arith.mulf %536, %534 : vector<4x384xf32>
      %cst_183 = arith.constant 0.707106769 : f32
      %538 = vector.broadcast %cst_183 : f32 to vector<4x384xf32>
      %539 = arith.mulf %534, %538 : vector<4x384xf32>
      %cst_184 = arith.constant 0.000000e+00 : f32
      %540 = vector.broadcast %cst_184 : f32 to vector<4x384xf32>
      %541 = arith.cmpf oge, %539, %540 : vector<4x384xf32>
      %cst_185 = arith.constant 1.000000e+00 : f32
      %cst_186 = arith.constant -1.000000e+00 : f32
      %542 = vector.broadcast %cst_185 : f32 to vector<4x384xf32>
      %543 = vector.broadcast %cst_186 : f32 to vector<4x384xf32>
      %544 = arith.select %541, %542, %543 : vector<4x384xi1>, vector<4x384xf32>
      %545 = math.absf %539 : vector<4x384xf32>
      %cst_187 = arith.constant 0.327591091 : f32
      %546 = vector.broadcast %cst_187 : f32 to vector<4x384xf32>
      %547 = arith.mulf %546, %545 : vector<4x384xf32>
      %cst_188 = arith.constant 1.000000e+00 : f32
      %548 = vector.broadcast %cst_188 : f32 to vector<4x384xf32>
      %549 = arith.addf %548, %547 : vector<4x384xf32>
      %cst_189 = arith.constant 1.000000e+00 : f32
      %550 = vector.broadcast %cst_189 : f32 to vector<4x384xf32>
      %551 = arith.divf %550, %549 : vector<4x384xf32>
      %cst_190 = arith.constant 1.06140542 : f32
      %552 = vector.broadcast %cst_190 : f32 to vector<4x384xf32>
      %553 = arith.mulf %552, %551 : vector<4x384xf32>
      %cst_191 = arith.constant -1.45315206 : f32
      %554 = vector.broadcast %cst_191 : f32 to vector<4x384xf32>
      %555 = arith.addf %553, %554 : vector<4x384xf32>
      %556 = arith.mulf %555, %551 : vector<4x384xf32>
      %cst_192 = arith.constant 1.42141378 : f32
      %557 = vector.broadcast %cst_192 : f32 to vector<4x384xf32>
      %558 = arith.addf %556, %557 : vector<4x384xf32>
      %559 = arith.mulf %558, %551 : vector<4x384xf32>
      %cst_193 = arith.constant -0.284496725 : f32
      %560 = vector.broadcast %cst_193 : f32 to vector<4x384xf32>
      %561 = arith.addf %559, %560 : vector<4x384xf32>
      %562 = arith.mulf %561, %551 : vector<4x384xf32>
      %cst_194 = arith.constant 0.254829586 : f32
      %563 = vector.broadcast %cst_194 : f32 to vector<4x384xf32>
      %564 = arith.addf %562, %563 : vector<4x384xf32>
      %565 = arith.mulf %564, %551 : vector<4x384xf32>
      %cst_195 = arith.constant 0.000000e+00 : f32
      %566 = vector.broadcast %cst_195 : f32 to vector<4x384xf32>
      %567 = arith.subf %566, %545 : vector<4x384xf32>
      %568 = arith.mulf %567, %545 : vector<4x384xf32>
      %569 = math.exp %568 : vector<4x384xf32>
      %570 = arith.mulf %565, %569 : vector<4x384xf32>
      %cst_196 = arith.constant 1.000000e+00 : f32
      %571 = vector.broadcast %cst_196 : f32 to vector<4x384xf32>
      %572 = arith.subf %571, %570 : vector<4x384xf32>
      %573 = arith.mulf %544, %572 : vector<4x384xf32>
      %cst_197 = arith.constant 1.000000e+00 : f32
      %574 = vector.broadcast %cst_197 : f32 to vector<4x384xf32>
      %575 = arith.addf %574, %573 : vector<4x384xf32>
      %576 = arith.mulf %537, %575 : vector<4x384xf32>
      %cst_198 = arith.constant dense<0.000000e+00> : vector<4x384xf32>
      %577 = tpu.matmul %535, %576, %cst_198 {dimension_numbers = #tpu.dot_dimension_numbers<[1], [0], [0], [1], [0, 0, 1, 1], [], []>} : vector<4x4xf32>, vector<4x384xf32>, vector<4x384xf32> -> vector<4x384xf32>
      %c0_199 = arith.constant 0 : index
      %c0_200 = arith.constant 0 : index
      %578 = vector.load %arg18[%c0_199, %c0_200] : memref<4x1xf32, #tpu.memory_space<vmem>>, vector<4x1xf32>
      %579 = vector.broadcast %578 : vector<4x1xf32> to vector<4x384xf32>
      %580 = arith.addf %577, %579 : vector<4x384xf32>
      %c0_201 = arith.constant 0 : index
      %c0_202 = arith.constant 0 : index
      %581 = vector.load %arg34[%c0_201, %c0_202] : memref<4x384xf32, #tpu.memory_space<vmem>>, vector<4x384xf32>
      tpu.vector_store %arg34[%c0_201, %c0_202], %580 {strides = array<i32>} : memref<4x384xf32, #tpu.memory_space<vmem>>, vector<4x384xf32>,
    } else {
    }
    %c0_4 = arith.constant 0 : index
    %c0_5 = arith.constant 0 : index
    %c0_6 = arith.constant 0 : index
    %5 = vector.load %arg1[%c0_4, %c0_5, %c0_6] : memref<1x16x384xf32, #tpu.memory_space<vmem>>, vector<1x16x384xf32>
    %6 = vector.shape_cast %5 : vector<1x16x384xf32> to vector<16x384xf32>
    %c0_7 = arith.constant 0 : index
    %c0_8 = arith.constant 0 : index
    %7 = vector.load %arg23[%c0_7, %c0_8] : memref<16x1xf32, #tpu.memory_space<vmem>>, vector<16x1xf32>
    %c0_9 = arith.constant 0 : index
    %c0_10 = arith.constant 0 : index
    %8 = vector.load %arg24[%c0_9, %c0_10] : memref<16x1xf32, #tpu.memory_space<vmem>>, vector<16x1xf32>
    %cst = arith.constant dense<0.000000e+00> : vector<384xf32>
    %9 = vector.multi_reduction <add>, %6, %cst [0] : vector<16x384xf32> to vector<384xf32>
    %10 = vector.shape_cast %9 : vector<384xf32> to vector<1x384xf32>
    %cst_11 = arith.constant 1.600000e+01 : f32
    %11 = vector.broadcast %cst_11 : f32 to vector<1x384xf32>
    %12 = arith.divf %10, %11 : vector<1x384xf32>
    %13 = vector.broadcast %12 : vector<1x384xf32> to vector<16x384xf32>
    %14 = arith.subf %6, %13 : vector<16x384xf32>
    %15 = arith.mulf %14, %14 : vector<16x384xf32>
    %cst_12 = arith.constant dense<0.000000e+00> : vector<384xf32>
    %16 = vector.multi_reduction <add>, %15, %cst_12 [0] : vector<16x384xf32> to vector<384xf32>
    %17 = vector.shape_cast %16 : vector<384xf32> to vector<1x384xf32>
    %cst_13 = arith.constant 1.600000e+01 : f32
    %18 = vector.broadcast %cst_13 : f32 to vector<1x384xf32>
    %19 = arith.divf %17, %18 : vector<1x384xf32>
    %cst_14 = arith.constant 9.99999997E-7 : f32
    %20 = vector.broadcast %cst_14 : f32 to vector<1x384xf32>
    %21 = arith.addf %19, %20 : vector<1x384xf32>
    %22 = math.rsqrt %21 : vector<1x384xf32>
    %23 = vector.broadcast %22 : vector<1x384xf32> to vector<16x384xf32>
    %24 = arith.mulf %14, %23 : vector<16x384xf32>
    %25 = vector.broadcast %7 : vector<16x1xf32> to vector<16x384xf32>
    %26 = arith.mulf %24, %25 : vector<16x384xf32>
    %27 = vector.broadcast %8 : vector<16x1xf32> to vector<16x384xf32>
    %28 = arith.addf %26, %27 : vector<16x384xf32>
    %29 = vector.extract_strided_slice %28 {offsets = [0, 0], sizes = [4, 384], strides = [1, 1]} : vector<16x384xf32> to vector<4x384xf32>
    %c0_15 = arith.constant 0 : index
    %c0_16 = arith.constant 0 : index
    %30 = vector.load %arg32[%c0_15, %c0_16] : memref<4x384xf32, #tpu.memory_space<vmem>>, vector<4x384xf32>
    %31 = arith.mulf %29, %30 : vector<4x384xf32>
    %32 = vector.extract_strided_slice %28 {offsets = [4, 0], sizes = [4, 384], strides = [1, 1]} : vector<16x384xf32> to vector<4x384xf32>
    %c0_17 = arith.constant 0 : index
    %c0_18 = arith.constant 0 : index
    %33 = vector.load %arg33[%c0_17, %c0_18] : memref<4x384xf32, #tpu.memory_space<vmem>>, vector<4x384xf32>
    %34 = arith.mulf %32, %33 : vector<4x384xf32>
    %35 = vector.extract_strided_slice %28 {offsets = [8, 0], sizes = [4, 384], strides = [1, 1]} : vector<16x384xf32> to vector<4x384xf32>
    %c0_19 = arith.constant 0 : index
    %c0_20 = arith.constant 0 : index
    %36 = vector.load %arg34[%c0_19, %c0_20] : memref<4x384xf32, #tpu.memory_space<vmem>>, vector<4x384xf32>
    %37 = arith.mulf %35, %36 : vector<4x384xf32>
    %c0_21 = arith.constant 0 : index
    %c0_22 = arith.constant 0 : index
    %38 = vector.load %arg19[%c0_21, %c0_22] : memref<4x4xf32, #tpu.memory_space<vmem>>, vector<4x4xf32>
    %39 = vector.extract_strided_slice %28 {offsets = [12, 0], sizes = [4, 384], strides = [1, 1]} : vector<16x384xf32> to vector<4x384xf32>
    %cst_23 = arith.constant dense<0.000000e+00> : vector<4x384xf32>
    %40 = tpu.matmul %38, %39, %cst_23 {dimension_numbers = #tpu.dot_dimension_numbers<[1], [0], [0], [1], [0, 0, 1, 1], [], []>} : vector<4x4xf32>, vector<4x384xf32>, vector<4x384xf32> -> vector<4x384xf32>
    %c0_24 = arith.constant 0 : index
    %c0_25 = arith.constant 0 : index
    %41 = vector.load %arg20[%c0_24, %c0_25] : memref<4x1xf32, #tpu.memory_space<vmem>>, vector<4x1xf32>
    %42 = vector.broadcast %41 : vector<4x1xf32> to vector<4x384xf32>
    %43 = arith.addf %40, %42 : vector<4x384xf32>
    %cst_26 = arith.constant 5.000000e-01 : f32
    %44 = vector.broadcast %cst_26 : f32 to vector<4x384xf32>
    %45 = arith.mulf %44, %43 : vector<4x384xf32>
    %cst_27 = arith.constant 0.707106769 : f32
    %46 = vector.broadcast %cst_27 : f32 to vector<4x384xf32>
    %47 = arith.mulf %43, %46 : vector<4x384xf32>
    %cst_28 = arith.constant 0.000000e+00 : f32
    %48 = vector.broadcast %cst_28 : f32 to vector<4x384xf32>
    %49 = arith.cmpf oge, %47, %48 : vector<4x384xf32>
    %cst_29 = arith.constant 1.000000e+00 : f32
    %cst_30 = arith.constant -1.000000e+00 : f32
    %50 = vector.broadcast %cst_29 : f32 to vector<4x384xf32>
    %51 = vector.broadcast %cst_30 : f32 to vector<4x384xf32>
    %52 = arith.select %49, %50, %51 : vector<4x384xi1>, vector<4x384xf32>
    %53 = math.absf %47 : vector<4x384xf32>
    %cst_31 = arith.constant 0.327591091 : f32
    %54 = vector.broadcast %cst_31 : f32 to vector<4x384xf32>
    %55 = arith.mulf %54, %53 : vector<4x384xf32>
    %cst_32 = arith.constant 1.000000e+00 : f32
    %56 = vector.broadcast %cst_32 : f32 to vector<4x384xf32>
    %57 = arith.addf %56, %55 : vector<4x384xf32>
    %cst_33 = arith.constant 1.000000e+00 : f32
    %58 = vector.broadcast %cst_33 : f32 to vector<4x384xf32>
    %59 = arith.divf %58, %57 : vector<4x384xf32>
    %cst_34 = arith.constant 1.06140542 : f32
    %60 = vector.broadcast %cst_34 : f32 to vector<4x384xf32>
    %61 = arith.mulf %60, %59 : vector<4x384xf32>
    %cst_35 = arith.constant -1.45315206 : f32
    %62 = vector.broadcast %cst_35 : f32 to vector<4x384xf32>
    %63 = arith.addf %61, %62 : vector<4x384xf32>
    %64 = arith.mulf %63, %59 : vector<4x384xf32>
    %cst_36 = arith.constant 1.42141378 : f32
    %65 = vector.broadcast %cst_36 : f32 to vector<4x384xf32>
    %66 = arith.addf %64, %65 : vector<4x384xf32>
    %67 = arith.mulf %66, %59 : vector<4x384xf32>
    %cst_37 = arith.constant -0.284496725 : f32
    %68 = vector.broadcast %cst_37 : f32 to vector<4x384xf32>
    %69 = arith.addf %67, %68 : vector<4x384xf32>
    %70 = arith.mulf %69, %59 : vector<4x384xf32>
    %cst_38 = arith.constant 0.254829586 : f32
    %71 = vector.broadcast %cst_38 : f32 to vector<4x384xf32>
    %72 = arith.addf %70, %71 : vector<4x384xf32>
    %73 = arith.mulf %72, %59 : vector<4x384xf32>
    %cst_39 = arith.constant 0.000000e+00 : f32
    %74 = vector.broadcast %cst_39 : f32 to vector<4x384xf32>
    %75 = arith.subf %74, %53 : vector<4x384xf32>
    %76 = arith.mulf %75, %53 : vector<4x384xf32>
    %77 = math.exp %76 : vector<4x384xf32>
    %78 = arith.mulf %73, %77 : vector<4x384xf32>
    %cst_40 = arith.constant 1.000000e+00 : f32
    %79 = vector.broadcast %cst_40 : f32 to vector<4x384xf32>
    %80 = arith.subf %79, %78 : vector<4x384xf32>
    %81 = arith.mulf %52, %80 : vector<4x384xf32>
    %cst_41 = arith.constant 1.000000e+00 : f32
    %82 = vector.broadcast %cst_41 : f32 to vector<4x384xf32>
    %83 = arith.addf %82, %81 : vector<4x384xf32>
    %84 = arith.mulf %45, %83 : vector<4x384xf32>
    %c0_42 = arith.constant 0 : index
    %c0_43 = arith.constant 0 : index
    %85 = vector.load %arg21[%c0_42, %c0_43] : memref<4x9xf32, #tpu.memory_space<vmem>>, vector<4x9xf32>
    %c0_44 = arith.constant 0 : index
    %c0_45 = arith.constant 0 : index
    %86 = vector.load %arg22[%c0_44, %c0_45] : memref<4x1xf32, #tpu.memory_space<vmem>>, vector<4x1xf32>
    %cst_46 = arith.constant 0.000000e+00 : f32
    %87 = vector.broadcast %cst_46 : f32 to vector<4x384xf32>
    %cst_47 = arith.constant 0.000000e+00 : f32
    %88 = vector.broadcast %cst_47 : f32 to vector<4x25xf32>
    %89 = vector.extract_strided_slice %84 {offsets = [0, 0], sizes = [4, 359], strides = [1, 1]} : vector<4x384xf32> to vector<4x359xf32>
    %90 = tpu.concatenate %88, %89 in 1 : vector<4x25xf32>, vector<4x359xf32> -> vector<4x384xf32>
    %91 = vector.broadcast %0 : vector<1x384xf32> to vector<4x384xf32>
    %92 = arith.mulf %90, %91 : vector<4x384xf32>
    %93 = vector.extract_strided_slice %85 {offsets = [0, 0], sizes = [4, 1], strides = [1, 1]} : vector<4x9xf32> to vector<4x1xf32>
    %94 = vector.broadcast %93 : vector<4x1xf32> to vector<4x384xf32>
    %95 = arith.mulf %92, %94 : vector<4x384xf32>
    %96 = arith.addf %87, %95 : vector<4x384xf32>
    %cst_48 = arith.constant 0.000000e+00 : f32
    %97 = vector.broadcast %cst_48 : f32 to vector<4x24xf32>
    %98 = vector.extract_strided_slice %84 {offsets = [0, 0], sizes = [4, 360], strides = [1, 1]} : vector<4x384xf32> to vector<4x360xf32>
    %99 = tpu.concatenate %97, %98 in 1 : vector<4x24xf32>, vector<4x360xf32> -> vector<4x384xf32>
    %100 = vector.extract_strided_slice %85 {offsets = [0, 1], sizes = [4, 1], strides = [1, 1]} : vector<4x9xf32> to vector<4x1xf32>
    %101 = vector.broadcast %100 : vector<4x1xf32> to vector<4x384xf32>
    %102 = arith.mulf %99, %101 : vector<4x384xf32>
    %103 = arith.addf %96, %102 : vector<4x384xf32>
    %cst_49 = arith.constant 0.000000e+00 : f32
    %104 = vector.broadcast %cst_49 : f32 to vector<4x23xf32>
    %105 = vector.extract_strided_slice %84 {offsets = [0, 0], sizes = [4, 361], strides = [1, 1]} : vector<4x384xf32> to vector<4x361xf32>
    %106 = tpu.concatenate %104, %105 in 1 : vector<4x23xf32>, vector<4x361xf32> -> vector<4x384xf32>
    %107 = vector.broadcast %1 : vector<1x384xf32> to vector<4x384xf32>
    %108 = arith.mulf %106, %107 : vector<4x384xf32>
    %109 = vector.extract_strided_slice %85 {offsets = [0, 2], sizes = [4, 1], strides = [1, 1]} : vector<4x9xf32> to vector<4x1xf32>
    %110 = vector.broadcast %109 : vector<4x1xf32> to vector<4x384xf32>
    %111 = arith.mulf %108, %110 : vector<4x384xf32>
    %112 = arith.addf %103, %111 : vector<4x384xf32>
    %cst_50 = arith.constant 0.000000e+00 : f32
    %113 = vector.broadcast %cst_50 : f32 to vector<4x1xf32>
    %114 = vector.extract_strided_slice %84 {offsets = [0, 0], sizes = [4, 383], strides = [1, 1]} : vector<4x384xf32> to vector<4x383xf32>
    %115 = tpu.concatenate %113, %114 in 1 : vector<4x1xf32>, vector<4x383xf32> -> vector<4x384xf32>
    %116 = vector.broadcast %0 : vector<1x384xf32> to vector<4x384xf32>
    %117 = arith.mulf %115, %116 : vector<4x384xf32>
    %118 = vector.extract_strided_slice %85 {offsets = [0, 3], sizes = [4, 1], strides = [1, 1]} : vector<4x9xf32> to vector<4x1xf32>
    %119 = vector.broadcast %118 : vector<4x1xf32> to vector<4x384xf32>
    %120 = arith.mulf %117, %119 : vector<4x384xf32>
    %121 = arith.addf %112, %120 : vector<4x384xf32>
    %122 = vector.extract_strided_slice %85 {offsets = [0, 4], sizes = [4, 1], strides = [1, 1]} : vector<4x9xf32> to vector<4x1xf32>
    %123 = vector.broadcast %122 : vector<4x1xf32> to vector<4x384xf32>
    %124 = arith.mulf %84, %123 : vector<4x384xf32>
    %125 = arith.addf %121, %124 : vector<4x384xf32>
    %cst_51 = arith.constant 0.000000e+00 : f32
    %126 = vector.broadcast %cst_51 : f32 to vector<4x1xf32>
    %127 = vector.extract_strided_slice %84 {offsets = [0, 1], sizes = [4, 383], strides = [1, 1]} : vector<4x384xf32> to vector<4x383xf32>
    %128 = tpu.concatenate %127, %126 in 1 : vector<4x383xf32>, vector<4x1xf32> -> vector<4x384xf32>
    %129 = vector.broadcast %1 : vector<1x384xf32> to vector<4x384xf32>
    %130 = arith.mulf %128, %129 : vector<4x384xf32>
    %131 = vector.extract_strided_slice %85 {offsets = [0, 5], sizes = [4, 1], strides = [1, 1]} : vector<4x9xf32> to vector<4x1xf32>
    %132 = vector.broadcast %131 : vector<4x1xf32> to vector<4x384xf32>
    %133 = arith.mulf %130, %132 : vector<4x384xf32>
    %134 = arith.addf %125, %133 : vector<4x384xf32>
    %cst_52 = arith.constant 0.000000e+00 : f32
    %135 = vector.broadcast %cst_52 : f32 to vector<4x23xf32>
    %136 = vector.extract_strided_slice %84 {offsets = [0, 23], sizes = [4, 361], strides = [1, 1]} : vector<4x384xf32> to vector<4x361xf32>
    %137 = tpu.concatenate %136, %135 in 1 : vector<4x361xf32>, vector<4x23xf32> -> vector<4x384xf32>
    %138 = vector.broadcast %0 : vector<1x384xf32> to vector<4x384xf32>
    %139 = arith.mulf %137, %138 : vector<4x384xf32>
    %140 = vector.extract_strided_slice %85 {offsets = [0, 6], sizes = [4, 1], strides = [1, 1]} : vector<4x9xf32> to vector<4x1xf32>
    %141 = vector.broadcast %140 : vector<4x1xf32> to vector<4x384xf32>
    %142 = arith.mulf %139, %141 : vector<4x384xf32>
    %143 = arith.addf %134, %142 : vector<4x384xf32>
    %cst_53 = arith.constant 0.000000e+00 : f32
    %144 = vector.broadcast %cst_53 : f32 to vector<4x24xf32>
    %145 = vector.extract_strided_slice %84 {offsets = [0, 24], sizes = [4, 360], strides = [1, 1]} : vector<4x384xf32> to vector<4x360xf32>
    %146 = tpu.concatenate %145, %144 in 1 : vector<4x360xf32>, vector<4x24xf32> -> vector<4x384xf32>
    %147 = vector.extract_strided_slice %85 {offsets = [0, 7], sizes = [4, 1], strides = [1, 1]} : vector<4x9xf32> to vector<4x1xf32>
    %148 = vector.broadcast %147 : vector<4x1xf32> to vector<4x384xf32>
    %149 = arith.mulf %146, %148 : vector<4x384xf32>
    %150 = arith.addf %143, %149 : vector<4x384xf32>
    %cst_54 = arith.constant 0.000000e+00 : f32
    %151 = vector.broadcast %cst_54 : f32 to vector<4x25xf32>
    %152 = vector.extract_strided_slice %84 {offsets = [0, 25], sizes = [4, 359], strides = [1, 1]} : vector<4x384xf32> to vector<4x359xf32>
    %153 = tpu.concatenate %152, %151 in 1 : vector<4x359xf32>, vector<4x25xf32> -> vector<4x384xf32>
    %154 = vector.broadcast %1 : vector<1x384xf32> to vector<4x384xf32>
    %155 = arith.mulf %153, %154 : vector<4x384xf32>
    %156 = vector.extract_strided_slice %85 {offsets = [0, 8], sizes = [4, 1], strides = [1, 1]} : vector<4x9xf32> to vector<4x1xf32>
    %157 = vector.broadcast %156 : vector<4x1xf32> to vector<4x384xf32>
    %158 = arith.mulf %155, %157 : vector<4x384xf32>
    %159 = arith.addf %150, %158 : vector<4x384xf32>
    %160 = vector.broadcast %86 : vector<4x1xf32> to vector<4x384xf32>
    %161 = arith.addf %159, %160 : vector<4x384xf32>
    %162 = tpu.concatenate %31, %34, %37, %161 in 0 : vector<4x384xf32>, vector<4x384xf32>, vector<4x384xf32>, vector<4x384xf32> -> vector<16x384xf32>
    %c0_55 = arith.constant 0 : index
    %c0_56 = arith.constant 0 : index
    %163 = vector.load %arg25[%c0_55, %c0_56] : memref<16x1xf32, #tpu.memory_space<vmem>>, vector<16x1xf32>
    %c0_57 = arith.constant 0 : index
    %c0_58 = arith.constant 0 : index
    %164 = vector.load %arg26[%c0_57, %c0_58] : memref<16x1xf32, #tpu.memory_space<vmem>>, vector<16x1xf32>
    %cst_59 = arith.constant dense<0.000000e+00> : vector<384xf32>
    %165 = vector.multi_reduction <add>, %162, %cst_59 [0] : vector<16x384xf32> to vector<384xf32>
    %166 = vector.shape_cast %165 : vector<384xf32> to vector<1x384xf32>
    %cst_60 = arith.constant 1.600000e+01 : f32
    %167 = vector.broadcast %cst_60 : f32 to vector<1x384xf32>
    %168 = arith.divf %166, %167 : vector<1x384xf32>
    %169 = vector.broadcast %168 : vector<1x384xf32> to vector<16x384xf32>
    %170 = arith.subf %162, %169 : vector<16x384xf32>
    %171 = arith.mulf %170, %170 : vector<16x384xf32>
    %cst_61 = arith.constant dense<0.000000e+00> : vector<384xf32>
    %172 = vector.multi_reduction <add>, %171, %cst_61 [0] : vector<16x384xf32> to vector<384xf32>
    %173 = vector.shape_cast %172 : vector<384xf32> to vector<1x384xf32>
    %cst_62 = arith.constant 1.600000e+01 : f32
    %174 = vector.broadcast %cst_62 : f32 to vector<1x384xf32>
    %175 = arith.divf %173, %174 : vector<1x384xf32>
    %cst_63 = arith.constant 9.99999997E-7 : f32
    %176 = vector.broadcast %cst_63 : f32 to vector<1x384xf32>
    %177 = arith.addf %175, %176 : vector<1x384xf32>
    %178 = math.rsqrt %177 : vector<1x384xf32>
    %179 = vector.broadcast %178 : vector<1x384xf32> to vector<16x384xf32>
    %180 = arith.mulf %170, %179 : vector<16x384xf32>
    %181 = vector.broadcast %163 : vector<16x1xf32> to vector<16x384xf32>
    %182 = arith.mulf %180, %181 : vector<16x384xf32>
    %183 = vector.broadcast %164 : vector<16x1xf32> to vector<16x384xf32>
    %184 = arith.addf %182, %183 : vector<16x384xf32>
    %c0_64 = arith.constant 0 : index
    %c0_65 = arith.constant 0 : index
    %185 = vector.load %arg27[%c0_64, %c0_65] : memref<16x9xf32, #tpu.memory_space<vmem>>, vector<16x9xf32>
    %c0_66 = arith.constant 0 : index
    %c0_67 = arith.constant 0 : index
    %186 = vector.load %arg28[%c0_66, %c0_67] : memref<16x1xf32, #tpu.memory_space<vmem>>, vector<16x1xf32>
    %cst_68 = arith.constant 0.000000e+00 : f32
    %187 = vector.broadcast %cst_68 : f32 to vector<16x384xf32>
    %cst_69 = arith.constant 0.000000e+00 : f32
    %188 = vector.broadcast %cst_69 : f32 to vector<16x25xf32>
    %189 = vector.extract_strided_slice %184 {offsets = [0, 0], sizes = [16, 359], strides = [1, 1]} : vector<16x384xf32> to vector<16x359xf32>
    %190 = tpu.concatenate %188, %189 in 1 : vector<16x25xf32>, vector<16x359xf32> -> vector<16x384xf32>
    %191 = vector.broadcast %0 : vector<1x384xf32> to vector<16x384xf32>
    %192 = arith.mulf %190, %191 : vector<16x384xf32>
    %193 = vector.extract_strided_slice %185 {offsets = [0, 0], sizes = [16, 1], strides = [1, 1]} : vector<16x9xf32> to vector<16x1xf32>
    %194 = vector.broadcast %193 : vector<16x1xf32> to vector<16x384xf32>
    %195 = arith.mulf %192, %194 : vector<16x384xf32>
    %196 = arith.addf %187, %195 : vector<16x384xf32>
    %cst_70 = arith.constant 0.000000e+00 : f32
    %197 = vector.broadcast %cst_70 : f32 to vector<16x24xf32>
    %198 = vector.extract_strided_slice %184 {offsets = [0, 0], sizes = [16, 360], strides = [1, 1]} : vector<16x384xf32> to vector<16x360xf32>
    %199 = tpu.concatenate %197, %198 in 1 : vector<16x24xf32>, vector<16x360xf32> -> vector<16x384xf32>
    %200 = vector.extract_strided_slice %185 {offsets = [0, 1], sizes = [16, 1], strides = [1, 1]} : vector<16x9xf32> to vector<16x1xf32>
    %201 = vector.broadcast %200 : vector<16x1xf32> to vector<16x384xf32>
    %202 = arith.mulf %199, %201 : vector<16x384xf32>
    %203 = arith.addf %196, %202 : vector<16x384xf32>
    %cst_71 = arith.constant 0.000000e+00 : f32
    %204 = vector.broadcast %cst_71 : f32 to vector<16x23xf32>
    %205 = vector.extract_strided_slice %184 {offsets = [0, 0], sizes = [16, 361], strides = [1, 1]} : vector<16x384xf32> to vector<16x361xf32>
    %206 = tpu.concatenate %204, %205 in 1 : vector<16x23xf32>, vector<16x361xf32> -> vector<16x384xf32>
    %207 = vector.broadcast %1 : vector<1x384xf32> to vector<16x384xf32>
    %208 = arith.mulf %206, %207 : vector<16x384xf32>
    %209 = vector.extract_strided_slice %185 {offsets = [0, 2], sizes = [16, 1], strides = [1, 1]} : vector<16x9xf32> to vector<16x1xf32>
    %210 = vector.broadcast %209 : vector<16x1xf32> to vector<16x384xf32>
    %211 = arith.mulf %208, %210 : vector<16x384xf32>
    %212 = arith.addf %203, %211 : vector<16x384xf32>
    %cst_72 = arith.constant 0.000000e+00 : f32
    %213 = vector.broadcast %cst_72 : f32 to vector<16x1xf32>
    %214 = vector.extract_strided_slice %184 {offsets = [0, 0], sizes = [16, 383], strides = [1, 1]} : vector<16x384xf32> to vector<16x383xf32>
    %215 = tpu.concatenate %213, %214 in 1 : vector<16x1xf32>, vector<16x383xf32> -> vector<16x384xf32>
    %216 = vector.broadcast %0 : vector<1x384xf32> to vector<16x384xf32>
    %217 = arith.mulf %215, %216 : vector<16x384xf32>
    %218 = vector.extract_strided_slice %185 {offsets = [0, 3], sizes = [16, 1], strides = [1, 1]} : vector<16x9xf32> to vector<16x1xf32>
    %219 = vector.broadcast %218 : vector<16x1xf32> to vector<16x384xf32>
    %220 = arith.mulf %217, %219 : vector<16x384xf32>
    %221 = arith.addf %212, %220 : vector<16x384xf32>
    %222 = vector.extract_strided_slice %185 {offsets = [0, 4], sizes = [16, 1], strides = [1, 1]} : vector<16x9xf32> to vector<16x1xf32>
    %223 = vector.broadcast %222 : vector<16x1xf32> to vector<16x384xf32>
    %224 = arith.mulf %184, %223 : vector<16x384xf32>
    %225 = arith.addf %221, %224 : vector<16x384xf32>
    %cst_73 = arith.constant 0.000000e+00 : f32
    %226 = vector.broadcast %cst_73 : f32 to vector<16x1xf32>
    %227 = vector.extract_strided_slice %184 {offsets = [0, 1], sizes = [16, 383], strides = [1, 1]} : vector<16x384xf32> to vector<16x383xf32>
    %228 = tpu.concatenate %227, %226 in 1 : vector<16x383xf32>, vector<16x1xf32> -> vector<16x384xf32>
    %229 = vector.broadcast %1 : vector<1x384xf32> to vector<16x384xf32>
    %230 = arith.mulf %228, %229 : vector<16x384xf32>
    %231 = vector.extract_strided_slice %185 {offsets = [0, 5], sizes = [16, 1], strides = [1, 1]} : vector<16x9xf32> to vector<16x1xf32>
    %232 = vector.broadcast %231 : vector<16x1xf32> to vector<16x384xf32>
    %233 = arith.mulf %230, %232 : vector<16x384xf32>
    %234 = arith.addf %225, %233 : vector<16x384xf32>
    %cst_74 = arith.constant 0.000000e+00 : f32
    %235 = vector.broadcast %cst_74 : f32 to vector<16x23xf32>
    %236 = vector.extract_strided_slice %184 {offsets = [0, 23], sizes = [16, 361], strides = [1, 1]} : vector<16x384xf32> to vector<16x361xf32>
    %237 = tpu.concatenate %236, %235 in 1 : vector<16x361xf32>, vector<16x23xf32> -> vector<16x384xf32>
    %238 = vector.broadcast %0 : vector<1x384xf32> to vector<16x384xf32>
    %239 = arith.mulf %237, %238 : vector<16x384xf32>
    %240 = vector.extract_strided_slice %185 {offsets = [0, 6], sizes = [16, 1], strides = [1, 1]} : vector<16x9xf32> to vector<16x1xf32>
    %241 = vector.broadcast %240 : vector<16x1xf32> to vector<16x384xf32>
    %242 = arith.mulf %239, %241 : vector<16x384xf32>
    %243 = arith.addf %234, %242 : vector<16x384xf32>
    %cst_75 = arith.constant 0.000000e+00 : f32
    %244 = vector.broadcast %cst_75 : f32 to vector<16x24xf32>
    %245 = vector.extract_strided_slice %184 {offsets = [0, 24], sizes = [16, 360], strides = [1, 1]} : vector<16x384xf32> to vector<16x360xf32>
    %246 = tpu.concatenate %245, %244 in 1 : vector<16x360xf32>, vector<16x24xf32> -> vector<16x384xf32>
    %247 = vector.extract_strided_slice %185 {offsets = [0, 7], sizes = [16, 1], strides = [1, 1]} : vector<16x9xf32> to vector<16x1xf32>
    %248 = vector.broadcast %247 : vector<16x1xf32> to vector<16x384xf32>
    %249 = arith.mulf %246, %248 : vector<16x384xf32>
    %250 = arith.addf %243, %249 : vector<16x384xf32>
    %cst_76 = arith.constant 0.000000e+00 : f32
    %251 = vector.broadcast %cst_76 : f32 to vector<16x25xf32>
    %252 = vector.extract_strided_slice %184 {offsets = [0, 25], sizes = [16, 359], strides = [1, 1]} : vector<16x384xf32> to vector<16x359xf32>
    %253 = tpu.concatenate %252, %251 in 1 : vector<16x359xf32>, vector<16x25xf32> -> vector<16x384xf32>
    %254 = vector.broadcast %1 : vector<1x384xf32> to vector<16x384xf32>
    %255 = arith.mulf %253, %254 : vector<16x384xf32>
    %256 = vector.extract_strided_slice %185 {offsets = [0, 8], sizes = [16, 1], strides = [1, 1]} : vector<16x9xf32> to vector<16x1xf32>
    %257 = vector.broadcast %256 : vector<16x1xf32> to vector<16x384xf32>
    %258 = arith.mulf %255, %257 : vector<16x384xf32>
    %259 = arith.addf %250, %258 : vector<16x384xf32>
    %260 = vector.broadcast %186 : vector<16x1xf32> to vector<16x384xf32>
    %261 = arith.addf %259, %260 : vector<16x384xf32>
    %cst_77 = arith.constant 5.000000e-01 : f32
    %262 = vector.broadcast %cst_77 : f32 to vector<16x384xf32>
    %263 = arith.mulf %262, %261 : vector<16x384xf32>
    %cst_78 = arith.constant 0.707106769 : f32
    %264 = vector.broadcast %cst_78 : f32 to vector<16x384xf32>
    %265 = arith.mulf %261, %264 : vector<16x384xf32>
    %cst_79 = arith.constant 0.000000e+00 : f32
    %266 = vector.broadcast %cst_79 : f32 to vector<16x384xf32>
    %267 = arith.cmpf oge, %265, %266 : vector<16x384xf32>
    %cst_80 = arith.constant 1.000000e+00 : f32
    %cst_81 = arith.constant -1.000000e+00 : f32
    %268 = vector.broadcast %cst_80 : f32 to vector<16x384xf32>
    %269 = vector.broadcast %cst_81 : f32 to vector<16x384xf32>
    %270 = arith.select %267, %268, %269 : vector<16x384xi1>, vector<16x384xf32>
    %271 = math.absf %265 : vector<16x384xf32>
    %cst_82 = arith.constant 0.327591091 : f32
    %272 = vector.broadcast %cst_82 : f32 to vector<16x384xf32>
    %273 = arith.mulf %272, %271 : vector<16x384xf32>
    %cst_83 = arith.constant 1.000000e+00 : f32
    %274 = vector.broadcast %cst_83 : f32 to vector<16x384xf32>
    %275 = arith.addf %274, %273 : vector<16x384xf32>
    %cst_84 = arith.constant 1.000000e+00 : f32
    %276 = vector.broadcast %cst_84 : f32 to vector<16x384xf32>
    %277 = arith.divf %276, %275 : vector<16x384xf32>
    %cst_85 = arith.constant 1.06140542 : f32
    %278 = vector.broadcast %cst_85 : f32 to vector<16x384xf32>
    %279 = arith.mulf %278, %277 : vector<16x384xf32>
    %cst_86 = arith.constant -1.45315206 : f32
    %280 = vector.broadcast %cst_86 : f32 to vector<16x384xf32>
    %281 = arith.addf %279, %280 : vector<16x384xf32>
    %282 = arith.mulf %281, %277 : vector<16x384xf32>
    %cst_87 = arith.constant 1.42141378 : f32
    %283 = vector.broadcast %cst_87 : f32 to vector<16x384xf32>
    %284 = arith.addf %282, %283 : vector<16x384xf32>
    %285 = arith.mulf %284, %277 : vector<16x384xf32>
    %cst_88 = arith.constant -0.284496725 : f32
    %286 = vector.broadcast %cst_88 : f32 to vector<16x384xf32>
    %287 = arith.addf %285, %286 : vector<16x384xf32>
    %288 = arith.mulf %287, %277 : vector<16x384xf32>
    %cst_89 = arith.constant 0.254829586 : f32
    %289 = vector.broadcast %cst_89 : f32 to vector<16x384xf32>
    %290 = arith.addf %288, %289 : vector<16x384xf32>
    %291 = arith.mulf %290, %277 : vector<16x384xf32>
    %cst_90 = arith.constant 0.000000e+00 : f32
    %292 = vector.broadcast %cst_90 : f32 to vector<16x384xf32>
    %293 = arith.subf %292, %271 : vector<16x384xf32>
    %294 = arith.mulf %293, %271 : vector<16x384xf32>
    %295 = math.exp %294 : vector<16x384xf32>
    %296 = arith.mulf %291, %295 : vector<16x384xf32>
    %cst_91 = arith.constant 1.000000e+00 : f32
    %297 = vector.broadcast %cst_91 : f32 to vector<16x384xf32>
    %298 = arith.subf %297, %296 : vector<16x384xf32>
    %299 = arith.mulf %270, %298 : vector<16x384xf32>
    %cst_92 = arith.constant 1.000000e+00 : f32
    %300 = vector.broadcast %cst_92 : f32 to vector<16x384xf32>
    %301 = arith.addf %300, %299 : vector<16x384xf32>
    %302 = arith.mulf %263, %301 : vector<16x384xf32>
    %c0_93 = arith.constant 0 : index
    %c0_94 = arith.constant 0 : index
    %303 = vector.load %arg29[%c0_93, %c0_94] : memref<8x16xf32, #tpu.memory_space<vmem>>, vector<8x16xf32>
    %cst_95 = arith.constant dense<0.000000e+00> : vector<8x384xf32>
    %304 = tpu.matmul %303, %302, %cst_95 {dimension_numbers = #tpu.dot_dimension_numbers<[1], [0], [0], [1], [0, 0, 1, 1], [], []>} : vector<8x16xf32>, vector<16x384xf32>, vector<8x384xf32> -> vector<8x384xf32>
    %c0_96 = arith.constant 0 : index
    %c0_97 = arith.constant 0 : index
    %305 = vector.load %arg30[%c0_96, %c0_97] : memref<8x1xf32, #tpu.memory_space<vmem>>, vector<8x1xf32>
    %306 = vector.broadcast %305 : vector<8x1xf32> to vector<8x384xf32>
    %307 = arith.addf %304, %306 : vector<8x384xf32>
    %c0_98 = arith.constant 0 : index
    %c0_99 = arith.constant 0 : index
    %c0_100 = arith.constant 0 : index
    %308 = vector.load %arg31[%c0_98, %c0_99, %c0_100] : memref<1x8x384xf32, #tpu.memory_space<vmem>>, vector<1x8x384xf32>
    %309 = vector.shape_cast %308 : vector<1x8x384xf32> to vector<8x384xf32>
    %310 = vector.shape_cast %307 : vector<8x384xf32> to vector<1x8x384xf32>
    tpu.vector_store %arg31[%c0_98, %c0_99, %c0_100], %310 {strides = array<i32>} : memref<1x8x384xf32, #tpu.memory_space<vmem>>, vector<1x8x384xf32>,
    return
  }
  func.func @transform_0(%arg0: i32) -> (i32, i32, i32) {
    %c0_i32 = arith.constant 0 : i32
    %c0_i32_0 = arith.constant 0 : i32
    %c0_i32_1 = arith.constant 0 : i32
    return %arg0, %c0_i32, %c0_i32_0 : i32, i32, i32
  }
  func.func @transform_1(%arg0: i32) -> (i32, i32) {
    %c0_i32 = arith.constant 0 : i32
    %c0_i32_0 = arith.constant 0 : i32
    %c0_i32_1 = arith.constant 0 : i32
    return %c0_i32, %c0_i32_0 : i32, i32
  }
  func.func @transform_2(%arg0: i32) -> (i32, i32) {
    %c0_i32 = arith.constant 0 : i32
    %c0_i32_0 = arith.constant 0 : i32
    %c0_i32_1 = arith.constant 0 : i32
    return %c0_i32, %c0_i32_0 : i32, i32
  }
  func.func @transform_3(%arg0: i32) -> (i32, i32) {
    %c0_i32 = arith.constant 0 : i32
    %c0_i32_0 = arith.constant 0 : i32
    %c0_i32_1 = arith.constant 0 : i32
    return %c0_i32, %c0_i32_0 : i32, i32
  }
  func.func @transform_4(%arg0: i32) -> (i32, i32) {
    %c0_i32 = arith.constant 0 : i32
    %c0_i32_0 = arith.constant 0 : i32
    %c0_i32_1 = arith.constant 0 : i32
    return %c0_i32, %c0_i32_0 : i32, i32
  }
  func.func @transform_5(%arg0: i32) -> (i32, i32) {
    %c0_i32 = arith.constant 0 : i32
    %c0_i32_0 = arith.constant 0 : i32
    %c0_i32_1 = arith.constant 0 : i32
    return %c0_i32, %c0_i32_0 : i32, i32
  }
  func.func @transform_6(%arg0: i32) -> (i32, i32) {
    %c0_i32 = arith.constant 0 : i32
    %c0_i32_0 = arith.constant 0 : i32
    %c0_i32_1 = arith.constant 0 : i32
    return %c0_i32, %c0_i32_0 : i32, i32
  }
  func.func @transform_7(%arg0: i32) -> (i32, i32) {
    %c0_i32 = arith.constant 0 : i32
    %c0_i32_0 = arith.constant 0 : i32
    %c0_i32_1 = arith.constant 0 : i32
    return %c0_i32, %c0_i32_0 : i32, i32
  }
  func.func @transform_8(%arg0: i32) -> (i32, i32) {
    %c0_i32 = arith.constant 0 : i32
    %c0_i32_0 = arith.constant 0 : i32
    %c0_i32_1 = arith.constant 0 : i32
    return %c0_i32, %c0_i32_0 : i32, i32
  }
  func.func @transform_9(%arg0: i32) -> (i32, i32) {
    %c0_i32 = arith.constant 0 : i32
    %c0_i32_0 = arith.constant 0 : i32
    %c0_i32_1 = arith.constant 0 : i32
    return %c0_i32, %c0_i32_0 : i32, i32
  }
  func.func @transform_10(%arg0: i32) -> (i32, i32) {
    %c0_i32 = arith.constant 0 : i32
    %c0_i32_0 = arith.constant 0 : i32
    %c0_i32_1 = arith.constant 0 : i32
    return %c0_i32, %c0_i32_0 : i32, i32
  }
  func.func @transform_11(%arg0: i32) -> (i32, i32) {
    %c0_i32 = arith.constant 0 : i32
    %c0_i32_0 = arith.constant 0 : i32
    %c0_i32_1 = arith.constant 0 : i32
    return %c0_i32, %c0_i32_0 : i32, i32
  }
  func.func @transform_12(%arg0: i32) -> (i32, i32) {
    %c0_i32 = arith.constant 0 : i32
    %c0_i32_0 = arith.constant 0 : i32
    %c0_i32_1 = arith.constant 0 : i32
    return %c0_i32, %c0_i32_0 : i32, i32
  }
  func.func @transform_13(%arg0: i32) -> (i32, i32) {
    %c0_i32 = arith.constant 0 : i32
    %c0_i32_0 = arith.constant 0 : i32
    %c0_i32_1 = arith.constant 0 : i32
    return %c0_i32, %c0_i32_0 : i32, i32
  }
  func.func @transform_14(%arg0: i32) -> (i32, i32) {
    %c0_i32 = arith.constant 0 : i32
    %c0_i32_0 = arith.constant 0 : i32
    %c0_i32_1 = arith.constant 0 : i32
    return %c0_i32, %c0_i32_0 : i32, i32
  }
  func.func @transform_15(%arg0: i32) -> (i32, i32) {
    %c0_i32 = arith.constant 0 : i32
    %c0_i32_0 = arith.constant 0 : i32
    %c0_i32_1 = arith.constant 0 : i32
    return %c0_i32, %c0_i32_0 : i32, i32
  }
  func.func @transform_16(%arg0: i32) -> (i32, i32) {
    %c0_i32 = arith.constant 0 : i32
    %c0_i32_0 = arith.constant 0 : i32
    %c0_i32_1 = arith.constant 0 : i32
    return %c0_i32, %c0_i32_0 : i32, i32
  }
  func.func @transform_17(%arg0: i32) -> (i32, i32) {
    %c0_i32 = arith.constant 0 : i32
    %c0_i32_0 = arith.constant 0 : i32
    %c0_i32_1 = arith.constant 0 : i32
    return %c0_i32, %c0_i32_0 : i32, i32
  }
  func.func @transform_18(%arg0: i32) -> (i32, i32) {
    %c0_i32 = arith.constant 0 : i32
    %c0_i32_0 = arith.constant 0 : i32
    %c0_i32_1 = arith.constant 0 : i32
    return %c0_i32, %c0_i32_0 : i32, i32
  }
  func.func @transform_19(%arg0: i32) -> (i32, i32) {
    %c0_i32 = arith.constant 0 : i32
    %c0_i32_0 = arith.constant 0 : i32
    %c0_i32_1 = arith.constant 0 : i32
    return %c0_i32, %c0_i32_0 : i32, i32
  }
  func.func @transform_20(%arg0: i32) -> (i32, i32) {
    %c0_i32 = arith.constant 0 : i32
    %c0_i32_0 = arith.constant 0 : i32
    %c0_i32_1 = arith.constant 0 : i32
    return %c0_i32, %c0_i32_0 : i32, i32
  }
  func.func @transform_21(%arg0: i32) -> (i32, i32) {
    %c0_i32 = arith.constant 0 : i32
    %c0_i32_0 = arith.constant 0 : i32
    %c0_i32_1 = arith.constant 0 : i32
    return %c0_i32, %c0_i32_0 : i32, i32
  }
  func.func @transform_22(%arg0: i32) -> (i32, i32) {
    %c0_i32 = arith.constant 0 : i32
    %c0_i32_0 = arith.constant 0 : i32
    %c0_i32_1 = arith.constant 0 : i32
    return %c0_i32, %c0_i32_0 : i32, i32
  }
  func.func @transform_23(%arg0: i32) -> (i32, i32) {
    %c0_i32 = arith.constant 0 : i32
    %c0_i32_0 = arith.constant 0 : i32
    %c0_i32_1 = arith.constant 0 : i32
    return %c0_i32, %c0_i32_0 : i32, i32
  }
  func.func @transform_24(%arg0: i32) -> (i32, i32) {
    %c0_i32 = arith.constant 0 : i32
    %c0_i32_0 = arith.constant 0 : i32
    %c0_i32_1 = arith.constant 0 : i32
    return %c0_i32, %c0_i32_0 : i32, i32
  }
  func.func @transform_25(%arg0: i32) -> (i32, i32) {
    %c0_i32 = arith.constant 0 : i32
    %c0_i32_0 = arith.constant 0 : i32
    %c0_i32_1 = arith.constant 0 : i32
    return %c0_i32, %c0_i32_0 : i32, i32
  }
  func.func @transform_26(%arg0: i32) -> (i32, i32) {
    %c0_i32 = arith.constant 0 : i32
    %c0_i32_0 = arith.constant 0 : i32
    %c0_i32_1 = arith.constant 0 : i32
    return %c0_i32, %c0_i32_0 : i32, i32
  }
  func.func @transform_27(%arg0: i32) -> (i32, i32) {
    %c0_i32 = arith.constant 0 : i32
    %c0_i32_0 = arith.constant 0 : i32
    %c0_i32_1 = arith.constant 0 : i32
    return %c0_i32, %c0_i32_0 : i32, i32
  }
  func.func @transform_28(%arg0: i32) -> (i32, i32) {
    %c0_i32 = arith.constant 0 : i32
    %c0_i32_0 = arith.constant 0 : i32
    %c0_i32_1 = arith.constant 0 : i32
    return %c0_i32, %c0_i32_0 : i32, i32
  }
  func.func @transform_29(%arg0: i32) -> (i32, i32) {
    %c0_i32 = arith.constant 0 : i32
    %c0_i32_0 = arith.constant 0 : i32
    %c0_i32_1 = arith.constant 0 : i32
    return %c0_i32, %c0_i32_0 : i32, i32
  }
  func.func @transform_30(%arg0: i32) -> (i32, i32, i32) {
    %c0_i32 = arith.constant 0 : i32
    %c0_i32_0 = arith.constant 0 : i32
    %c0_i32_1 = arith.constant 0 : i32
    return %arg0, %c0_i32, %c0_i32_0 : i32, i32, i32
  }
}

</mosaic_0001>

<llo_original>
// kernel: tpu_custom_call.1
$region0: #{tpu_custom_call.1}
  #allocation0 [shape = 'u32[]', space=smem, size = 0x4, offset = 0x4, fixed_abs, tag = 'smem constant byte address 0x4 - core index']
  #allocation1 [shape = 'u32[144,128]{1,0:T(1,128)}', space=vmem, size = 0x12000, scoped, tag = 'internal scratch']
  #allocation2 [shape = 'f32[4,384]{1,0:T(4,128)}', space=vmem, size = 0x1800, scoped, tag = 'scratch operand']
  #allocation3 [shape = 'f32[4,384]{1,0:T(4,128)}', space=vmem, size = 0x1800, scoped, tag = 'scratch operand']
  #allocation4 [shape = 'f32[4,384]{1,0:T(4,128)}', space=vmem, size = 0x1800, scoped, tag = 'scratch operand']
  %s0 = inlined_call_operand.smem [shape: u32[31], index: -1, kind: input, shape index: {}]
  %s1 = sld [smem:[%s0]]
  %s2 = scalar_lea.smem %s0, 1
  %s3 = sld [smem:[%s2]]
  %s4 = scalar_lea.smem %s0, 2
  %s5 = sld [smem:[%s4]]
  %s6 = scalar_lea.smem %s0, 3
  %s7 = sld [smem:[%s6]]
  %s8 = scalar_lea.smem %s0, 4
  %s9 = sld [smem:[%s8]]
  %s10 = scalar_lea.smem %s0, 5
  %s11 = sld [smem:[%s10]]
  %s12 = scalar_lea.smem %s0, 6
  %s13 = sld [smem:[%s12]]
  %s14 = scalar_lea.smem %s0, 7
  %s15 = sld [smem:[%s14]]
  %s16 = scalar_lea.smem %s0, 8
  %s17 = sld [smem:[%s16]]
  %s18 = scalar_lea.smem %s0, 9
  %s19 = sld [smem:[%s18]]
  %s20 = scalar_lea.smem %s0, 10
  %s21 = sld [smem:[%s20]]
  %s22 = scalar_lea.smem %s0, 11
  %s23 = sld [smem:[%s22]]
  %s24 = scalar_lea.smem %s0, 12
  %s25 = sld [smem:[%s24]]
  %s26 = scalar_lea.smem %s0, 13
  %s27 = sld [smem:[%s26]]
  %s28 = scalar_lea.smem %s0, 14
  %s29 = sld [smem:[%s28]]
  %s30 = scalar_lea.smem %s0, 15
  %s31 = sld [smem:[%s30]]
  %s32 = scalar_lea.smem %s0, 16
  %s33 = sld [smem:[%s32]]
  %s34 = scalar_lea.smem %s0, 17
  %s35 = sld [smem:[%s34]]
  %s36 = scalar_lea.smem %s0, 18
  %s37 = sld [smem:[%s36]]
  %s38 = scalar_lea.smem %s0, 19
  %s39 = sld [smem:[%s38]]
  %s40 = scalar_lea.smem %s0, 20
  %s41 = sld [smem:[%s40]]
  %s42 = scalar_lea.smem %s0, 21
  %s43 = sld [smem:[%s42]]
  %s44 = scalar_lea.smem %s0, 22
  %s45 = sld [smem:[%s44]]
  %s46 = scalar_lea.smem %s0, 23
  %s47 = sld [smem:[%s46]]
  %s48 = scalar_lea.smem %s0, 24
  %s49 = sld [smem:[%s48]]
  %s50 = scalar_lea.smem %s0, 25
  %s51 = sld [smem:[%s50]]
  %s52 = scalar_lea.smem %s0, 26
  %s53 = sld [smem:[%s52]]
  %s54 = scalar_lea.smem %s0, 27
  %s55 = sld [smem:[%s54]]
  %s56 = scalar_lea.smem %s0, 28
  %s57 = sld [smem:[%s56]]
  %s58 = scalar_lea.smem %s0, 29
  %s59 = sld [smem:[%s58]]
  %s60 = scalar_lea.smem %s0, 30
  %s61 = sld [smem:[%s60]]
  %s62 = sld [smem:[#allocation0]]
  $region277: #{tpu_custom_call.1} parent=0
    _
  %s64 = ssub.s32 1, %s62
  %s65 = scalar_select 0, %s64, %s62
  $region1: #{tpu_custom_call.1} parent=0
    #allocation5 [shape = 'u8[49152]{0}', space=vmem, size = 0xc000, scoped, tag = 'input window, operand 0']
    #allocation6 [shape = 's32[2]{0}', space=sflag, size = 0x8, scoped, tag = 'scoped memory for tpu_custom_call.1']
    #allocation7 [shape = 's32[2]{0}', space=sflag, size = 0x8, scoped, tag = 'scoped memory for tpu_custom_call.1']
    #allocation8 [shape = 'u8[6144]{0}', space=vmem, size = 0x1800, scoped, tag = 'input window, operand 1, single buffered']
    #allocation9 [shape = 's32[1]{0}', space=sflag, size = 0x4, scoped, tag = 'scoped memory for tpu_custom_call.1']
    #allocation10 [shape = 'u8[6144]{0}', space=vmem, size = 0x1800, scoped, tag = 'input window, operand 2, single buffered']
    #allocation11 [shape = 'u8[6144]{0}', space=vmem, size = 0x1800, scoped, tag = 'input window, operand 3, single buffered']
    #allocation12 [shape = 's32[1]{0}', space=sflag, size = 0x4, scoped, tag = 'scoped memory for tpu_custom_call.1']
    #allocation13 [shape = 'u8[1536]{0}', space=vmem, size = 0x800, scoped, tag = 'input window, operand 4, single buffered']
    #allocation14 [shape = 'u8[1536]{0}', space=vmem, size = 0x800, scoped, tag = 'input window, operand 5, single buffered']
    #allocation15 [shape = 's32[1]{0}', space=sflag, size = 0x4, scoped, tag = 'scoped memory for tpu_custom_call.1']
    #allocation16 [shape = 'u8[2048]{0}', space=vmem, size = 0x800, scoped, tag = 'input window, operand 6, single buffered']
    #allocation17 [shape = 'u8[2048]{0}', space=vmem, size = 0x800, scoped, tag = 'input window, operand 7, single buffered']
    #allocation18 [shape = 's32[1]{0}', space=sflag, size = 0x4, scoped, tag = 'scoped memory for tpu_custom_call.1']
    #allocation19 [shape = 'u8[2048]{0}', space=vmem, size = 0x800, scoped, tag = 'input window, operand 8, single buffered']
    #allocation20 [shape = 'u8[2048]{0}', space=vmem, size = 0x800, scoped, tag = 'input window, operand 9, single buffered']
    #allocation21 [shape = 's32[1]{0}', space=sflag, size = 0x4, scoped, tag = 'scoped memory for tpu_custom_call.1']
    #allocation22 [shape = 'u8[2048]{0}', space=vmem, size = 0x800, scoped, tag = 'input window, operand 10, single buffered']
    #allocation23 [shape = 'u8[2048]{0}', space=vmem, size = 0x800, scoped, tag = 'input window, operand 11, single buffered']
    #allocation24 [shape = 's32[1]{0}', space=sflag, size = 0x4, scoped, tag = 'scoped memory for tpu_custom_call.1']
    #allocation25 [shape = 'u8[2048]{0}', space=vmem, size = 0x800, scoped, tag = 'input window, operand 12, single buffered']
    #allocation26 [shape = 'u8[2048]{0}', space=vmem, size = 0x800, scoped, tag = 'input window, operand 13, single buffered']
    #allocation27 [shape = 's32[1]{0}', space=sflag, size = 0x4, scoped, tag = 'scoped memory for tpu_custom_call.1']
    #allocation28 [shape = 'u8[2048]{0}', space=vmem, size = 0x800, scoped, tag = 'input window, operand 14, single buffered']
    #allocation29 [shape = 'u8[2048]{0}', space=vmem, size = 0x800, scoped, tag = 'input window, operand 15, single buffered']
    #allocation30 [shape = 's32[1]{0}', space=sflag, size = 0x4, scoped, tag = 'scoped memory for tpu_custom_call.1']
    #allocation31 [shape = 'u8[2048]{0}', space=vmem, size = 0x800, scoped, tag = 'input window, operand 16, single buffered']
    #allocation32 [shape = 'u8[2048]{0}', space=vmem, size = 0x800, scoped, tag = 'input window, operand 17, single buffered']
    #allocation33 [shape = 's32[1]{0}', space=sflag, size = 0x4, scoped, tag = 'scoped memory for tpu_custom_call.1']
    #allocation34 [shape = 'u8[2048]{0}', space=vmem, size = 0x800, scoped, tag = 'input window, operand 18, single buffered']
    #allocation35 [shape = 'u8[2048]{0}', space=vmem, size = 0x800, scoped, tag = 'input window, operand 19, single buffered']
    #allocation36 [shape = 's32[1]{0}', space=sflag, size = 0x4, scoped, tag = 'scoped memory for tpu_custom_call.1']
    #allocation37 [shape = 'u8[2048]{0}', space=vmem, size = 0x800, scoped, tag = 'input window, operand 20, single buffered']
    #allocation38 [shape = 'u8[2048]{0}', space=vmem, size = 0x800, scoped, tag = 'input window, operand 21, single buffered']
    #allocation39 [shape = 's32[1]{0}', space=sflag, size = 0x4, scoped, tag = 'scoped memory for tpu_custom_call.1']
    #allocation40 [shape = 'u8[8192]{0}', space=vmem, size = 0x2000, scoped, tag = 'input window, operand 22, single buffered']
    #allocation41 [shape = 'u8[8192]{0}', space=vmem, size = 0x2000, scoped, tag = 'input window, operand 23, single buffered']
    #allocation42 [shape = 's32[1]{0}', space=sflag, size = 0x4, scoped, tag = 'scoped memory for tpu_custom_call.1']
    #allocation43 [shape = 'u8[8192]{0}', space=vmem, size = 0x2000, scoped, tag = 'input window, operand 24, single buffered']
    #allocation44 [shape = 'u8[8192]{0}', space=vmem, size = 0x2000, scoped, tag = 'input window, operand 25, single buffered']
    #allocation45 [shape = 's32[1]{0}', space=sflag, size = 0x4, scoped, tag = 'scoped memory for tpu_custom_call.1']
    #allocation46 [shape = 'u8[8192]{0}', space=vmem, size = 0x2000, scoped, tag = 'input window, operand 26, single buffered']
    #allocation47 [shape = 'u8[8192]{0}', space=vmem, size = 0x2000, scoped, tag = 'input window, operand 27, single buffered']
    #allocation48 [shape = 's32[1]{0}', space=sflag, size = 0x4, scoped, tag = 'scoped memory for tpu_custom_call.1']
    #allocation49 [shape = 'u8[4096]{0}', space=vmem, size = 0x1000, scoped, tag = 'input window, operand 28, single buffered']
    #allocation50 [shape = 'u8[4096]{0}', space=vmem, size = 0x1000, scoped, tag = 'input window, operand 29, single buffered']
    #allocation51 [shape = 's32[1]{0}', space=sflag, size = 0x4, scoped, tag = 'scoped memory for tpu_custom_call.1']
    #allocation52 [shape = 'u8[24576]{0}', space=vmem, size = 0x6000, scoped, tag = 'output window, operand 0']
    %66 = vsyncpa [#allocation6], 0
    %s67 = scalar_lea.sflag [#allocation6], 1
    %68 = vsyncpa %s67, 0
    %69 = vsyncpa [#allocation9], 0
    %70 = vsyncpa [#allocation12], 0
    %71 = vsyncpa [#allocation15], 0
    %72 = vsyncpa [#allocation18], 0
    %73 = vsyncpa [#allocation21], 0
    %74 = vsyncpa [#allocation24], 0
    %75 = vsyncpa [#allocation27], 0
    %76 = vsyncpa [#allocation30], 0
    %77 = vsyncpa [#allocation33], 0
    %78 = vsyncpa [#allocation36], 0
    %79 = vsyncpa [#allocation39], 0
    %80 = vsyncpa [#allocation42], 0
    %81 = vsyncpa [#allocation45], 0
    %82 = vsyncpa [#allocation48], 0
    %83 = vsyncpa [#allocation51], 0
    %84 = vsyncpa [#allocation7], 0
    %s85 = scalar_lea.sflag [#allocation7], 1
    %86 = vsyncpa %s85, 0
    loop: start=0, step=1, limit=4
    $region2: #{tpu_custom_call.1} parent=1 // loop_pre_header
      _
    $region3: #{tpu_custom_call.1} parent=1 // loop_header
      %s88 = sphi 0, %s92
      %p89 = scmp.ge.s32.totalorder %s88, 4
      %s98 = sphi 0, %s100
      %s101 = sphi 0, %s98
      %s102 = sphi 0, %s101
      %s118 = sphi 0, %s102
      %s122 = sphi 0, %s122
      %s124 = sphi 0, %s122
      %s125 = sphi 0, %s124
      %s139 = sphi 0, %s125
      %s143 = sphi 0, %s143
      %s145 = sphi 0, %s143
      %s146 = sphi 0, %s145
      %s160 = sphi 0, %s146
      %s164 = sphi 0, %s164
      %s166 = sphi 0, %s164
      %s167 = sphi 0, %s166
      %s181 = sphi 0, %s167
      %s185 = sphi 0, %s185
      %s187 = sphi 0, %s185
      %s188 = sphi 0, %s187
      %s202 = sphi 0, %s188
      %s206 = sphi 0, %s206
      %s208 = sphi 0, %s206
      %s209 = sphi 0, %s208
      %s223 = sphi 0, %s209
      %s227 = sphi 0, %s227
      %s229 = sphi 0, %s227
      %s230 = sphi 0, %s229
      %s244 = sphi 0, %s230
      %s248 = sphi 0, %s248
      %s250 = sphi 0, %s248
      %s251 = sphi 0, %s250
      %s265 = sphi 0, %s251
      %s269 = sphi 0, %s269
      %s271 = sphi 0, %s269
      %s272 = sphi 0, %s271
      %s286 = sphi 0, %s272
      %s290 = sphi 0, %s290
      %s292 = sphi 0, %s290
      %s293 = sphi 0, %s292
      %s307 = sphi 0, %s293
      %s311 = sphi 0, %s311
      %s313 = sphi 0, %s311
      %s314 = sphi 0, %s313
      %s328 = sphi 0, %s314
      %s332 = sphi 0, %s332
      %s334 = sphi 0, %s332
      %s335 = sphi 0, %s334
      %s349 = sphi 0, %s335
      %s353 = sphi 0, %s353
      %s355 = sphi 0, %s353
      %s356 = sphi 0, %s355
      %s370 = sphi 0, %s356
      %s374 = sphi 0, %s374
      %s376 = sphi 0, %s374
      %s377 = sphi 0, %s376
      %s391 = sphi 0, %s377
      %s395 = sphi 0, %s395
      %s397 = sphi 0, %s395
      %s398 = sphi 0, %s397
      %s412 = sphi 0, %s398
      %s416 = sphi 0, %s416
      %s418 = sphi 0, %s416
      %s419 = sphi 0, %s418
      %s433 = sphi 0, %s419
      %s437 = sphi 0, %s437
      %s439 = sphi 0, %s437
      %s440 = sphi 0, %s439
      %s454 = sphi 0, %s440
      %s458 = sphi 0, %s458
      %s460 = sphi 0, %s458
      %s461 = sphi 0, %s460
      %s475 = sphi 0, %s461
      %s479 = sphi 0, %s479
      %s481 = sphi 0, %s479
      %s482 = sphi 0, %s481
      %s496 = sphi 0, %s482
      %s500 = sphi 0, %s500
      %s502 = sphi 0, %s500
      %s503 = sphi 0, %s502
      %s517 = sphi 0, %s503
      %s521 = sphi 0, %s521
      %s523 = sphi 0, %s521
      %s524 = sphi 0, %s523
      %s538 = sphi 0, %s524
      %s542 = sphi 0, %s542
      %s544 = sphi 0, %s542
      %s545 = sphi 0, %s544
      %s559 = sphi 0, %s545
      %s563 = sphi 0, %s563
      %s565 = sphi 0, %s563
      %s566 = sphi 0, %s565
      %s580 = sphi 0, %s566
      %s584 = sphi 0, %s584
      %s586 = sphi 0, %s584
      %s587 = sphi 0, %s586
      %s601 = sphi 0, %s587
      %s605 = sphi 0, %s605
      %s607 = sphi 0, %s605
      %s608 = sphi 0, %s607
      %s622 = sphi 0, %s608
      %s626 = sphi 0, %s626
      %s628 = sphi 0, %s626
      %s629 = sphi 0, %s628
      %s643 = sphi 0, %s629
      %s647 = sphi 0, %s647
      %s649 = sphi 0, %s647
      %s650 = sphi 0, %s649
      %s664 = sphi 0, %s650
      %s668 = sphi 0, %s668
      %s670 = sphi 0, %s668
      %s671 = sphi 0, %s670
      %s685 = sphi 0, %s671
      %s689 = sphi 0, %s689
      %s691 = sphi 0, %s689
      %s692 = sphi 0, %s691
      %s706 = sphi 0, %s692
      %s710 = sphi 0, %s710
      %s712 = sphi 0, %s710
      %s713 = sphi 0, %s712
      %s727 = sphi 0, %s713
      %s733 = sphi 0, %s735
      %s736 = sphi 0, %s733
      %s737 = sphi 0, %s736
      %s753 = sphi 0, %s737
    $region4: #{tpu_custom_call.1} parent=1 // loop_header_branch
      %91 = sbr.rel (%p89) target = $region8
    $region5: #{tpu_custom_call.1} parent=1 // loop_body
      %s93 = ssub.s32 %s88, 1
      %s94 = ssub.s32 %s88, 2
      %s95 = sadd.s32 %s88, 1
      %s96 = ssub.s32 %s88, %s95
      %p97 = scmp.eq.s32.totalorder %s96, 0
      %s99 = sadd.s32 %s98, 1
      %s100 = scalar_select %p97, %s98, %s99
      %p103 = pneg %p97
      %p104 = scmp.eq.s32.totalorder %s88, 1
      %p105 = por %p103, %p104
      %p106 = scmp.ne.s32.totalorder %s98, %s101
      %p107 = scmp.eq.s32.totalorder %s88, 0
      %p108 = por %p106, %p107
      %p109 = scmp.ne.s32.totalorder %s98, %s101
      %p110 = scmp.eq.s32.totalorder %s93, 1
      %p111 = por %p109, %p110
      %p112 = scmp.ne.s32.totalorder %s101, %s102
      %p113 = scmp.eq.s32.totalorder %s93, 0
      %p114 = por %p112, %p113
      %p115 = scmp.ne.s32.totalorder %s101, %s102
      %p116 = scmp.eq.s32.totalorder %s94, 1
      %p117 = por %p115, %p116
      %p119 = scmp.ne.s32.totalorder %s102, %s118
      %p120 = scmp.eq.s32.totalorder %s94, 0
      %p121 = por %p119, %p120
      %s123 = sadd.s32 %s122, 1
      %p126 = scmp.eq.s32.totalorder %s88, 1
      %p127 = scmp.ne.s32.totalorder %s122, %s124
      %p128 = scmp.eq.s32.totalorder %s88, 0
      %p129 = por %p127, %p128
      %p130 = scmp.ne.s32.totalorder %s122, %s124
      %p131 = scmp.eq.s32.totalorder %s93, 1
      %p132 = por %p130, %p131
      %p133 = scmp.ne.s32.totalorder %s124, %s125
      %p134 = scmp.eq.s32.totalorder %s93, 0
      %p135 = por %p133, %p134
      %p136 = scmp.ne.s32.totalorder %s124, %s125
      %p137 = scmp.eq.s32.totalorder %s94, 1
      %p138 = por %p136, %p137
      %p140 = scmp.ne.s32.totalorder %s125, %s139
      %p141 = scmp.eq.s32.totalorder %s94, 0
      %p142 = por %p140, %p141
      %s144 = sadd.s32 %s143, 1
      %p147 = scmp.eq.s32.totalorder %s88, 1
      %p148 = scmp.ne.s32.totalorder %s143, %s145
      %p149 = scmp.eq.s32.totalorder %s88, 0
      %p150 = por %p148, %p149
      %p151 = scmp.ne.s32.totalorder %s143, %s145
      %p152 = scmp.eq.s32.totalorder %s93, 1
      %p153 = por %p151, %p152
      %p154 = scmp.ne.s32.totalorder %s145, %s146
      %p155 = scmp.eq.s32.totalorder %s93, 0
      %p156 = por %p154, %p155
      %p157 = scmp.ne.s32.totalorder %s145, %s146
      %p158 = scmp.eq.s32.totalorder %s94, 1
      %p159 = por %p157, %p158
      %p161 = scmp.ne.s32.totalorder %s146, %s160
      %p162 = scmp.eq.s32.totalorder %s94, 0
      %p163 = por %p161, %p162
      %s165 = sadd.s32 %s164, 1
      %p168 = scmp.eq.s32.totalorder %s88, 1
      %p169 = scmp.ne.s32.totalorder %s164, %s166
      %p170 = scmp.eq.s32.totalorder %s88, 0
      %p171 = por %p169, %p170
      %p172 = scmp.ne.s32.totalorder %s164, %s166
      %p173 = scmp.eq.s32.totalorder %s93, 1
      %p174 = por %p172, %p173
      %p175 = scmp.ne.s32.totalorder %s166, %s167
      %p176 = scmp.eq.s32.totalorder %s93, 0
      %p177 = por %p175, %p176
      %p178 = scmp.ne.s32.totalorder %s166, %s167
      %p179 = scmp.eq.s32.totalorder %s94, 1
      %p180 = por %p178, %p179
      %p182 = scmp.ne.s32.totalorder %s167, %s181
      %p183 = scmp.eq.s32.totalorder %s94, 0
      %p184 = por %p182, %p183
      %s186 = sadd.s32 %s185, 1
      %p189 = scmp.eq.s32.totalorder %s88, 1
      %p190 = scmp.ne.s32.totalorder %s185, %s187
      %p191 = scmp.eq.s32.totalorder %s88, 0
      %p192 = por %p190, %p191
      %p193 = scmp.ne.s32.totalorder %s185, %s187
      %p194 = scmp.eq.s32.totalorder %s93, 1
      %p195 = por %p193, %p194
      %p196 = scmp.ne.s32.totalorder %s187, %s188
      %p197 = scmp.eq.s32.totalorder %s93, 0
      %p198 = por %p196, %p197
      %p199 = scmp.ne.s32.totalorder %s187, %s188
      %p200 = scmp.eq.s32.totalorder %s94, 1
      %p201 = por %p199, %p200
      %p203 = scmp.ne.s32.totalorder %s188, %s202
      %p204 = scmp.eq.s32.totalorder %s94, 0
      %p205 = por %p203, %p204
      %s207 = sadd.s32 %s206, 1
      %p210 = scmp.eq.s32.totalorder %s88, 1
      %p211 = scmp.ne.s32.totalorder %s206, %s208
      %p212 = scmp.eq.s32.totalorder %s88, 0
      %p213 = por %p211, %p212
      %p214 = scmp.ne.s32.totalorder %s206, %s208
      %p215 = scmp.eq.s32.totalorder %s93, 1
      %p216 = por %p214, %p215
      %p217 = scmp.ne.s32.totalorder %s208, %s209
      %p218 = scmp.eq.s32.totalorder %s93, 0
      %p219 = por %p217, %p218
      %p220 = scmp.ne.s32.totalorder %s208, %s209
      %p221 = scmp.eq.s32.totalorder %s94, 1
      %p222 = por %p220, %p221
      %p224 = scmp.ne.s32.totalorder %s209, %s223
      %p225 = scmp.eq.s32.totalorder %s94, 0
      %p226 = por %p224, %p225
      %s228 = sadd.s32 %s227, 1
      %p231 = scmp.eq.s32.totalorder %s88, 1
      %p232 = scmp.ne.s32.totalorder %s227, %s229
      %p233 = scmp.eq.s32.totalorder %s88, 0
      %p234 = por %p232, %p233
      %p235 = scmp.ne.s32.totalorder %s227, %s229
      %p236 = scmp.eq.s32.totalorder %s93, 1
      %p237 = por %p235, %p236
      %p238 = scmp.ne.s32.totalorder %s229, %s230
      %p239 = scmp.eq.s32.totalorder %s93, 0
      %p240 = por %p238, %p239
      %p241 = scmp.ne.s32.totalorder %s229, %s230
      %p242 = scmp.eq.s32.totalorder %s94, 1
      %p243 = por %p241, %p242
      %p245 = scmp.ne.s32.totalorder %s230, %s244
      %p246 = scmp.eq.s32.totalorder %s94, 0
      %p247 = por %p245, %p246
      %s249 = sadd.s32 %s248, 1
      %p252 = scmp.eq.s32.totalorder %s88, 1
      %p253 = scmp.ne.s32.totalorder %s248, %s250
      %p254 = scmp.eq.s32.totalorder %s88, 0
      %p255 = por %p253, %p254
      %p256 = scmp.ne.s32.totalorder %s248, %s250
      %p257 = scmp.eq.s32.totalorder %s93, 1
      %p258 = por %p256, %p257
      %p259 = scmp.ne.s32.totalorder %s250, %s251
      %p260 = scmp.eq.s32.totalorder %s93, 0
      %p261 = por %p259, %p260
      %p262 = scmp.ne.s32.totalorder %s250, %s251
      %p263 = scmp.eq.s32.totalorder %s94, 1
      %p264 = por %p262, %p263
      %p266 = scmp.ne.s32.totalorder %s251, %s265
      %p267 = scmp.eq.s32.totalorder %s94, 0
      %p268 = por %p266, %p267
      %s270 = sadd.s32 %s269, 1
      %p273 = scmp.eq.s32.totalorder %s88, 1
      %p274 = scmp.ne.s32.totalorder %s269, %s271
      %p275 = scmp.eq.s32.totalorder %s88, 0
      %p276 = por %p274, %p275
      %p277 = scmp.ne.s32.totalorder %s269, %s271
      %p278 = scmp.eq.s32.totalorder %s93, 1
      %p279 = por %p277, %p278
      %p280 = scmp.ne.s32.totalorder %s271, %s272
      %p281 = scmp.eq.s32.totalorder %s93, 0
      %p282 = por %p280, %p281
      %p283 = scmp.ne.s32.totalorder %s271, %s272
      %p284 = scmp.eq.s32.totalorder %s94, 1
      %p285 = por %p283, %p284
      %p287 = scmp.ne.s32.totalorder %s272, %s286
      %p288 = scmp.eq.s32.totalorder %s94, 0
      %p289 = por %p287, %p288
      %s291 = sadd.s32 %s290, 1
      %p294 = scmp.eq.s32.totalorder %s88, 1
      %p295 = scmp.ne.s32.totalorder %s290, %s292
      %p296 = scmp.eq.s32.totalorder %s88, 0
      %p297 = por %p295, %p296
      %p298 = scmp.ne.s32.totalorder %s290, %s292
      %p299 = scmp.eq.s32.totalorder %s93, 1
      %p300 = por %p298, %p299
      %p301 = scmp.ne.s32.totalorder %s292, %s293
      %p302 = scmp.eq.s32.totalorder %s93, 0
      %p303 = por %p301, %p302
      %p304 = scmp.ne.s32.totalorder %s292, %s293
      %p305 = scmp.eq.s32.totalorder %s94, 1
      %p306 = por %p304, %p305
      %p308 = scmp.ne.s32.totalorder %s293, %s307
      %p309 = scmp.eq.s32.totalorder %s94, 0
      %p310 = por %p308, %p309
      %s312 = sadd.s32 %s311, 1
      %p315 = scmp.eq.s32.totalorder %s88, 1
      %p316 = scmp.ne.s32.totalorder %s311, %s313
      %p317 = scmp.eq.s32.totalorder %s88, 0
      %p318 = por %p316, %p317
      %p319 = scmp.ne.s32.totalorder %s311, %s313
      %p320 = scmp.eq.s32.totalorder %s93, 1
      %p321 = por %p319, %p320
      %p322 = scmp.ne.s32.totalorder %s313, %s314
      %p323 = scmp.eq.s32.totalorder %s93, 0
      %p324 = por %p322, %p323
      %p325 = scmp.ne.s32.totalorder %s313, %s314
      %p326 = scmp.eq.s32.totalorder %s94, 1
      %p327 = por %p325, %p326
      %p329 = scmp.ne.s32.totalorder %s314, %s328
      %p330 = scmp.eq.s32.totalorder %s94, 0
      %p331 = por %p329, %p330
      %s333 = sadd.s32 %s332, 1
      %p336 = scmp.eq.s32.totalorder %s88, 1
      %p337 = scmp.ne.s32.totalorder %s332, %s334
      %p338 = scmp.eq.s32.totalorder %s88, 0
      %p339 = por %p337, %p338
      %p340 = scmp.ne.s32.totalorder %s332, %s334
      %p341 = scmp.eq.s32.totalorder %s93, 1
      %p342 = por %p340, %p341
      %p343 = scmp.ne.s32.totalorder %s334, %s335
      %p344 = scmp.eq.s32.totalorder %s93, 0
      %p345 = por %p343, %p344
      %p346 = scmp.ne.s32.totalorder %s334, %s335
      %p347 = scmp.eq.s32.totalorder %s94, 1
      %p348 = por %p346, %p347
      %p350 = scmp.ne.s32.totalorder %s335, %s349
      %p351 = scmp.eq.s32.totalorder %s94, 0
      %p352 = por %p350, %p351
      %s354 = sadd.s32 %s353, 1
      %p357 = scmp.eq.s32.totalorder %s88, 1
      %p358 = scmp.ne.s32.totalorder %s353, %s355
      %p359 = scmp.eq.s32.totalorder %s88, 0
      %p360 = por %p358, %p359
      %p361 = scmp.ne.s32.totalorder %s353, %s355
      %p362 = scmp.eq.s32.totalorder %s93, 1
      %p363 = por %p361, %p362
      %p364 = scmp.ne.s32.totalorder %s355, %s356
      %p365 = scmp.eq.s32.totalorder %s93, 0
      %p366 = por %p364, %p365
      %p367 = scmp.ne.s32.totalorder %s355, %s356
      %p368 = scmp.eq.s32.totalorder %s94, 1
      %p369 = por %p367, %p368
      %p371 = scmp.ne.s32.totalorder %s356, %s370
      %p372 = scmp.eq.s32.totalorder %s94, 0
      %p373 = por %p371, %p372
      %s375 = sadd.s32 %s374, 1
      %p378 = scmp.eq.s32.totalorder %s88, 1
      %p379 = scmp.ne.s32.totalorder %s374, %s376
      %p380 = scmp.eq.s32.totalorder %s88, 0
      %p381 = por %p379, %p380
      %p382 = scmp.ne.s32.totalorder %s374, %s376
      %p383 = scmp.eq.s32.totalorder %s93, 1
      %p384 = por %p382, %p383
      %p385 = scmp.ne.s32.totalorder %s376, %s377
      %p386 = scmp.eq.s32.totalorder %s93, 0
      %p387 = por %p385, %p386
      %p388 = scmp.ne.s32.totalorder %s376, %s377
      %p389 = scmp.eq.s32.totalorder %s94, 1
      %p390 = por %p388, %p389
      %p392 = scmp.ne.s32.totalorder %s377, %s391
      %p393 = scmp.eq.s32.totalorder %s94, 0
      %p394 = por %p392, %p393
      %s396 = sadd.s32 %s395, 1
      %p399 = scmp.eq.s32.totalorder %s88, 1
      %p400 = scmp.ne.s32.totalorder %s395, %s397
      %p401 = scmp.eq.s32.totalorder %s88, 0
      %p402 = por %p400, %p401
      %p403 = scmp.ne.s32.totalorder %s395, %s397
      %p404 = scmp.eq.s32.totalorder %s93, 1
      %p405 = por %p403, %p404
      %p406 = scmp.ne.s32.totalorder %s397, %s398
      %p407 = scmp.eq.s32.totalorder %s93, 0
      %p408 = por %p406, %p407
      %p409 = scmp.ne.s32.totalorder %s397, %s398
      %p410 = scmp.eq.s32.totalorder %s94, 1
      %p411 = por %p409, %p410
      %p413 = scmp.ne.s32.totalorder %s398, %s412
      %p414 = scmp.eq.s32.totalorder %s94, 0
      %p415 = por %p413, %p414
      %s417 = sadd.s32 %s416, 1
      %p420 = scmp.eq.s32.totalorder %s88, 1
      %p421 = scmp.ne.s32.totalorder %s416, %s418
      %p422 = scmp.eq.s32.totalorder %s88, 0
      %p423 = por %p421, %p422
      %p424 = scmp.ne.s32.totalorder %s416, %s418
      %p425 = scmp.eq.s32.totalorder %s93, 1
      %p426 = por %p424, %p425
      %p427 = scmp.ne.s32.totalorder %s418, %s419
      %p428 = scmp.eq.s32.totalorder %s93, 0
      %p429 = por %p427, %p428
      %p430 = scmp.ne.s32.totalorder %s418, %s419
      %p431 = scmp.eq.s32.totalorder %s94, 1
      %p432 = por %p430, %p431
      %p434 = scmp.ne.s32.totalorder %s419, %s433
      %p435 = scmp.eq.s32.totalorder %s94, 0
      %p436 = por %p434, %p435
      %s438 = sadd.s32 %s437, 1
      %p441 = scmp.eq.s32.totalorder %s88, 1
      %p442 = scmp.ne.s32.totalorder %s437, %s439
      %p443 = scmp.eq.s32.totalorder %s88, 0
      %p444 = por %p442, %p443
      %p445 = scmp.ne.s32.totalorder %s437, %s439
      %p446 = scmp.eq.s32.totalorder %s93, 1
      %p447 = por %p445, %p446
      %p448 = scmp.ne.s32.totalorder %s439, %s440
      %p449 = scmp.eq.s32.totalorder %s93, 0
      %p450 = por %p448, %p449
      %p451 = scmp.ne.s32.totalorder %s439, %s440
      %p452 = scmp.eq.s32.totalorder %s94, 1
      %p453 = por %p451, %p452
      %p455 = scmp.ne.s32.totalorder %s440, %s454
      %p456 = scmp.eq.s32.totalorder %s94, 0
      %p457 = por %p455, %p456
      %s459 = sadd.s32 %s458, 1
      %p462 = scmp.eq.s32.totalorder %s88, 1
      %p463 = scmp.ne.s32.totalorder %s458, %s460
      %p464 = scmp.eq.s32.totalorder %s88, 0
      %p465 = por %p463, %p464
      %p466 = scmp.ne.s32.totalorder %s458, %s460
      %p467 = scmp.eq.s32.totalorder %s93, 1
      %p468 = por %p466, %p467
      %p469 = scmp.ne.s32.totalorder %s460, %s461
      %p470 = scmp.eq.s32.totalorder %s93, 0
      %p471 = por %p469, %p470
      %p472 = scmp.ne.s32.totalorder %s460, %s461
      %p473 = scmp.eq.s32.totalorder %s94, 1
      %p474 = por %p472, %p473
      %p476 = scmp.ne.s32.totalorder %s461, %s475
      %p477 = scmp.eq.s32.totalorder %s94, 0
      %p478 = por %p476, %p477
      %s480 = sadd.s32 %s479, 1
      %p483 = scmp.eq.s32.totalorder %s88, 1
      %p484 = scmp.ne.s32.totalorder %s479, %s481
      %p485 = scmp.eq.s32.totalorder %s88, 0
      %p486 = por %p484, %p485
      %p487 = scmp.ne.s32.totalorder %s479, %s481
      %p488 = scmp.eq.s32.totalorder %s93, 1
      %p489 = por %p487, %p488
      %p490 = scmp.ne.s32.totalorder %s481, %s482
      %p491 = scmp.eq.s32.totalorder %s93, 0
      %p492 = por %p490, %p491
      %p493 = scmp.ne.s32.totalorder %s481, %s482
      %p494 = scmp.eq.s32.totalorder %s94, 1
      %p495 = por %p493, %p494
      %p497 = scmp.ne.s32.totalorder %s482, %s496
      %p498 = scmp.eq.s32.totalorder %s94, 0
      %p499 = por %p497, %p498
      %s501 = sadd.s32 %s500, 1
      %p504 = scmp.eq.s32.totalorder %s88, 1
      %p505 = scmp.ne.s32.totalorder %s500, %s502
      %p506 = scmp.eq.s32.totalorder %s88, 0
      %p507 = por %p505, %p506
      %p508 = scmp.ne.s32.totalorder %s500, %s502
      %p509 = scmp.eq.s32.totalorder %s93, 1
      %p510 = por %p508, %p509
      %p511 = scmp.ne.s32.totalorder %s502, %s503
      %p512 = scmp.eq.s32.totalorder %s93, 0
      %p513 = por %p511, %p512
      %p514 = scmp.ne.s32.totalorder %s502, %s503
      %p515 = scmp.eq.s32.totalorder %s94, 1
      %p516 = por %p514, %p515
      %p518 = scmp.ne.s32.totalorder %s503, %s517
      %p519 = scmp.eq.s32.totalorder %s94, 0
      %p520 = por %p518, %p519
      %s522 = sadd.s32 %s521, 1
      %p525 = scmp.eq.s32.totalorder %s88, 1
      %p526 = scmp.ne.s32.totalorder %s521, %s523
      %p527 = scmp.eq.s32.totalorder %s88, 0
      %p528 = por %p526, %p527
      %p529 = scmp.ne.s32.totalorder %s521, %s523
      %p530 = scmp.eq.s32.totalorder %s93, 1
      %p531 = por %p529, %p530
      %p532 = scmp.ne.s32.totalorder %s523, %s524
      %p533 = scmp.eq.s32.totalorder %s93, 0
      %p534 = por %p532, %p533
      %p535 = scmp.ne.s32.totalorder %s523, %s524
      %p536 = scmp.eq.s32.totalorder %s94, 1
      %p537 = por %p535, %p536
      %p539 = scmp.ne.s32.totalorder %s524, %s538
      %p540 = scmp.eq.s32.totalorder %s94, 0
      %p541 = por %p539, %p540
      %s543 = sadd.s32 %s542, 1
      %p546 = scmp.eq.s32.totalorder %s88, 1
      %p547 = scmp.ne.s32.totalorder %s542, %s544
      %p548 = scmp.eq.s32.totalorder %s88, 0
      %p549 = por %p547, %p548
      %p550 = scmp.ne.s32.totalorder %s542, %s544
      %p551 = scmp.eq.s32.totalorder %s93, 1
      %p552 = por %p550, %p551
      %p553 = scmp.ne.s32.totalorder %s544, %s545
      %p554 = scmp.eq.s32.totalorder %s93, 0
      %p555 = por %p553, %p554
      %p556 = scmp.ne.s32.totalorder %s544, %s545
      %p557 = scmp.eq.s32.totalorder %s94, 1
      %p558 = por %p556, %p557
      %p560 = scmp.ne.s32.totalorder %s545, %s559
      %p561 = scmp.eq.s32.totalorder %s94, 0
      %p562 = por %p560, %p561
      %s564 = sadd.s32 %s563, 1
      %p567 = scmp.eq.s32.totalorder %s88, 1
      %p568 = scmp.ne.s32.totalorder %s563, %s565
      %p569 = scmp.eq.s32.totalorder %s88, 0
      %p570 = por %p568, %p569
      %p571 = scmp.ne.s32.totalorder %s563, %s565
      %p572 = scmp.eq.s32.totalorder %s93, 1
      %p573 = por %p571, %p572
      %p574 = scmp.ne.s32.totalorder %s565, %s566
      %p575 = scmp.eq.s32.totalorder %s93, 0
      %p576 = por %p574, %p575
      %p577 = scmp.ne.s32.totalorder %s565, %s566
      %p578 = scmp.eq.s32.totalorder %s94, 1
      %p579 = por %p577, %p578
      %p581 = scmp.ne.s32.totalorder %s566, %s580
      %p582 = scmp.eq.s32.totalorder %s94, 0
      %p583 = por %p581, %p582
      %s585 = sadd.s32 %s584, 1
      %p588 = scmp.eq.s32.totalorder %s88, 1
      %p589 = scmp.ne.s32.totalorder %s584, %s586
      %p590 = scmp.eq.s32.totalorder %s88, 0
      %p591 = por %p589, %p590
      %p592 = scmp.ne.s32.totalorder %s584, %s586
      %p593 = scmp.eq.s32.totalorder %s93, 1
      %p594 = por %p592, %p593
      %p595 = scmp.ne.s32.totalorder %s586, %s587
      %p596 = scmp.eq.s32.totalorder %s93, 0
      %p597 = por %p595, %p596
      %p598 = scmp.ne.s32.totalorder %s586, %s587
      %p599 = scmp.eq.s32.totalorder %s94, 1
      %p600 = por %p598, %p599
      %p602 = scmp.ne.s32.totalorder %s587, %s601
      %p603 = scmp.eq.s32.totalorder %s94, 0
      %p604 = por %p602, %p603
      %s606 = sadd.s32 %s605, 1
      %p609 = scmp.eq.s32.totalorder %s88, 1
      %p610 = scmp.ne.s32.totalorder %s605, %s607
      %p611 = scmp.eq.s32.totalorder %s88, 0
      %p612 = por %p610, %p611
      %p613 = scmp.ne.s32.totalorder %s605, %s607
      %p614 = scmp.eq.s32.totalorder %s93, 1
      %p615 = por %p613, %p614
      %p616 = scmp.ne.s32.totalorder %s607, %s608
      %p617 = scmp.eq.s32.totalorder %s93, 0
      %p618 = por %p616, %p617
      %p619 = scmp.ne.s32.totalorder %s607, %s608
      %p620 = scmp.eq.s32.totalorder %s94, 1
      %p621 = por %p619, %p620
      %p623 = scmp.ne.s32.totalorder %s608, %s622
      %p624 = scmp.eq.s32.totalorder %s94, 0
      %p625 = por %p623, %p624
      %s627 = sadd.s32 %s626, 1
      %p630 = scmp.eq.s32.totalorder %s88, 1
      %p631 = scmp.ne.s32.totalorder %s626, %s628
      %p632 = scmp.eq.s32.totalorder %s88, 0
      %p633 = por %p631, %p632
      %p634 = scmp.ne.s32.totalorder %s626, %s628
      %p635 = scmp.eq.s32.totalorder %s93, 1
      %p636 = por %p634, %p635
      %p637 = scmp.ne.s32.totalorder %s628, %s629
      %p638 = scmp.eq.s32.totalorder %s93, 0
      %p639 = por %p637, %p638
      %p640 = scmp.ne.s32.totalorder %s628, %s629
      %p641 = scmp.eq.s32.totalorder %s94, 1
      %p642 = por %p640, %p641
      %p644 = scmp.ne.s32.totalorder %s629, %s643
      %p645 = scmp.eq.s32.totalorder %s94, 0
      %p646 = por %p644, %p645
      %s648 = sadd.s32 %s647, 1
      %p651 = scmp.eq.s32.totalorder %s88, 1
      %p652 = scmp.ne.s32.totalorder %s647, %s649
      %p653 = scmp.eq.s32.totalorder %s88, 0
      %p654 = por %p652, %p653
      %p655 = scmp.ne.s32.totalorder %s647, %s649
      %p656 = scmp.eq.s32.totalorder %s93, 1
      %p657 = por %p655, %p656
      %p658 = scmp.ne.s32.totalorder %s649, %s650
      %p659 = scmp.eq.s32.totalorder %s93, 0
      %p660 = por %p658, %p659
      %p661 = scmp.ne.s32.totalorder %s649, %s650
      %p662 = scmp.eq.s32.totalorder %s94, 1
      %p663 = por %p661, %p662
      %p665 = scmp.ne.s32.totalorder %s650, %s664
      %p666 = scmp.eq.s32.totalorder %s94, 0
      %p667 = por %p665, %p666
      %s669 = sadd.s32 %s668, 1
      %p672 = scmp.eq.s32.totalorder %s88, 1
      %p673 = scmp.ne.s32.totalorder %s668, %s670
      %p674 = scmp.eq.s32.totalorder %s88, 0
      %p675 = por %p673, %p674
      %p676 = scmp.ne.s32.totalorder %s668, %s670
      %p677 = scmp.eq.s32.totalorder %s93, 1
      %p678 = por %p676, %p677
      %p679 = scmp.ne.s32.totalorder %s670, %s671
      %p680 = scmp.eq.s32.totalorder %s93, 0
      %p681 = por %p679, %p680
      %p682 = scmp.ne.s32.totalorder %s670, %s671
      %p683 = scmp.eq.s32.totalorder %s94, 1
      %p684 = por %p682, %p683
      %p686 = scmp.ne.s32.totalorder %s671, %s685
      %p687 = scmp.eq.s32.totalorder %s94, 0
      %p688 = por %p686, %p687
      %s690 = sadd.s32 %s689, 1
      %p693 = scmp.eq.s32.totalorder %s88, 1
      %p694 = scmp.ne.s32.totalorder %s689, %s691
      %p695 = scmp.eq.s32.totalorder %s88, 0
      %p696 = por %p694, %p695
      %p697 = scmp.ne.s32.totalorder %s689, %s691
      %p698 = scmp.eq.s32.totalorder %s93, 1
      %p699 = por %p697, %p698
      %p700 = scmp.ne.s32.totalorder %s691, %s692
      %p701 = scmp.eq.s32.totalorder %s93, 0
      %p702 = por %p700, %p701
      %p703 = scmp.ne.s32.totalorder %s691, %s692
      %p704 = scmp.eq.s32.totalorder %s94, 1
      %p705 = por %p703, %p704
      %p707 = scmp.ne.s32.totalorder %s692, %s706
      %p708 = scmp.eq.s32.totalorder %s94, 0
      %p709 = por %p707, %p708
      %s711 = sadd.s32 %s710, 1
      %p714 = scmp.eq.s32.totalorder %s88, 1
      %p715 = scmp.ne.s32.totalorder %s710, %s712
      %p716 = scmp.eq.s32.totalorder %s88, 0
      %p717 = por %p715, %p716
      %p718 = scmp.ne.s32.totalorder %s710, %s712
      %p719 = scmp.eq.s32.totalorder %s93, 1
      %p720 = por %p718, %p719
      %p721 = scmp.ne.s32.totalorder %s712, %s713
      %p722 = scmp.eq.s32.totalorder %s93, 0
      %p723 = por %p721, %p722
      %p724 = scmp.ne.s32.totalorder %s712, %s713
      %p725 = scmp.eq.s32.totalorder %s94, 1
      %p726 = por %p724, %p725
      %p728 = scmp.ne.s32.totalorder %s713, %s727
      %p729 = scmp.eq.s32.totalorder %s94, 0
      %p730 = por %p728, %p729
      %s731 = ssub.s32 %s88, %s95
      %p732 = scmp.eq.s32.totalorder %s731, 0
      %s734 = sadd.s32 %s733, 1
      %s735 = scalar_select %p732, %s733, %s734
      %p738 = pneg %p732
      %p739 = scmp.eq.s32.totalorder %s88, 1
      %p740 = por %p738, %p739
      %p741 = scmp.ne.s32.totalorder %s733, %s736
      %p742 = scmp.eq.s32.totalorder %s88, 0
      %p743 = por %p741, %p742
      %p744 = scmp.ne.s32.totalorder %s733, %s736
      %p745 = scmp.eq.s32.totalorder %s93, 1
      %p746 = por %p744, %p745
      %p747 = scmp.ne.s32.totalorder %s736, %s737
      %p748 = scmp.eq.s32.totalorder %s93, 0
      %p749 = por %p747, %p748
      %p750 = scmp.ne.s32.totalorder %s736, %s737
      %p751 = scmp.eq.s32.totalorder %s94, 1
      %p752 = por %p750, %p751
      %p754 = scmp.ne.s32.totalorder %s737, %s753
      %p755 = scmp.eq.s32.totalorder %s94, 0
      %p756 = por %p754, %p755
      %p757 = scmp.le.s32.totalorder 1, %s88
      %p758 = scmp.lt.s32.totalorder %s88, 3
      %p759 = pnand %p757, %p758
      %p760 = pneg %p759
      // Predicated region
      $region9: #{tpu_custom_call.1} parent=5 // pred_check
        _
      $region10: #{tpu_custom_call.1} parent=5 // pred_check_branch
        %762 = sbr.rel (%p759) target = $region12
      $region11: #{tpu_custom_call.1} parent=5 // pred_region
        %s763 = ssub.s32 %s88, 1
        // Predicated region
        $region13: #{tpu_custom_call.1} parent=11 // pred_check
          %p764 = pneg %p135
        $region14: #{tpu_custom_call.1} parent=11 // pred_check_branch
          %766 = sbr.rel (%p764) target = $region16
        $region15: #{tpu_custom_call.1} parent=11 // pred_region
          %s768 = ssub.s32 192, 192
          %769 = vsyncadd [#allocation9], %s768
          %s771 = sshll.u32 [#allocation8], 4
          %s772 = int_to_ptr.vmem [resolvable:$true] %s771
          %774 = dma.hbm_to_vmem [thread:$0]  %s3, 192, %s772, [#allocation9]
        $region16: #{tpu_custom_call.1} parent=11 // pred_fallthru
          _
        // Predicated region
        $region17: #{tpu_custom_call.1} parent=11 // pred_check
          %p775 = pneg %p156
        $region18: #{tpu_custom_call.1} parent=11 // pred_check_branch
          %777 = sbr.rel (%p775) target = $region20
        $region19: #{tpu_custom_call.1} parent=11 // pred_region
          %s779 = ssub.s32 192, 192
          %780 = vsyncadd [#allocation9], %s779
          %s782 = sshll.u32 [#allocation10], 4
          %s783 = int_to_ptr.vmem [resolvable:$true] %s782
          %785 = dma.hbm_to_vmem [thread:$0]  %s5, 192, %s783, [#allocation9]
        $region20: #{tpu_custom_call.1} parent=11 // pred_fallthru
          _
        // Predicated region
        $region21: #{tpu_custom_call.1} parent=11 // pred_check
          %p786 = pneg %p177
        $region22: #{tpu_custom_call.1} parent=11 // pred_check_branch
          %788 = sbr.rel (%p786) target = $region24
        $region23: #{tpu_custom_call.1} parent=11 // pred_region
          %s790 = ssub.s32 192, 192
          %791 = vsyncadd [#allocation12], %s790
          %s793 = sshll.u32 [#allocation11], 4
          %s794 = int_to_ptr.vmem [resolvable:$true] %s793
          %796 = dma.hbm_to_vmem [thread:$0]  %s7, 192, %s794, [#allocation12]
        $region24: #{tpu_custom_call.1} parent=11 // pred_fallthru
          _
        // Predicated region
        $region25: #{tpu_custom_call.1} parent=11 // pred_check
          %p797 = pneg %p198
        $region26: #{tpu_custom_call.1} parent=11 // pred_check_branch
          %799 = sbr.rel (%p797) target = $region28
        $region27: #{tpu_custom_call.1} parent=11 // pred_region
          %s801 = ssub.s32 48, 48
          %802 = vsyncadd [#allocation12], %s801
          %s804 = sshll.u32 [#allocation13], 4
          %s805 = int_to_ptr.vmem [resolvable:$true] %s804
          %807 = dma.hbm_to_vmem [thread:$0]  %s9, 48, %s805, [#allocation12]
        $region28: #{tpu_custom_call.1} parent=11 // pred_fallthru
          _
        // Predicated region
        $region29: #{tpu_custom_call.1} parent=11 // pred_check
          %p808 = pneg %p219
        $region30: #{tpu_custom_call.1} parent=11 // pred_check_branch
          %810 = sbr.rel (%p808) target = $region32
        $region31: #{tpu_custom_call.1} parent=11 // pred_region
          %s812 = ssub.s32 48, 48
          %813 = vsyncadd [#allocation15], %s812
          %s815 = sshll.u32 [#allocation14], 4
          %s816 = int_to_ptr.vmem [resolvable:$true] %s815
          %818 = dma.hbm_to_vmem [thread:$0]  %s11, 48, %s816, [#allocation15]
        $region32: #{tpu_custom_call.1} parent=11 // pred_fallthru
          _
        // Predicated region
        $region33: #{tpu_custom_call.1} parent=11 // pred_check
          %p819 = pneg %p240
        $region34: #{tpu_custom_call.1} parent=11 // pred_check_branch
          %821 = sbr.rel (%p819) target = $region36
        $region35: #{tpu_custom_call.1} parent=11 // pred_region
          %s823 = ssub.s32 64, 64
          %824 = vsyncadd [#allocation15], %s823
          %s826 = sshll.u32 [#allocation16], 4
          %s827 = int_to_ptr.vmem [resolvable:$true] %s826
          %829 = dma.hbm_to_vmem [thread:$0]  %s13, 64, %s827, [#allocation15]
        $region36: #{tpu_custom_call.1} parent=11 // pred_fallthru
          _
        // Predicated region
        $region37: #{tpu_custom_call.1} parent=11 // pred_check
          %p830 = pneg %p261
        $region38: #{tpu_custom_call.1} parent=11 // pred_check_branch
          %832 = sbr.rel (%p830) target = $region40
        $region39: #{tpu_custom_call.1} parent=11 // pred_region
          %s834 = ssub.s32 64, 64
          %835 = vsyncadd [#allocation18], %s834
          %s837 = sshll.u32 [#allocation17], 4
          %s838 = int_to_ptr.vmem [resolvable:$true] %s837
          %840 = dma.hbm_to_vmem [thread:$0]  %s15, 64, %s838, [#allocation18]
        $region40: #{tpu_custom_call.1} parent=11 // pred_fallthru
          _
        // Predicated region
        $region41: #{tpu_custom_call.1} parent=11 // pred_check
          %p841 = pneg %p282
        $region42: #{tpu_custom_call.1} parent=11 // pred_check_branch
          %843 = sbr.rel (%p841) target = $region44
        $region43: #{tpu_custom_call.1} parent=11 // pred_region
          %s845 = ssub.s32 64, 64
          %846 = vsyncadd [#allocation18], %s845
          %s848 = sshll.u32 [#allocation19], 4
          %s849 = int_to_ptr.vmem [resolvable:$true] %s848
          %851 = dma.hbm_to_vmem [thread:$0]  %s17, 64, %s849, [#allocation18]
        $region44: #{tpu_custom_call.1} parent=11 // pred_fallthru
          _
        // Predicated region
        $region45: #{tpu_custom_call.1} parent=11 // pred_check
          %p852 = pneg %p303
        $region46: #{tpu_custom_call.1} parent=11 // pred_check_branch
          %854 = sbr.rel (%p852) target = $region48
        $region47: #{tpu_custom_call.1} parent=11 // pred_region
          %s856 = ssub.s32 64, 64
          %857 = vsyncadd [#allocation21], %s856
          %s859 = sshll.u32 [#allocation20], 4
          %s860 = int_to_ptr.vmem [resolvable:$true] %s859
          %862 = dma.hbm_to_vmem [thread:$0]  %s19, 64, %s860, [#allocation21]
        $region48: #{tpu_custom_call.1} parent=11 // pred_fallthru
          _
        // Predicated region
        $region49: #{tpu_custom_call.1} parent=11 // pred_check
          %p863 = pneg %p324
        $region50: #{tpu_custom_call.1} parent=11 // pred_check_branch
          %865 = sbr.rel (%p863) target = $region52
        $region51: #{tpu_custom_call.1} parent=11 // pred_region
          %s867 = ssub.s32 64, 64
          %868 = vsyncadd [#allocation21], %s867
          %s870 = sshll.u32 [#allocation22], 4
          %s871 = int_to_ptr.vmem [resolvable:$true] %s870
          %873 = dma.hbm_to_vmem [thread:$0]  %s21, 64, %s871, [#allocation21]
        $region52: #{tpu_custom_call.1} parent=11 // pred_fallthru
          _
        // Predicated region
        $region53: #{tpu_custom_call.1} parent=11 // pred_check
          %p874 = pneg %p345
        $region54: #{tpu_custom_call.1} parent=11 // pred_check_branch
          %876 = sbr.rel (%p874) target = $region56
        $region55: #{tpu_custom_call.1} parent=11 // pred_region
          %s878 = ssub.s32 64, 64
          %879 = vsyncadd [#allocation24], %s878
          %s881 = sshll.u32 [#allocation23], 4
          %s882 = int_to_ptr.vmem [resolvable:$true] %s881
          %884 = dma.hbm_to_vmem [thread:$0]  %s23, 64, %s882, [#allocation24]
        $region56: #{tpu_custom_call.1} parent=11 // pred_fallthru
          _
        // Predicated region
        $region57: #{tpu_custom_call.1} parent=11 // pred_check
          %p885 = pneg %p366
        $region58: #{tpu_custom_call.1} parent=11 // pred_check_branch
          %887 = sbr.rel (%p885) target = $region60
        $region59: #{tpu_custom_call.1} parent=11 // pred_region
          %s889 = ssub.s32 64, 64
          %890 = vsyncadd [#allocation24], %s889
          %s892 = sshll.u32 [#allocation25], 4
          %s893 = int_to_ptr.vmem [resolvable:$true] %s892
          %895 = dma.hbm_to_vmem [thread:$0]  %s25, 64, %s893, [#allocation24]
        $region60: #{tpu_custom_call.1} parent=11 // pred_fallthru
          _
        // Predicated region
        $region61: #{tpu_custom_call.1} parent=11 // pred_check
          %p896 = pneg %p387
        $region62: #{tpu_custom_call.1} parent=11 // pred_check_branch
          %898 = sbr.rel (%p896) target = $region64
        $region63: #{tpu_custom_call.1} parent=11 // pred_region
          %s900 = ssub.s32 64, 64
          %901 = vsyncadd [#allocation27], %s900
          %s903 = sshll.u32 [#allocation26], 4
          %s904 = int_to_ptr.vmem [resolvable:$true] %s903
          %906 = dma.hbm_to_vmem [thread:$0]  %s27, 64, %s904, [#allocation27]
        $region64: #{tpu_custom_call.1} parent=11 // pred_fallthru
          _
        // Predicated region
        $region65: #{tpu_custom_call.1} parent=11 // pred_check
          %p907 = pneg %p408
        $region66: #{tpu_custom_call.1} parent=11 // pred_check_branch
          %909 = sbr.rel (%p907) target = $region68
        $region67: #{tpu_custom_call.1} parent=11 // pred_region
          %s911 = ssub.s32 64, 64
          %912 = vsyncadd [#allocation27], %s911
          %s914 = sshll.u32 [#allocation28], 4
          %s915 = int_to_ptr.vmem [resolvable:$true] %s914
          %917 = dma.hbm_to_vmem [thread:$0]  %s29, 64, %s915, [#allocation27]
        $region68: #{tpu_custom_call.1} parent=11 // pred_fallthru
          _
        // Predicated region
        $region69: #{tpu_custom_call.1} parent=11 // pred_check
          %p918 = pneg %p429
        $region70: #{tpu_custom_call.1} parent=11 // pred_check_branch
          %920 = sbr.rel (%p918) target = $region72
        $region71: #{tpu_custom_call.1} parent=11 // pred_region
          %s922 = ssub.s32 64, 64
          %923 = vsyncadd [#allocation30], %s922
          %s925 = sshll.u32 [#allocation29], 4
          %s926 = int_to_ptr.vmem [resolvable:$true] %s925
          %928 = dma.hbm_to_vmem [thread:$0]  %s31, 64, %s926, [#allocation30]
        $region72: #{tpu_custom_call.1} parent=11 // pred_fallthru
          _
        // Predicated region
        $region73: #{tpu_custom_call.1} parent=11 // pred_check
          %p929 = pneg %p450
        $region74: #{tpu_custom_call.1} parent=11 // pred_check_branch
          %931 = sbr.rel (%p929) target = $region76
        $region75: #{tpu_custom_call.1} parent=11 // pred_region
          %s933 = ssub.s32 64, 64
          %934 = vsyncadd [#allocation30], %s933
          %s936 = sshll.u32 [#allocation31], 4
          %s937 = int_to_ptr.vmem [resolvable:$true] %s936
          %939 = dma.hbm_to_vmem [thread:$0]  %s33, 64, %s937, [#allocation30]
        $region76: #{tpu_custom_call.1} parent=11 // pred_fallthru
          _
        // Predicated region
        $region77: #{tpu_custom_call.1} parent=11 // pred_check
          %p940 = pneg %p471
        $region78: #{tpu_custom_call.1} parent=11 // pred_check_branch
          %942 = sbr.rel (%p940) target = $region80
        $region79: #{tpu_custom_call.1} parent=11 // pred_region
          %s944 = ssub.s32 64, 64
          %945 = vsyncadd [#allocation33], %s944
          %s947 = sshll.u32 [#allocation32], 4
          %s948 = int_to_ptr.vmem [resolvable:$true] %s947
          %950 = dma.hbm_to_vmem [thread:$0]  %s35, 64, %s948, [#allocation33]
        $region80: #{tpu_custom_call.1} parent=11 // pred_fallthru
          _
        // Predicated region
        $region81: #{tpu_custom_call.1} parent=11 // pred_check
          %p951 = pneg %p492
        $region82: #{tpu_custom_call.1} parent=11 // pred_check_branch
          %953 = sbr.rel (%p951) target = $region84
        $region83: #{tpu_custom_call.1} parent=11 // pred_region
          %s955 = ssub.s32 64, 64
          %956 = vsyncadd [#allocation33], %s955
          %s958 = sshll.u32 [#allocation34], 4
          %s959 = int_to_ptr.vmem [resolvable:$true] %s958
          %961 = dma.hbm_to_vmem [thread:$0]  %s37, 64, %s959, [#allocation33]
        $region84: #{tpu_custom_call.1} parent=11 // pred_fallthru
          _
        // Predicated region
        $region85: #{tpu_custom_call.1} parent=11 // pred_check
          %p962 = pneg %p513
        $region86: #{tpu_custom_call.1} parent=11 // pred_check_branch
          %964 = sbr.rel (%p962) target = $region88
        $region87: #{tpu_custom_call.1} parent=11 // pred_region
          %s966 = ssub.s32 64, 64
          %967 = vsyncadd [#allocation36], %s966
          %s969 = sshll.u32 [#allocation35], 4
          %s970 = int_to_ptr.vmem [resolvable:$true] %s969
          %972 = dma.hbm_to_vmem [thread:$0]  %s39, 64, %s970, [#allocation36]
        $region88: #{tpu_custom_call.1} parent=11 // pred_fallthru
          _
        // Predicated region
        $region89: #{tpu_custom_call.1} parent=11 // pred_check
          %p973 = pneg %p534
        $region90: #{tpu_custom_call.1} parent=11 // pred_check_branch
          %975 = sbr.rel (%p973) target = $region92
        $region91: #{tpu_custom_call.1} parent=11 // pred_region
          %s977 = ssub.s32 64, 64
          %978 = vsyncadd [#allocation36], %s977
          %s980 = sshll.u32 [#allocation37], 4
          %s981 = int_to_ptr.vmem [resolvable:$true] %s980
          %983 = dma.hbm_to_vmem [thread:$0]  %s41, 64, %s981, [#allocation36]
        $region92: #{tpu_custom_call.1} parent=11 // pred_fallthru
          _
        // Predicated region
        $region93: #{tpu_custom_call.1} parent=11 // pred_check
          %p984 = pneg %p555
        $region94: #{tpu_custom_call.1} parent=11 // pred_check_branch
          %986 = sbr.rel (%p984) target = $region96
        $region95: #{tpu_custom_call.1} parent=11 // pred_region
          %s988 = ssub.s32 64, 64
          %989 = vsyncadd [#allocation39], %s988
          %s991 = sshll.u32 [#allocation38], 4
          %s992 = int_to_ptr.vmem [resolvable:$true] %s991
          %994 = dma.hbm_to_vmem [thread:$0]  %s43, 64, %s992, [#allocation39]
        $region96: #{tpu_custom_call.1} parent=11 // pred_fallthru
          _
        // Predicated region
        $region97: #{tpu_custom_call.1} parent=11 // pred_check
          %p995 = pneg %p576
        $region98: #{tpu_custom_call.1} parent=11 // pred_check_branch
          %997 = sbr.rel (%p995) target = $region100
        $region99: #{tpu_custom_call.1} parent=11 // pred_region
          %s999 = ssub.s32 256, 256
          %1000 = vsyncadd [#allocation39], %s999
          %s1001 = sshll.u32 [#allocation40], 4
          %s1002 = int_to_ptr.vmem [resolvable:$true] %s1001
          %1007 = dma.hbm_to_vmem [thread:$0]  %s45, 256, %s1002, [#allocation39], 128, 128, 8
        $region100: #{tpu_custom_call.1} parent=11 // pred_fallthru
          _
        // Predicated region
        $region101: #{tpu_custom_call.1} parent=11 // pred_check
          %p1008 = pneg %p597
        $region102: #{tpu_custom_call.1} parent=11 // pred_check_branch
          %1010 = sbr.rel (%p1008) target = $region104
        $region103: #{tpu_custom_call.1} parent=11 // pred_region
          %s1012 = ssub.s32 256, 256
          %1013 = vsyncadd [#allocation42], %s1012
          %s1014 = sshll.u32 [#allocation41], 4
          %s1015 = int_to_ptr.vmem [resolvable:$true] %s1014
          %1020 = dma.hbm_to_vmem [thread:$0]  %s47, 256, %s1015, [#allocation42], 128, 128, 8
        $region104: #{tpu_custom_call.1} parent=11 // pred_fallthru
          _
        // Predicated region
        $region105: #{tpu_custom_call.1} parent=11 // pred_check
          %p1021 = pneg %p618
        $region106: #{tpu_custom_call.1} parent=11 // pred_check_branch
          %1023 = sbr.rel (%p1021) target = $region108
        $region107: #{tpu_custom_call.1} parent=11 // pred_region
          %s1025 = ssub.s32 256, 256
          %1026 = vsyncadd [#allocation42], %s1025
          %s1027 = sshll.u32 [#allocation43], 4
          %s1028 = int_to_ptr.vmem [resolvable:$true] %s1027
          %1033 = dma.hbm_to_vmem [thread:$0]  %s49, 256, %s1028, [#allocation42], 128, 128, 8
        $region108: #{tpu_custom_call.1} parent=11 // pred_fallthru
          _
        // Predicated region
        $region109: #{tpu_custom_call.1} parent=11 // pred_check
          %p1034 = pneg %p639
        $region110: #{tpu_custom_call.1} parent=11 // pred_check_branch
          %1036 = sbr.rel (%p1034) target = $region112
        $region111: #{tpu_custom_call.1} parent=11 // pred_region
          %s1038 = ssub.s32 256, 256
          %1039 = vsyncadd [#allocation45], %s1038
          %s1040 = sshll.u32 [#allocation44], 4
          %s1041 = int_to_ptr.vmem [resolvable:$true] %s1040
          %1046 = dma.hbm_to_vmem [thread:$0]  %s51, 256, %s1041, [#allocation45], 128, 128, 8
        $region112: #{tpu_custom_call.1} parent=11 // pred_fallthru
          _
        // Predicated region
        $region113: #{tpu_custom_call.1} parent=11 // pred_check
          %p1047 = pneg %p660
        $region114: #{tpu_custom_call.1} parent=11 // pred_check_branch
          %1049 = sbr.rel (%p1047) target = $region116
        $region115: #{tpu_custom_call.1} parent=11 // pred_region
          %s1051 = ssub.s32 256, 256
          %1052 = vsyncadd [#allocation45], %s1051
          %s1053 = sshll.u32 [#allocation46], 4
          %s1054 = int_to_ptr.vmem [resolvable:$true] %s1053
          %1059 = dma.hbm_to_vmem [thread:$0]  %s53, 256, %s1054, [#allocation45], 128, 128, 8
        $region116: #{tpu_custom_call.1} parent=11 // pred_fallthru
          _
        // Predicated region
        $region117: #{tpu_custom_call.1} parent=11 // pred_check
          %p1060 = pneg %p681
        $region118: #{tpu_custom_call.1} parent=11 // pred_check_branch
          %1062 = sbr.rel (%p1060) target = $region120
        $region119: #{tpu_custom_call.1} parent=11 // pred_region
          %s1064 = ssub.s32 256, 256
          %1065 = vsyncadd [#allocation48], %s1064
          %s1066 = sshll.u32 [#allocation47], 4
          %s1067 = int_to_ptr.vmem [resolvable:$true] %s1066
          %1072 = dma.hbm_to_vmem [thread:$0]  %s55, 256, %s1067, [#allocation48], 128, 128, 8
        $region120: #{tpu_custom_call.1} parent=11 // pred_fallthru
          _
        // Predicated region
        $region121: #{tpu_custom_call.1} parent=11 // pred_check
          %p1073 = pneg %p702
        $region122: #{tpu_custom_call.1} parent=11 // pred_check_branch
          %1075 = sbr.rel (%p1073) target = $region124
        $region123: #{tpu_custom_call.1} parent=11 // pred_region
          %s1077 = ssub.s32 128, 128
          %1078 = vsyncadd [#allocation48], %s1077
          %s1080 = sshll.u32 [#allocation49], 4
          %s1081 = int_to_ptr.vmem [resolvable:$true] %s1080
          %1083 = dma.hbm_to_vmem [thread:$0]  %s57, 128, %s1081, [#allocation48]
        $region124: #{tpu_custom_call.1} parent=11 // pred_fallthru
          _
        // Predicated region
        $region125: #{tpu_custom_call.1} parent=11 // pred_check
          %p1084 = pneg %p723
        $region126: #{tpu_custom_call.1} parent=11 // pred_check_branch
          %1086 = sbr.rel (%p1084) target = $region128
        $region127: #{tpu_custom_call.1} parent=11 // pred_region
          %s1088 = ssub.s32 128, 128
          %1089 = vsyncadd [#allocation51], %s1088
          %s1091 = sshll.u32 [#allocation50], 4
          %s1092 = int_to_ptr.vmem [resolvable:$true] %s1091
          %1094 = dma.hbm_to_vmem [thread:$0]  %s59, 128, %s1092, [#allocation51]
        $region128: #{tpu_custom_call.1} parent=11 // pred_fallthru
          _
      $region12: #{tpu_custom_call.1} parent=5 // pred_fallthru
        _
      %p1095 = scmp.lt.s32.totalorder %s88, 2
      // Predicated region
      $region129: #{tpu_custom_call.1} parent=5 // pred_check
        %p1096 = pneg %p1095
      $region130: #{tpu_custom_call.1} parent=5 // pred_check_branch
        %1098 = sbr.rel (%p1096) target = $region132
      $region131: #{tpu_custom_call.1} parent=5 // pred_region
        // Predicated region
        $region133: #{tpu_custom_call.1} parent=131 // pred_check
          %p1099 = pneg %p108
        $region134: #{tpu_custom_call.1} parent=131 // pred_check_branch
          %1101 = sbr.rel (%p1099) target = $region136
        $region135: #{tpu_custom_call.1} parent=131 // pred_region
          %s1102 = sand.u32 %s98, 1
          %s1103 = scalar_lea.sflag [#allocation6], %s1102
          %s1104 = sand.u32 %s98, 1
          %s1105 = smul.addr %s1104, 48
          %s1106 = scalar_lea.vmem [#allocation5], %s1105
          %s1108 = ssub.s32 768, 768
          %1109 = vsyncadd %s1103, %s1108
          %s1110 = smul.addr %s88, 6
          %s1111 = smul.addr %s1110, 128
          %s1112 = scalar_lea.hbm %s1, %s1111
          %s1113 = sshll.u32 %s1106, 4
          %s1114 = int_to_ptr.vmem [resolvable:$true] %s1113
          %1119 = dma.hbm_to_vmem [thread:$0]  %s1112, 768, %s1114, %s1103, 384, 384, 24
        $region136: #{tpu_custom_call.1} parent=131 // pred_fallthru
          _
      $region132: #{tpu_custom_call.1} parent=5 // pred_fallthru
        _
      %p1120 = scmp.le.s32.totalorder 1, %s88
      %p1121 = scmp.lt.s32.totalorder %s88, 3
      %p1122 = pnand %p1120, %p1121
      %p1123 = pneg %p1122
      // Predicated region
      $region137: #{tpu_custom_call.1} parent=5 // pred_check
        _
      $region138: #{tpu_custom_call.1} parent=5 // pred_check_branch
        %1125 = sbr.rel (%p1122) target = $region140
      $region139: #{tpu_custom_call.1} parent=5 // pred_region
        %s1126 = ssub.s32 %s88, 1
        %s1127 = sand.u32 %s101, 1
        %s1128 = scalar_lea.sflag [#allocation6], %s1127
        %s1129 = sand.u32 %s101, 1
        %s1130 = smul.addr %s1129, 48
        %s1131 = scalar_lea.vmem [#allocation5], %s1130
        // Predicated region
        $region141: #{tpu_custom_call.1} parent=139 // pred_check
          %p1132 = pneg %p114
        $region142: #{tpu_custom_call.1} parent=139 // pred_check_branch
          %1134 = sbr.rel (%p1132) target = $region144
        $region143: #{tpu_custom_call.1} parent=139 // pred_region
          %1135 = dma.done %s1128, 768
        $region144: #{tpu_custom_call.1} parent=139 // pred_fallthru
          _
        // Predicated region
        $region145: #{tpu_custom_call.1} parent=139 // pred_check
          %p1136 = pneg %p135
        $region146: #{tpu_custom_call.1} parent=139 // pred_check_branch
          %1138 = sbr.rel (%p1136) target = $region148
        $region147: #{tpu_custom_call.1} parent=139 // pred_region
          %1139 = dma.done [#allocation9], 192
        $region148: #{tpu_custom_call.1} parent=139 // pred_fallthru
          _
        // Predicated region
        $region149: #{tpu_custom_call.1} parent=139 // pred_check
          %p1140 = pneg %p156
        $region150: #{tpu_custom_call.1} parent=139 // pred_check_branch
          %1142 = sbr.rel (%p1140) target = $region152
        $region151: #{tpu_custom_call.1} parent=139 // pred_region
          %1143 = dma.done [#allocation9], 192
        $region152: #{tpu_custom_call.1} parent=139 // pred_fallthru
          _
        // Predicated region
        $region153: #{tpu_custom_call.1} parent=139 // pred_check
          %p1144 = pneg %p177
        $region154: #{tpu_custom_call.1} parent=139 // pred_check_branch
          %1146 = sbr.rel (%p1144) target = $region156
        $region155: #{tpu_custom_call.1} parent=139 // pred_region
          %1147 = dma.done [#allocation12], 192
        $region156: #{tpu_custom_call.1} parent=139 // pred_fallthru
          _
        // Predicated region
        $region157: #{tpu_custom_call.1} parent=139 // pred_check
          %p1148 = pneg %p198
        $region158: #{tpu_custom_call.1} parent=139 // pred_check_branch
          %1150 = sbr.rel (%p1148) target = $region160
        $region159: #{tpu_custom_call.1} parent=139 // pred_region
          %1151 = dma.done [#allocation12], 48
        $region160: #{tpu_custom_call.1} parent=139 // pred_fallthru
          _
        // Predicated region
        $region161: #{tpu_custom_call.1} parent=139 // pred_check
          %p1152 = pneg %p219
        $region162: #{tpu_custom_call.1} parent=139 // pred_check_branch
          %1154 = sbr.rel (%p1152) target = $region164
        $region163: #{tpu_custom_call.1} parent=139 // pred_region
          %1155 = dma.done [#allocation15], 48
        $region164: #{tpu_custom_call.1} parent=139 // pred_fallthru
          _
        // Predicated region
        $region165: #{tpu_custom_call.1} parent=139 // pred_check
          %p1156 = pneg %p240
        $region166: #{tpu_custom_call.1} parent=139 // pred_check_branch
          %1158 = sbr.rel (%p1156) target = $region168
        $region167: #{tpu_custom_call.1} parent=139 // pred_region
          %1159 = dma.done [#allocation15], 64
        $region168: #{tpu_custom_call.1} parent=139 // pred_fallthru
          _
        // Predicated region
        $region169: #{tpu_custom_call.1} parent=139 // pred_check
          %p1160 = pneg %p261
        $region170: #{tpu_custom_call.1} parent=139 // pred_check_branch
          %1162 = sbr.rel (%p1160) target = $region172
        $region171: #{tpu_custom_call.1} parent=139 // pred_region
          %1163 = dma.done [#allocation18], 64
        $region172: #{tpu_custom_call.1} parent=139 // pred_fallthru
          _
        // Predicated region
        $region173: #{tpu_custom_call.1} parent=139 // pred_check
          %p1164 = pneg %p282
        $region174: #{tpu_custom_call.1} parent=139 // pred_check_branch
          %1166 = sbr.rel (%p1164) target = $region176
        $region175: #{tpu_custom_call.1} parent=139 // pred_region
          %1167 = dma.done [#allocation18], 64
        $region176: #{tpu_custom_call.1} parent=139 // pred_fallthru
          _
        // Predicated region
        $region177: #{tpu_custom_call.1} parent=139 // pred_check
          %p1168 = pneg %p303
        $region178: #{tpu_custom_call.1} parent=139 // pred_check_branch
          %1170 = sbr.rel (%p1168) target = $region180
        $region179: #{tpu_custom_call.1} parent=139 // pred_region
          %1171 = dma.done [#allocation21], 64
        $region180: #{tpu_custom_call.1} parent=139 // pred_fallthru
          _
        // Predicated region
        $region181: #{tpu_custom_call.1} parent=139 // pred_check
          %p1172 = pneg %p324
        $region182: #{tpu_custom_call.1} parent=139 // pred_check_branch
          %1174 = sbr.rel (%p1172) target = $region184
        $region183: #{tpu_custom_call.1} parent=139 // pred_region
          %1175 = dma.done [#allocation21], 64
        $region184: #{tpu_custom_call.1} parent=139 // pred_fallthru
          _
        // Predicated region
        $region185: #{tpu_custom_call.1} parent=139 // pred_check
          %p1176 = pneg %p345
        $region186: #{tpu_custom_call.1} parent=139 // pred_check_branch
          %1178 = sbr.rel (%p1176) target = $region188
        $region187: #{tpu_custom_call.1} parent=139 // pred_region
          %1179 = dma.done [#allocation24], 64
        $region188: #{tpu_custom_call.1} parent=139 // pred_fallthru
          _
        // Predicated region
        $region189: #{tpu_custom_call.1} parent=139 // pred_check
          %p1180 = pneg %p366
        $region190: #{tpu_custom_call.1} parent=139 // pred_check_branch
          %1182 = sbr.rel (%p1180) target = $region192
        $region191: #{tpu_custom_call.1} parent=139 // pred_region
          %1183 = dma.done [#allocation24], 64
        $region192: #{tpu_custom_call.1} parent=139 // pred_fallthru
          _
        // Predicated region
        $region193: #{tpu_custom_call.1} parent=139 // pred_check
          %p1184 = pneg %p387
        $region194: #{tpu_custom_call.1} parent=139 // pred_check_branch
          %1186 = sbr.rel (%p1184) target = $region196
        $region195: #{tpu_custom_call.1} parent=139 // pred_region
          %1187 = dma.done [#allocation27], 64
        $region196: #{tpu_custom_call.1} parent=139 // pred_fallthru
          _
        // Predicated region
        $region197: #{tpu_custom_call.1} parent=139 // pred_check
          %p1188 = pneg %p408
        $region198: #{tpu_custom_call.1} parent=139 // pred_check_branch
          %1190 = sbr.rel (%p1188) target = $region200
        $region199: #{tpu_custom_call.1} parent=139 // pred_region
          %1191 = dma.done [#allocation27], 64
        $region200: #{tpu_custom_call.1} parent=139 // pred_fallthru
          _
        // Predicated region
        $region201: #{tpu_custom_call.1} parent=139 // pred_check
          %p1192 = pneg %p429
        $region202: #{tpu_custom_call.1} parent=139 // pred_check_branch
          %1194 = sbr.rel (%p1192) target = $region204
        $region203: #{tpu_custom_call.1} parent=139 // pred_region
          %1195 = dma.done [#allocation30], 64
        $region204: #{tpu_custom_call.1} parent=139 // pred_fallthru
          _
        // Predicated region
        $region205: #{tpu_custom_call.1} parent=139 // pred_check
          %p1196 = pneg %p450
        $region206: #{tpu_custom_call.1} parent=139 // pred_check_branch
          %1198 = sbr.rel (%p1196) target = $region208
        $region207: #{tpu_custom_call.1} parent=139 // pred_region
          %1199 = dma.done [#allocation30], 64
        $region208: #{tpu_custom_call.1} parent=139 // pred_fallthru
          _
        // Predicated region
        $region209: #{tpu_custom_call.1} parent=139 // pred_check
          %p1200 = pneg %p471
        $region210: #{tpu_custom_call.1} parent=139 // pred_check_branch
          %1202 = sbr.rel (%p1200) target = $region212
        $region211: #{tpu_custom_call.1} parent=139 // pred_region
          %1203 = dma.done [#allocation33], 64
        $region212: #{tpu_custom_call.1} parent=139 // pred_fallthru
          _
        // Predicated region
        $region213: #{tpu_custom_call.1} parent=139 // pred_check
          %p1204 = pneg %p492
        $region214: #{tpu_custom_call.1} parent=139 // pred_check_branch
          %1206 = sbr.rel (%p1204) target = $region216
        $region215: #{tpu_custom_call.1} parent=139 // pred_region
          %1207 = dma.done [#allocation33], 64
        $region216: #{tpu_custom_call.1} parent=139 // pred_fallthru
          _
        // Predicated region
        $region217: #{tpu_custom_call.1} parent=139 // pred_check
          %p1208 = pneg %p513
        $region218: #{tpu_custom_call.1} parent=139 // pred_check_branch
          %1210 = sbr.rel (%p1208) target = $region220
        $region219: #{tpu_custom_call.1} parent=139 // pred_region
          %1211 = dma.done [#allocation36], 64
        $region220: #{tpu_custom_call.1} parent=139 // pred_fallthru
          _
        // Predicated region
        $region221: #{tpu_custom_call.1} parent=139 // pred_check
          %p1212 = pneg %p534
        $region222: #{tpu_custom_call.1} parent=139 // pred_check_branch
          %1214 = sbr.rel (%p1212) target = $region224
        $region223: #{tpu_custom_call.1} parent=139 // pred_region
          %1215 = dma.done [#allocation36], 64
        $region224: #{tpu_custom_call.1} parent=139 // pred_fallthru
          _
        // Predicated region
        $region225: #{tpu_custom_call.1} parent=139 // pred_check
          %p1216 = pneg %p555
        $region226: #{tpu_custom_call.1} parent=139 // pred_check_branch
          %1218 = sbr.rel (%p1216) target = $region228
        $region227: #{tpu_custom_call.1} parent=139 // pred_region
          %1219 = dma.done [#allocation39], 64
        $region228: #{tpu_custom_call.1} parent=139 // pred_fallthru
          _
        // Predicated region
        $region229: #{tpu_custom_call.1} parent=139 // pred_check
          %p1220 = pneg %p576
        $region230: #{tpu_custom_call.1} parent=139 // pred_check_branch
          %1222 = sbr.rel (%p1220) target = $region232
        $region231: #{tpu_custom_call.1} parent=139 // pred_region
          %1223 = dma.done [#allocation39], 256
        $region232: #{tpu_custom_call.1} parent=139 // pred_fallthru
          _
        // Predicated region
        $region233: #{tpu_custom_call.1} parent=139 // pred_check
          %p1224 = pneg %p597
        $region234: #{tpu_custom_call.1} parent=139 // pred_check_branch
          %1226 = sbr.rel (%p1224) target = $region236
        $region235: #{tpu_custom_call.1} parent=139 // pred_region
          %1227 = dma.done [#allocation42], 256
        $region236: #{tpu_custom_call.1} parent=139 // pred_fallthru
          _
        // Predicated region
        $region237: #{tpu_custom_call.1} parent=139 // pred_check
          %p1228 = pneg %p618
        $region238: #{tpu_custom_call.1} parent=139 // pred_check_branch
          %1230 = sbr.rel (%p1228) target = $region240
        $region239: #{tpu_custom_call.1} parent=139 // pred_region
          %1231 = dma.done [#allocation42], 256
        $region240: #{tpu_custom_call.1} parent=139 // pred_fallthru
          _
        // Predicated region
        $region241: #{tpu_custom_call.1} parent=139 // pred_check
          %p1232 = pneg %p639
        $region242: #{tpu_custom_call.1} parent=139 // pred_check_branch
          %1234 = sbr.rel (%p1232) target = $region244
        $region243: #{tpu_custom_call.1} parent=139 // pred_region
          %1235 = dma.done [#allocation45], 256
        $region244: #{tpu_custom_call.1} parent=139 // pred_fallthru
          _
        // Predicated region
        $region245: #{tpu_custom_call.1} parent=139 // pred_check
          %p1236 = pneg %p660
        $region246: #{tpu_custom_call.1} parent=139 // pred_check_branch
          %1238 = sbr.rel (%p1236) target = $region248
        $region247: #{tpu_custom_call.1} parent=139 // pred_region
          %1239 = dma.done [#allocation45], 256
        $region248: #{tpu_custom_call.1} parent=139 // pred_fallthru
          _
        // Predicated region
        $region249: #{tpu_custom_call.1} parent=139 // pred_check
          %p1240 = pneg %p681
        $region250: #{tpu_custom_call.1} parent=139 // pred_check_branch
          %1242 = sbr.rel (%p1240) target = $region252
        $region251: #{tpu_custom_call.1} parent=139 // pred_region
          %1243 = dma.done [#allocation48], 256
        $region252: #{tpu_custom_call.1} parent=139 // pred_fallthru
          _
        // Predicated region
        $region253: #{tpu_custom_call.1} parent=139 // pred_check
          %p1244 = pneg %p702
        $region254: #{tpu_custom_call.1} parent=139 // pred_check_branch
          %1246 = sbr.rel (%p1244) target = $region256
        $region255: #{tpu_custom_call.1} parent=139 // pred_region
          %1247 = dma.done [#allocation48], 128
        $region256: #{tpu_custom_call.1} parent=139 // pred_fallthru
          _
        // Predicated region
        $region257: #{tpu_custom_call.1} parent=139 // pred_check
          %p1248 = pneg %p723
        $region258: #{tpu_custom_call.1} parent=139 // pred_check_branch
          %1250 = sbr.rel (%p1248) target = $region260
        $region259: #{tpu_custom_call.1} parent=139 // pred_region
          %1251 = dma.done [#allocation51], 128
        $region260: #{tpu_custom_call.1} parent=139 // pred_fallthru
          _
        %s1252 = sand.u32 %s101, 1
        %s1253 = scalar_lea.sflag [#allocation6], %s1252
        %s1254 = sand.u32 %s101, 1
        %s1255 = smul.addr %s1254, 48
        %s1256 = scalar_lea.vmem [#allocation5], %s1255
        %p1257 = pneg %p114
        %p1258 = pneg %p111
        %p1259 = pneg %p135
        %p1260 = pneg %p132
        %p1261 = pneg %p156
        %p1262 = pneg %p153
        %p1263 = pneg %p177
        %p1264 = pneg %p174
        %p1265 = pneg %p198
        %p1266 = pneg %p195
        %p1267 = pneg %p219
        %p1268 = pneg %p216
        %p1269 = pneg %p240
        %p1270 = pneg %p237
        %p1271 = pneg %p261
        %p1272 = pneg %p258
        %p1273 = pneg %p282
        %p1274 = pneg %p279
        %p1275 = pneg %p303
        %p1276 = pneg %p300
        %p1277 = pneg %p324
        %p1278 = pneg %p321
        %p1279 = pneg %p345
        %p1280 = pneg %p342
        %p1281 = pneg %p366
        %p1282 = pneg %p363
        %p1283 = pneg %p387
        %p1284 = pneg %p384
        %p1285 = pneg %p408
        %p1286 = pneg %p405
        %p1287 = pneg %p429
        %p1288 = pneg %p426
        %p1289 = pneg %p450
        %p1290 = pneg %p447
        %p1291 = pneg %p471
        %p1292 = pneg %p468
        %p1293 = pneg %p492
        %p1294 = pneg %p489
        %p1295 = pneg %p513
        %p1296 = pneg %p510
        %p1297 = pneg %p534
        %p1298 = pneg %p531
        %p1299 = pneg %p555
        %p1300 = pneg %p552
        %p1301 = pneg %p576
        %p1302 = pneg %p573
        %p1303 = pneg %p597
        %p1304 = pneg %p594
        %p1305 = pneg %p618
        %p1306 = pneg %p615
        %p1307 = pneg %p639
        %p1308 = pneg %p636
        %p1309 = pneg %p660
        %p1310 = pneg %p657
        %p1311 = pneg %p681
        %p1312 = pneg %p678
        %p1313 = pneg %p702
        %p1314 = pneg %p699
        %p1315 = pneg %p723
        %p1316 = pneg %p720
        %p1317 = pneg %p749
        %p1318 = pneg %p746
        %s1319 = sand.u32 %s736, 1
        %s1320 = scalar_lea.sflag [#allocation7], %s1319
        %s1321 = sand.u32 %s736, 1
        %s1322 = smul.addr %s1321, 24
        %s1323 = scalar_lea.vmem [#allocation52], %s1322
        %v1324 = vld [vmem:[#allocation13] sm:$0x7]
        %v1325 = vld [vmem:[#allocation14] sm:$0x7]
        %p1326 = scmp.eq.s32.totalorder %s93, 0
        // Predicated region
        $region261: #{tpu_custom_call.1} parent=139 // pred_check
          %p1327 = pneg %p1326
        $region262: #{tpu_custom_call.1} parent=139 // pred_check_branch
          %1329 = sbr.rel (%p1327) target = $region264
        $region263: #{tpu_custom_call.1} parent=139 // pred_region
          %v1330 = vld [vmem:[#allocation8] sm:$0xff]
          %v1331 = vld [vmem:[#allocation8 + $0x8] sm:$0xf]
          %v1332 = vld [vmem:[#allocation16] sm:$0xf]
          %v1333 = vld [vmem:[#allocation17] sm:$0xf]
          %v1336 = vcombine.high %v1330, %v1330
          %1337 = vrot.lane.b32.xlu0 %v1330, 25
          %v1338 = vpop.permute.xlu0 %1337
          %1339 = vrot.lane.b32.xlu0 %v1336, 25
          %v1340 = vpop.permute.xlu0 %1339
          %1341 = vrot.lane.b32.xlu0 %v1331, 25
          %v1342 = vpop.permute.xlu0 %1341
          %vm1343 = vcmask 203776
          %v1344 = vsel %vm1343, %v1338, %v1340
          %v1345 = vsel %vm1343, %v1340, %v1342
          %v1349 = vsel %vm1343, 0.0, %v1338
          %v1351 = vlaneseq
          %v1352 = vshrl.u32 %v1351, 7
          %v1353 = vsub.s32 0, %v1352
          %v1354 = vrot.slane %v1324, %v1353
          %v1355 = vlaneseq
          %v1356 = vshrl.u32 %v1355, 7
          %v1357 = vsub.s32 1, %v1356
          %v1358 = vrot.slane %v1324, %v1357
          %v1359 = vlaneseq
          %v1360 = vshrl.u32 %v1359, 7
          %v1361 = vsub.s32 2, %v1360
          %v1362 = vrot.slane %v1324, %v1361
          %v1366 = vmul.f32 %v1349, %v1354
          %v1367 = vmul.f32 %v1344, %v1358
          %v1368 = vmul.f32 %v1345, %v1362
          %1370 = vset.pattern.permute.xlu0 0
          %1371 = vperm.xlu0 %1370, %v1332
          %v1372 = vpop.permute.xlu0 %1371
          %v1374 = vmul.f32 %v1366, %v1372
          %v1375 = vmul.f32 %v1367, %v1372
          %v1376 = vmul.f32 %v1368, %v1372
          %v1377 = vadd.f32 %v1374, 0.0
          %v1378 = vadd.f32 %v1375, 0.0
          %v1379 = vadd.f32 %v1376, 0.0
          %1380 = vrot.lane.b32.xlu0 %v1330, 24
          %v1381 = vpop.permute.xlu0 %1380
          %1382 = vrot.lane.b32.xlu0 %v1336, 24
          %v1383 = vpop.permute.xlu0 %1382
          %1384 = vrot.lane.b32.xlu0 %v1331, 24
          %v1385 = vpop.permute.xlu0 %1384
          %vm1386 = vcmask 195584
          %v1387 = vsel %vm1386, %v1381, %v1383
          %v1388 = vsel %vm1386, %v1383, %v1385
          %v1392 = vsel %vm1386, 0.0, %v1381
          %1393 = vset.pattern.permute.xlu0 1
          %1394 = vperm.xlu0 %1393, %v1332
          %v1395 = vpop.permute.xlu0 %1394
          %v1397 = vmul.f32 %v1392, %v1395
          %v1398 = vmul.f32 %v1387, %v1395
          %v1399 = vmul.f32 %v1388, %v1395
          %v1400 = vadd.f32 %v1377, %v1397
          %v1401 = vadd.f32 %v1378, %v1398
          %v1402 = vadd.f32 %v1379, %v1399
          %1403 = vrot.lane.b32.xlu0 %v1330, 23
          %v1404 = vpop.permute.xlu0 %1403
          %1405 = vrot.lane.b32.xlu0 %v1336, 23
          %v1406 = vpop.permute.xlu0 %1405
          %1407 = vrot.lane.b32.xlu0 %v1331, 23
          %v1408 = vpop.permute.xlu0 %1407
          %vm1409 = vcmask 187392
          %v1410 = vsel %vm1409, %v1404, %v1406
          %v1411 = vsel %vm1409, %v1406, %v1408
          %v1415 = vsel %vm1409, 0.0, %v1404
          %v1417 = vlaneseq
          %v1418 = vshrl.u32 %v1417, 7
          %v1419 = vsub.s32 0, %v1418
          %v1420 = vrot.slane %v1325, %v1419
          %v1421 = vlaneseq
          %v1422 = vshrl.u32 %v1421, 7
          %v1423 = vsub.s32 1, %v1422
          %v1424 = vrot.slane %v1325, %v1423
          %v1425 = vlaneseq
          %v1426 = vshrl.u32 %v1425, 7
          %v1427 = vsub.s32 2, %v1426
          %v1428 = vrot.slane %v1325, %v1427
          %v1432 = vmul.f32 %v1415, %v1420
          %v1433 = vmul.f32 %v1410, %v1424
          %v1434 = vmul.f32 %v1411, %v1428
          %1435 = vset.pattern.permute.xlu0 2
          %1436 = vperm.xlu0 %1435, %v1332
          %v1437 = vpop.permute.xlu0 %1436
          %v1439 = vmul.f32 %v1432, %v1437
          %v1440 = vmul.f32 %v1433, %v1437
          %v1441 = vmul.f32 %v1434, %v1437
          %v1442 = vadd.f32 %v1400, %v1439
          %v1443 = vadd.f32 %v1401, %v1440
          %v1444 = vadd.f32 %v1402, %v1441
          %1445 = vrot.lane.b32.xlu0 %v1330, 1
          %v1446 = vpop.permute.xlu0 %1445
          %1447 = vrot.lane.b32.xlu0 %v1336, 1
          %v1448 = vpop.permute.xlu0 %1447
          %1449 = vrot.lane.b32.xlu0 %v1331, 1
          %v1450 = vpop.permute.xlu0 %1449
          %vm1451 = vcmask 7168
          %v1452 = vsel %vm1451, %v1446, %v1448
          %v1453 = vsel %vm1451, %v1448, %v1450
          %v1457 = vsel %vm1451, 0.0, %v1446
          %v1458 = vmul.f32 %v1457, %v1354
          %v1459 = vmul.f32 %v1452, %v1358
          %v1460 = vmul.f32 %v1453, %v1362
          %1461 = vset.pattern.permute.xlu0 3
          %1462 = vperm.xlu0 %1461, %v1332
          %v1463 = vpop.permute.xlu0 %1462
          %v1465 = vmul.f32 %v1458, %v1463
          %v1466 = vmul.f32 %v1459, %v1463
          %v1467 = vmul.f32 %v1460, %v1463
          %v1468 = vadd.f32 %v1442, %v1465
          %v1469 = vadd.f32 %v1443, %v1466
          %v1470 = vadd.f32 %v1444, %v1467
          %1471 = vset.pattern.permute.xlu0 4
          %1472 = vperm.xlu0 %1471, %v1332
          %v1473 = vpop.permute.xlu0 %1472
          %v1475 = vunpack.c.l.s4 839922192
          %v1476 = vunpack.c.0.s8 %v1475
          %v1477 = vlaneseq
          %v1478 = vshrl.u32 %v1477, 7
          %v1479 = vsub.s32 %v1476, %v1478
          %v1480 = vrot.slane %v1473, %v1479
          %v1482 = vmul.f32 %v1330, %v1480
          %v1483 = vmul.f32 %v1331, %v1480
          %v1485 = vcombine.high %v1482, %v1482
          %v1487 = vadd.f32 %v1468, %v1482
          %v1488 = vadd.f32 %v1469, %v1485
          %v1489 = vadd.f32 %v1470, %v1483
          %1490 = vrot.lane.b32.xlu0 %v1330, 127
          %v1491 = vpop.permute.xlu0 %1490
          %1492 = vrot.lane.b32.xlu0 %v1336, 127
          %v1493 = vpop.permute.xlu0 %1492
          %1494 = vrot.lane.b32.xlu0 %v1331, 127
          %v1495 = vpop.permute.xlu0 %1494
          %vm1496 = vcmask 1039360
          %v1497 = vsel %vm1496, %v1491, %v1493
          %v1498 = vsel %vm1496, %v1493, %v1495
          %v1502 = vsel %vm1496, %v1495, 0.0
          %v1503 = vmul.f32 %v1497, %v1420
          %v1504 = vmul.f32 %v1498, %v1424
          %v1505 = vmul.f32 %v1502, %v1428
          %1506 = vset.pattern.permute.xlu0 5
          %1507 = vperm.xlu0 %1506, %v1332
          %v1508 = vpop.permute.xlu0 %1507
          %v1510 = vmul.f32 %v1503, %v1508
          %v1511 = vmul.f32 %v1504, %v1508
          %v1512 = vmul.f32 %v1505, %v1508
          %v1513 = vadd.f32 %v1487, %v1510
          %v1514 = vadd.f32 %v1488, %v1511
          %v1515 = vadd.f32 %v1489, %v1512
          %1516 = vrot.lane.b32.xlu0 %v1330, 105
          %v1517 = vpop.permute.xlu0 %1516
          %1518 = vrot.lane.b32.xlu0 %v1336, 105
          %v1519 = vpop.permute.xlu0 %1518
          %1520 = vrot.lane.b32.xlu0 %v1331, 105
          %v1521 = vpop.permute.xlu0 %1520
          %vm1522 = vcmask 859136
          %v1523 = vsel %vm1522, %v1517, %v1519
          %v1524 = vsel %vm1522, %v1519, %v1521
          %v1528 = vsel %vm1522, %v1521, 0.0
          %v1529 = vmul.f32 %v1523, %v1354
          %v1530 = vmul.f32 %v1524, %v1358
          %v1531 = vmul.f32 %v1528, %v1362
          %1532 = vset.pattern.permute.xlu0 6
          %1533 = vperm.xlu0 %1532, %v1332
          %v1534 = vpop.permute.xlu0 %1533
          %v1536 = vmul.f32 %v1529, %v1534
          %v1537 = vmul.f32 %v1530, %v1534
          %v1538 = vmul.f32 %v1531, %v1534
          %v1539 = vadd.f32 %v1513, %v1536
          %v1540 = vadd.f32 %v1514, %v1537
          %v1541 = vadd.f32 %v1515, %v1538
          %1542 = vrot.lane.b32.xlu0 %v1330, 104
          %v1543 = vpop.permute.xlu0 %1542
          %1544 = vrot.lane.b32.xlu0 %v1336, 104
          %v1545 = vpop.permute.xlu0 %1544
          %1546 = vrot.lane.b32.xlu0 %v1331, 104
          %v1547 = vpop.permute.xlu0 %1546
          %vm1548 = vcmask 850944
          %v1549 = vsel %vm1548, %v1543, %v1545
          %v1550 = vsel %vm1548, %v1545, %v1547
          %v1554 = vsel %vm1548, %v1547, 0.0
          %1555 = vset.pattern.permute.xlu0 7
          %1556 = vperm.xlu0 %1555, %v1332
          %v1557 = vpop.permute.xlu0 %1556
          %v1559 = vmul.f32 %v1549, %v1557
          %v1560 = vmul.f32 %v1550, %v1557
          %v1561 = vmul.f32 %v1554, %v1557
          %v1562 = vadd.f32 %v1539, %v1559
          %v1563 = vadd.f32 %v1540, %v1560
          %v1564 = vadd.f32 %v1541, %v1561
          %1565 = vrot.lane.b32.xlu0 %v1330, 103
          %v1566 = vpop.permute.xlu0 %1565
          %1567 = vrot.lane.b32.xlu0 %v1336, 103
          %v1568 = vpop.permute.xlu0 %1567
          %1569 = vrot.lane.b32.xlu0 %v1331, 103
          %v1570 = vpop.permute.xlu0 %1569
          %vm1571 = vcmask 842752
          %v1572 = vsel %vm1571, %v1566, %v1568
          %v1573 = vsel %vm1571, %v1568, %v1570
          %v1577 = vsel %vm1571, %v1570, 0.0
          %v1578 = vmul.f32 %v1572, %v1420
          %v1579 = vmul.f32 %v1573, %v1424
          %v1580 = vmul.f32 %v1577, %v1428
          %1581 = vset.pattern.permute.xlu0 8
          %1582 = vperm.xlu0 %1581, %v1332
          %v1583 = vpop.permute.xlu0 %1582
          %v1585 = vmul.f32 %v1578, %v1583
          %v1586 = vmul.f32 %v1579, %v1583
          %v1587 = vmul.f32 %v1580, %v1583
          %v1588 = vadd.f32 %v1562, %v1585
          %v1589 = vadd.f32 %v1563, %v1586
          %v1590 = vadd.f32 %v1564, %v1587
          %1592 = vset.pattern.permute.xlu0 0
          %1593 = vperm.xlu0 %1592, %v1333
          %v1594 = vpop.permute.xlu0 %1593
          %v1596 = vadd.f32 %v1588, %v1594
          %v1597 = vadd.f32 %v1589, %v1594
          %v1598 = vadd.f32 %v1590, %v1594
          %v1599 = vld [vmem:[#allocation19] sm:$0xf]
          %v1600 = vmul.f32 %v1596, 0.5
          %v1601 = vmul.f32 %v1597, 0.5
          %v1602 = vmul.f32 %v1598, 0.5
          %v1603 = vmul.f32 %v1596, 0.70710677
          %v1604 = vmul.f32 %v1597, 0.70710677
          %v1605 = vmul.f32 %v1598, 0.70710677
          %vm1606 = vcmp.ge.f32.partialorder %v1603, 0.0
          %vm1607 = vcmp.ge.f32.partialorder %v1604, 0.0
          %vm1608 = vcmp.ge.f32.partialorder %v1605, 0.0
          %v1609 = vsel %vm1606, 1.0, -1.0
          %v1610 = vsel %vm1607, 1.0, -1.0
          %v1611 = vsel %vm1608, 1.0, -1.0
          %v1612 = vand.u32 2147483647, %v1603
          %v1613 = vand.u32 2147483647, %v1604
          %v1614 = vand.u32 2147483647, %v1605
          %v1615 = vmul.f32 %v1612, 0.3275911
          %v1616 = vmul.f32 %v1613, 0.3275911
          %v1617 = vmul.f32 %v1614, 0.3275911
          %v1618 = vadd.f32 %v1615, 1.0
          %v1619 = vadd.f32 %v1616, 1.0
          %v1620 = vadd.f32 %v1617, 1.0
          %v1621 = vrcp.pop %v1618
          %v1622 = vmul.f32 1.0, %v1621
          %v1623 = vrcp.pop %v1619
          %v1624 = vmul.f32 1.0, %v1623
          %v1625 = vrcp.pop %v1620
          %v1626 = vmul.f32 1.0, %v1625
          %v1627 = vmul.f32 %v1622, 1.0614054
          %v1628 = vmul.f32 %v1624, 1.0614054
          %v1629 = vmul.f32 %v1626, 1.0614054
          %v1630 = vadd.f32 %v1627, -1.4531521
          %v1631 = vadd.f32 %v1628, -1.4531521
          %v1632 = vadd.f32 %v1629, -1.4531521
          %v1633 = vmul.f32 %v1630, %v1622
          %v1634 = vmul.f32 %v1631, %v1624
          %v1635 = vmul.f32 %v1632, %v1626
          %v1636 = vadd.f32 %v1633, 1.4214138
          %v1637 = vadd.f32 %v1634, 1.4214138
          %v1638 = vadd.f32 %v1635, 1.4214138
          %v1639 = vmul.f32 %v1636, %v1622
          %v1640 = vmul.f32 %v1637, %v1624
          %v1641 = vmul.f32 %v1638, %v1626
          %v1642 = vadd.f32 %v1639, -0.28449672
          %v1643 = vadd.f32 %v1640, -0.28449672
          %v1644 = vadd.f32 %v1641, -0.28449672
          %v1645 = vmul.f32 %v1642, %v1622
          %v1646 = vmul.f32 %v1643, %v1624
          %v1647 = vmul.f32 %v1644, %v1626
          %v1648 = vadd.f32 %v1645, 0.2548296
          %v1649 = vadd.f32 %v1646, 0.2548296
          %v1650 = vadd.f32 %v1647, 0.2548296
          %v1651 = vmul.f32 %v1648, %v1622
          %v1652 = vmul.f32 %v1649, %v1624
          %v1653 = vmul.f32 %v1650, %v1626
          %v1654 = vsub.f32 0.0, %v1612
          %v1655 = vsub.f32 0.0, %v1613
          %v1656 = vsub.f32 0.0, %v1614
          %v1657 = vmul.f32 %v1654, %v1612
          %v1658 = vmul.f32 %v1655, %v1613
          %v1659 = vmul.f32 %v1656, %v1614
          %v1660 = vmul.f32 %v1657, 1.442695
          %v1661 = vpow.pop %v1660
          %v1662 = vmul.f32 %v1658, 1.442695
          %v1663 = vpow.pop %v1662
          %v1664 = vmul.f32 %v1659, 1.442695
          %v1665 = vpow.pop %v1664
          %v1666 = vmul.f32 %v1651, %v1661
          %v1667 = vmul.f32 %v1652, %v1663
          %v1668 = vmul.f32 %v1653, %v1665
          %v1669 = vsub.f32 1.0, %v1666
          %v1670 = vsub.f32 1.0, %v1667
          %v1671 = vsub.f32 1.0, %v1668
          %v1672 = vmul.f32 %v1609, %v1669
          %v1673 = vmul.f32 %v1610, %v1670
          %v1674 = vmul.f32 %v1611, %v1671
          %v1675 = vadd.f32 %v1672, 1.0
          %v1676 = vadd.f32 %v1673, 1.0
          %v1677 = vadd.f32 %v1674, 1.0
          %v1678 = vmul.f32 %v1600, %v1675
          %v1679 = vmul.f32 %v1601, %v1676
          %v1680 = vmul.f32 %v1602, %v1677
          %v1681 = vld [vmem:[#allocation20] sm:$0xf]
          %1683 = vset.pattern.permute.xlu0 0
          %1684 = vperm.xlu0 %1683, %v1681
          %v1685 = vpop.permute.xlu0 %1684
          %vm1687 = vcmask 31744
          %v1689 = vsel %vm1687, %v1599, 0
          %vm1691 = vcmask 1043456
          %v1693 = vsel %vm1691, %v1678, 0
          %v1696 = vsel %vm1691, %v1679, 0
          %v1699 = vsel %vm1691, %v1680, 0
          %1701 = vmatprep.subr.mxu0 %v1696
          %1702 = vmatpush1.msra.mxu0 %v1693
          %1703 = vmatprep.subr.mxu0 0.0
          %1704 = vmatpush1.msra.mxu0 0.0
          %1705 = vmatprep.subr.mxu0 0.0
          %1706 = vmatpush1.msra.mxu0 0.0
          %1707 = vmatprep.subr.mxu0 0.0
          %1708 = vmatpush1.msra.mxu0 0.0
          %1709 = vmatprep.subr.mxu0 0.0
          %1710 = vmatpush1.msra.mxu0 0.0
          %1711 = vmatprep.subr.mxu0 0.0
          %1712 = vmatpush1.msra.mxu0 0.0
          %1713 = vmatprep.subr.mxu0 0.0
          %1714 = vmatpush1.msra.mxu0 0.0
          %1715 = vmatprep.subr.mxu0 0.0
          %1716 = vmatpush1.msra.mxu0 0.0
          %1717 = vmatprep.subr.mxu0 0.0
          %1718 = vmatpush1.msra.mxu0 0.0
          %1719 = vmatprep.subr.mxu0 0.0
          %1720 = vmatpush1.msra.mxu0 0.0
          %1721 = vmatprep.subr.mxu0 0.0
          %1722 = vmatpush1.msra.mxu0 0.0
          %1723 = vmatprep.subr.mxu0 0.0
          %1724 = vmatpush1.msra.mxu0 0.0
          %1725 = vmatprep.subr.mxu0 0.0
          %1726 = vmatpush1.msra.mxu0 0.0
          %1727 = vmatprep.subr.mxu0 0.0
          %1728 = vmatpush1.msra.mxu0 0.0
          %1729 = vmatprep.subr.mxu0 0.0
          %1730 = vmatpush1.msra.mxu0 0.0
          %1731 = vmatprep.subr.mxu0 0.0
          %1732 = vmatpush1.msra.mxu0 0.0
          %1733 = vmatprep.subr.mxu0 0.0
          %1734 = vmatpush1.msra.mxu0 0.0
          %1735 = vmatprep.subr.mxu0 0.0
          %1736 = vmatpush1.msra.mxu0 0.0
          %1737 = vmatprep.subr.mxu0 0.0
          %1738 = vmatpush1.msra.mxu0 0.0
          %1739 = vmatprep.subr.mxu0 0.0
          %1740 = vmatpush1.msra.mxu0 0.0
          %1741 = vmatprep.subr.mxu0 0.0
          %1742 = vmatpush1.msra.mxu0 0.0
          %1743 = vmatprep.subr.mxu0 0.0
          %1744 = vmatpush1.msra.mxu0 0.0
          %1745 = vmatprep.subr.mxu0 0.0
          %1746 = vmatpush1.msra.mxu0 0.0
          %1747 = vmatprep.subr.mxu0 0.0
          %1748 = vmatpush1.msra.mxu0 0.0
          %1749 = vmatprep.subr.mxu0 0.0
          %1750 = vmatpush1.msra.mxu0 0.0
          %1751 = vmatprep.subr.mxu0 0.0
          %1752 = vmatpush1.msra.mxu0 0.0
          %1753 = vmatprep.subr.mxu0 0.0
          %1754 = vmatpush1.msra.mxu0 0.0
          %1755 = vmatprep.subr.mxu0 0.0
          %1756 = vmatpush1.msra.mxu0 0.0
          %1757 = vmatprep.subr.mxu0 0.0
          %1758 = vmatpush1.msra.mxu0 0.0
          %1759 = vmatprep.subr.mxu0 0.0
          %1760 = vmatpush1.msra.mxu0 0.0
          %1761 = vmatprep.subr.mxu0 0.0
          %1762 = vmatpush1.msra.mxu0 0.0
          %1763 = vmatprep.subr.mxu0 0.0
          %1764 = vmatpush1.msra.mxu0 0.0
          %1765 = vmatprep.mubr.f32.mxu0 0.0
          %1766 = vmatmul.mubr.f32.gmra.mrb[0].mxu0 %v1689
          %v1767 = vpop.f32.mrb[0].mxu0
          %v1768 = vadd.f32 %v1685, %v1767
          %v1769 = vpop.f32.mrb[0].mxu0
          %v1770 = vadd.f32 %v1685, %v1769
          %1771 = vdwg.mxu0
          %1772 = vmatprep.subr.mxu0 0.0
          %1773 = vmatpush1.msra.mxu0 %v1699
          %1774 = vmatprep.subr.mxu0 0.0
          %1775 = vmatpush1.msra.mxu0 0.0
          %1776 = vmatprep.subr.mxu0 0.0
          %1777 = vmatpush1.msra.mxu0 0.0
          %1778 = vmatprep.subr.mxu0 0.0
          %1779 = vmatpush1.msra.mxu0 0.0
          %1780 = vmatprep.subr.mxu0 0.0
          %1781 = vmatpush1.msra.mxu0 0.0
          %1782 = vmatprep.subr.mxu0 0.0
          %1783 = vmatpush1.msra.mxu0 0.0
          %1784 = vmatprep.subr.mxu0 0.0
          %1785 = vmatpush1.msra.mxu0 0.0
          %1786 = vmatprep.subr.mxu0 0.0
          %1787 = vmatpush1.msra.mxu0 0.0
          %1788 = vmatprep.subr.mxu0 0.0
          %1789 = vmatpush1.msra.mxu0 0.0
          %1790 = vmatprep.subr.mxu0 0.0
          %1791 = vmatpush1.msra.mxu0 0.0
          %1792 = vmatprep.subr.mxu0 0.0
          %1793 = vmatpush1.msra.mxu0 0.0
          %1794 = vmatprep.subr.mxu0 0.0
          %1795 = vmatpush1.msra.mxu0 0.0
          %1796 = vmatprep.subr.mxu0 0.0
          %1797 = vmatpush1.msra.mxu0 0.0
          %1798 = vmatprep.subr.mxu0 0.0
          %1799 = vmatpush1.msra.mxu0 0.0
          %1800 = vmatprep.subr.mxu0 0.0
          %1801 = vmatpush1.msra.mxu0 0.0
          %1802 = vmatprep.subr.mxu0 0.0
          %1803 = vmatpush1.msra.mxu0 0.0
          %1804 = vmatprep.subr.mxu0 0.0
          %1805 = vmatpush1.msra.mxu0 0.0
          %1806 = vmatprep.subr.mxu0 0.0
          %1807 = vmatpush1.msra.mxu0 0.0
          %1808 = vmatprep.subr.mxu0 0.0
          %1809 = vmatpush1.msra.mxu0 0.0
          %1810 = vmatprep.subr.mxu0 0.0
          %1811 = vmatpush1.msra.mxu0 0.0
          %1812 = vmatprep.subr.mxu0 0.0
          %1813 = vmatpush1.msra.mxu0 0.0
          %1814 = vmatprep.subr.mxu0 0.0
          %1815 = vmatpush1.msra.mxu0 0.0
          %1816 = vmatprep.subr.mxu0 0.0
          %1817 = vmatpush1.msra.mxu0 0.0
          %1818 = vmatprep.subr.mxu0 0.0
          %1819 = vmatpush1.msra.mxu0 0.0
          %1820 = vmatprep.subr.mxu0 0.0
          %1821 = vmatpush1.msra.mxu0 0.0
          %1822 = vmatprep.subr.mxu0 0.0
          %1823 = vmatpush1.msra.mxu0 0.0
          %1824 = vmatprep.subr.mxu0 0.0
          %1825 = vmatpush1.msra.mxu0 0.0
          %1826 = vmatprep.subr.mxu0 0.0
          %1827 = vmatpush1.msra.mxu0 0.0
          %1828 = vmatprep.subr.mxu0 0.0
          %1829 = vmatpush1.msra.mxu0 0.0
          %1830 = vmatprep.subr.mxu0 0.0
          %1831 = vmatpush1.msra.mxu0 0.0
          %1832 = vmatprep.subr.mxu0 0.0
          %1833 = vmatpush1.msra.mxu0 0.0
          %1834 = vmatprep.subr.mxu0 0.0
          %1835 = vmatpush1.msra.mxu0 0.0
          %1836 = vmatprep.mubr.f32.mxu0 0.0
          %1837 = vmatmul.mubr.f32.gmra.mrb[0].mxu0 %v1689
          %v1838 = vpop.f32.mrb[0].mxu0
          %v1839 = vadd.f32 %v1685, %v1838
          %v1840 = vpop.f32.mrb[0].mxu0
          %1841 = vdwg.mxu0
          %v1844 = vcombine.low %v1768, %v1770
          %1846 = vst [vmem:[#allocation2] sm:$0xff] %v1844
          %1847 = vst [vmem:[#allocation2 + $0x8] sm:$0xf] %v1839
          %v1848 = vld [vmem:[#allocation10] sm:$0xff]
          %v1849 = vld [vmem:[#allocation10 + $0x8] sm:$0xf]
          %v1850 = vld [vmem:[#allocation22] sm:$0xf]
          %v1851 = vld [vmem:[#allocation23] sm:$0xf]
          %v1854 = vcombine.high %v1848, %v1848
          %1855 = vrot.lane.b32.xlu0 %v1848, 24
          %v1856 = vpop.permute.xlu0 %1855
          %1857 = vrot.lane.b32.xlu0 %v1854, 24
          %v1858 = vpop.permute.xlu0 %1857
          %1859 = vrot.lane.b32.xlu0 %v1849, 24
          %v1860 = vpop.permute.xlu0 %1859
          %v1861 = vsel %vm1386, %v1856, %v1858
          %v1862 = vsel %vm1386, %v1858, %v1860
          %v1866 = vsel %vm1386, 0.0, %v1856
          %1868 = vset.pattern.permute.xlu0 0
          %1869 = vperm.xlu0 %1868, %v1850
          %v1870 = vpop.permute.xlu0 %1869
          %v1872 = vmul.f32 %v1866, %v1870
          %v1873 = vmul.f32 %v1861, %v1870
          %v1874 = vmul.f32 %v1862, %v1870
          %v1875 = vadd.f32 %v1872, 0.0
          %v1876 = vadd.f32 %v1873, 0.0
          %v1877 = vadd.f32 %v1874, 0.0
          %1878 = vset.pattern.permute.xlu0 1
          %1879 = vperm.xlu0 %1878, %v1850
          %v1880 = vpop.permute.xlu0 %1879
          %v1882 = vunpack.c.l.s4 839922192
          %v1883 = vunpack.c.0.s8 %v1882
          %v1884 = vlaneseq
          %v1885 = vshrl.u32 %v1884, 7
          %v1886 = vsub.s32 %v1883, %v1885
          %v1887 = vrot.slane %v1880, %v1886
          %v1889 = vmul.f32 %v1848, %v1887
          %v1890 = vmul.f32 %v1849, %v1887
          %v1892 = vcombine.high %v1889, %v1889
          %v1894 = vadd.f32 %v1875, %v1889
          %v1895 = vadd.f32 %v1876, %v1892
          %v1896 = vadd.f32 %v1877, %v1890
          %1897 = vrot.lane.b32.xlu0 %v1848, 104
          %v1898 = vpop.permute.xlu0 %1897
          %1899 = vrot.lane.b32.xlu0 %v1854, 104
          %v1900 = vpop.permute.xlu0 %1899
          %1901 = vrot.lane.b32.xlu0 %v1849, 104
          %v1902 = vpop.permute.xlu0 %1901
          %v1903 = vsel %vm1548, %v1898, %v1900
          %v1904 = vsel %vm1548, %v1900, %v1902
          %v1908 = vsel %vm1548, %v1902, 0.0
          %1909 = vset.pattern.permute.xlu0 2
          %1910 = vperm.xlu0 %1909, %v1850
          %v1911 = vpop.permute.xlu0 %1910
          %v1913 = vmul.f32 %v1903, %v1911
          %v1914 = vmul.f32 %v1904, %v1911
          %v1915 = vmul.f32 %v1908, %v1911
          %v1916 = vadd.f32 %v1894, %v1913
          %v1917 = vadd.f32 %v1895, %v1914
          %v1918 = vadd.f32 %v1896, %v1915
          %1920 = vset.pattern.permute.xlu0 0
          %1921 = vperm.xlu0 %1920, %v1851
          %v1922 = vpop.permute.xlu0 %1921
          %v1924 = vadd.f32 %v1916, %v1922
          %v1925 = vadd.f32 %v1917, %v1922
          %v1926 = vadd.f32 %v1918, %v1922
          %v1927 = vld [vmem:[#allocation25] sm:$0xf]
          %v1928 = vmul.f32 %v1924, 0.5
          %v1929 = vmul.f32 %v1925, 0.5
          %v1930 = vmul.f32 %v1926, 0.5
          %v1931 = vmul.f32 %v1924, 0.70710677
          %v1932 = vmul.f32 %v1925, 0.70710677
          %v1933 = vmul.f32 %v1926, 0.70710677
          %vm1934 = vcmp.ge.f32.partialorder %v1931, 0.0
          %vm1935 = vcmp.ge.f32.partialorder %v1932, 0.0
          %vm1936 = vcmp.ge.f32.partialorder %v1933, 0.0
          %v1937 = vsel %vm1934, 1.0, -1.0
          %v1938 = vsel %vm1935, 1.0, -1.0
          %v1939 = vsel %vm1936, 1.0, -1.0
          %v1940 = vand.u32 2147483647, %v1931
          %v1941 = vand.u32 2147483647, %v1932
          %v1942 = vand.u32 2147483647, %v1933
          %v1943 = vmul.f32 %v1940, 0.3275911
          %v1944 = vmul.f32 %v1941, 0.3275911
          %v1945 = vmul.f32 %v1942, 0.3275911
          %v1946 = vadd.f32 %v1943, 1.0
          %v1947 = vadd.f32 %v1944, 1.0
          %v1948 = vadd.f32 %v1945, 1.0
          %v1949 = vrcp.pop %v1946
          %v1950 = vmul.f32 1.0, %v1949
          %v1951 = vrcp.pop %v1947
          %v1952 = vmul.f32 1.0, %v1951
          %v1953 = vrcp.pop %v1948
          %v1954 = vmul.f32 1.0, %v1953
          %v1955 = vmul.f32 %v1950, 1.0614054
          %v1956 = vmul.f32 %v1952, 1.0614054
          %v1957 = vmul.f32 %v1954, 1.0614054
          %v1958 = vadd.f32 %v1955, -1.4531521
          %v1959 = vadd.f32 %v1956, -1.4531521
          %v1960 = vadd.f32 %v1957, -1.4531521
          %v1961 = vmul.f32 %v1958, %v1950
          %v1962 = vmul.f32 %v1959, %v1952
          %v1963 = vmul.f32 %v1960, %v1954
          %v1964 = vadd.f32 %v1961, 1.4214138
          %v1965 = vadd.f32 %v1962, 1.4214138
          %v1966 = vadd.f32 %v1963, 1.4214138
          %v1967 = vmul.f32 %v1964, %v1950
          %v1968 = vmul.f32 %v1965, %v1952
          %v1969 = vmul.f32 %v1966, %v1954
          %v1970 = vadd.f32 %v1967, -0.28449672
          %v1971 = vadd.f32 %v1968, -0.28449672
          %v1972 = vadd.f32 %v1969, -0.28449672
          %v1973 = vmul.f32 %v1970, %v1950
          %v1974 = vmul.f32 %v1971, %v1952
          %v1975 = vmul.f32 %v1972, %v1954
          %v1976 = vadd.f32 %v1973, 0.2548296
          %v1977 = vadd.f32 %v1974, 0.2548296
          %v1978 = vadd.f32 %v1975, 0.2548296
          %v1979 = vmul.f32 %v1976, %v1950
          %v1980 = vmul.f32 %v1977, %v1952
          %v1981 = vmul.f32 %v1978, %v1954
          %v1982 = vsub.f32 0.0, %v1940
          %v1983 = vsub.f32 0.0, %v1941
          %v1984 = vsub.f32 0.0, %v1942
          %v1985 = vmul.f32 %v1982, %v1940
          %v1986 = vmul.f32 %v1983, %v1941
          %v1987 = vmul.f32 %v1984, %v1942
          %v1988 = vmul.f32 %v1985, 1.442695
          %v1989 = vpow.pop %v1988
          %v1990 = vmul.f32 %v1986, 1.442695
          %v1991 = vpow.pop %v1990
          %v1992 = vmul.f32 %v1987, 1.442695
          %v1993 = vpow.pop %v1992
          %v1994 = vmul.f32 %v1979, %v1989
          %v1995 = vmul.f32 %v1980, %v1991
          %v1996 = vmul.f32 %v1981, %v1993
          %v1997 = vsub.f32 1.0, %v1994
          %v1998 = vsub.f32 1.0, %v1995
          %v1999 = vsub.f32 1.0, %v1996
          %v2000 = vmul.f32 %v1937, %v1997
          %v2001 = vmul.f32 %v1938, %v1998
          %v2002 = vmul.f32 %v1939, %v1999
          %v2003 = vadd.f32 %v2000, 1.0
          %v2004 = vadd.f32 %v2001, 1.0
          %v2005 = vadd.f32 %v2002, 1.0
          %v2006 = vmul.f32 %v1928, %v2003
          %v2007 = vmul.f32 %v1929, %v2004
          %v2008 = vmul.f32 %v1930, %v2005
          %v2009 = vld [vmem:[#allocation26] sm:$0xf]
          %2011 = vset.pattern.permute.xlu0 0
          %2012 = vperm.xlu0 %2011, %v2009
          %v2013 = vpop.permute.xlu0 %2012
          %v2016 = vsel %vm1687, %v1927, 0
          %v2019 = vsel %vm1691, %v2006, 0
          %v2022 = vsel %vm1691, %v2007, 0
          %v2025 = vsel %vm1691, %v2008, 0
          %2027 = vmatprep.subr.mxu0 %v2022
          %2028 = vmatpush1.msra.mxu0 %v2019
          %2029 = vmatprep.subr.mxu0 0.0
          %2030 = vmatpush1.msra.mxu0 0.0
          %2031 = vmatprep.subr.mxu0 0.0
          %2032 = vmatpush1.msra.mxu0 0.0
          %2033 = vmatprep.subr.mxu0 0.0
          %2034 = vmatpush1.msra.mxu0 0.0
          %2035 = vmatprep.subr.mxu0 0.0
          %2036 = vmatpush1.msra.mxu0 0.0
          %2037 = vmatprep.subr.mxu0 0.0
          %2038 = vmatpush1.msra.mxu0 0.0
          %2039 = vmatprep.subr.mxu0 0.0
          %2040 = vmatpush1.msra.mxu0 0.0
          %2041 = vmatprep.subr.mxu0 0.0
          %2042 = vmatpush1.msra.mxu0 0.0
          %2043 = vmatprep.subr.mxu0 0.0
          %2044 = vmatpush1.msra.mxu0 0.0
          %2045 = vmatprep.subr.mxu0 0.0
          %2046 = vmatpush1.msra.mxu0 0.0
          %2047 = vmatprep.subr.mxu0 0.0
          %2048 = vmatpush1.msra.mxu0 0.0
          %2049 = vmatprep.subr.mxu0 0.0
          %2050 = vmatpush1.msra.mxu0 0.0
          %2051 = vmatprep.subr.mxu0 0.0
          %2052 = vmatpush1.msra.mxu0 0.0
          %2053 = vmatprep.subr.mxu0 0.0
          %2054 = vmatpush1.msra.mxu0 0.0
          %2055 = vmatprep.subr.mxu0 0.0
          %2056 = vmatpush1.msra.mxu0 0.0
          %2057 = vmatprep.subr.mxu0 0.0
          %2058 = vmatpush1.msra.mxu0 0.0
          %2059 = vmatprep.subr.mxu0 0.0
          %2060 = vmatpush1.msra.mxu0 0.0
          %2061 = vmatprep.subr.mxu0 0.0
          %2062 = vmatpush1.msra.mxu0 0.0
          %2063 = vmatprep.subr.mxu0 0.0
          %2064 = vmatpush1.msra.mxu0 0.0
          %2065 = vmatprep.subr.mxu0 0.0
          %2066 = vmatpush1.msra.mxu0 0.0
          %2067 = vmatprep.subr.mxu0 0.0
          %2068 = vmatpush1.msra.mxu0 0.0
          %2069 = vmatprep.subr.mxu0 0.0
          %2070 = vmatpush1.msra.mxu0 0.0
          %2071 = vmatprep.subr.mxu0 0.0
          %2072 = vmatpush1.msra.mxu0 0.0
          %2073 = vmatprep.subr.mxu0 0.0
          %2074 = vmatpush1.msra.mxu0 0.0
          %2075 = vmatprep.subr.mxu0 0.0
          %2076 = vmatpush1.msra.mxu0 0.0
          %2077 = vmatprep.subr.mxu0 0.0
          %2078 = vmatpush1.msra.mxu0 0.0
          %2079 = vmatprep.subr.mxu0 0.0
          %2080 = vmatpush1.msra.mxu0 0.0
          %2081 = vmatprep.subr.mxu0 0.0
          %2082 = vmatpush1.msra.mxu0 0.0
          %2083 = vmatprep.subr.mxu0 0.0
          %2084 = vmatpush1.msra.mxu0 0.0
          %2085 = vmatprep.subr.mxu0 0.0
          %2086 = vmatpush1.msra.mxu0 0.0
          %2087 = vmatprep.subr.mxu0 0.0
          %2088 = vmatpush1.msra.mxu0 0.0
          %2089 = vmatprep.subr.mxu0 0.0
          %2090 = vmatpush1.msra.mxu0 0.0
          %2091 = vmatprep.mubr.f32.mxu0 0.0
          %2092 = vmatmul.mubr.f32.gmra.mrb[0].mxu0 %v2016
          %v2093 = vpop.f32.mrb[0].mxu0
          %v2094 = vadd.f32 %v2013, %v2093
          %v2095 = vpop.f32.mrb[0].mxu0
          %v2096 = vadd.f32 %v2013, %v2095
          %2097 = vdwg.mxu0
          %2098 = vmatprep.subr.mxu0 0.0
          %2099 = vmatpush1.msra.mxu0 %v2025
          %2100 = vmatprep.subr.mxu0 0.0
          %2101 = vmatpush1.msra.mxu0 0.0
          %2102 = vmatprep.subr.mxu0 0.0
          %2103 = vmatpush1.msra.mxu0 0.0
          %2104 = vmatprep.subr.mxu0 0.0
          %2105 = vmatpush1.msra.mxu0 0.0
          %2106 = vmatprep.subr.mxu0 0.0
          %2107 = vmatpush1.msra.mxu0 0.0
          %2108 = vmatprep.subr.mxu0 0.0
          %2109 = vmatpush1.msra.mxu0 0.0
          %2110 = vmatprep.subr.mxu0 0.0
          %2111 = vmatpush1.msra.mxu0 0.0
          %2112 = vmatprep.subr.mxu0 0.0
          %2113 = vmatpush1.msra.mxu0 0.0
          %2114 = vmatprep.subr.mxu0 0.0
          %2115 = vmatpush1.msra.mxu0 0.0
          %2116 = vmatprep.subr.mxu0 0.0
          %2117 = vmatpush1.msra.mxu0 0.0
          %2118 = vmatprep.subr.mxu0 0.0
          %2119 = vmatpush1.msra.mxu0 0.0
          %2120 = vmatprep.subr.mxu0 0.0
          %2121 = vmatpush1.msra.mxu0 0.0
          %2122 = vmatprep.subr.mxu0 0.0
          %2123 = vmatpush1.msra.mxu0 0.0
          %2124 = vmatprep.subr.mxu0 0.0
          %2125 = vmatpush1.msra.mxu0 0.0
          %2126 = vmatprep.subr.mxu0 0.0
          %2127 = vmatpush1.msra.mxu0 0.0
          %2128 = vmatprep.subr.mxu0 0.0
          %2129 = vmatpush1.msra.mxu0 0.0
          %2130 = vmatprep.subr.mxu0 0.0
          %2131 = vmatpush1.msra.mxu0 0.0
          %2132 = vmatprep.subr.mxu0 0.0
          %2133 = vmatpush1.msra.mxu0 0.0
          %2134 = vmatprep.subr.mxu0 0.0
          %2135 = vmatpush1.msra.mxu0 0.0
          %2136 = vmatprep.subr.mxu0 0.0
          %2137 = vmatpush1.msra.mxu0 0.0
          %2138 = vmatprep.subr.mxu0 0.0
          %2139 = vmatpush1.msra.mxu0 0.0
          %2140 = vmatprep.subr.mxu0 0.0
          %2141 = vmatpush1.msra.mxu0 0.0
          %2142 = vmatprep.subr.mxu0 0.0
          %2143 = vmatpush1.msra.mxu0 0.0
          %2144 = vmatprep.subr.mxu0 0.0
          %2145 = vmatpush1.msra.mxu0 0.0
          %2146 = vmatprep.subr.mxu0 0.0
          %2147 = vmatpush1.msra.mxu0 0.0
          %2148 = vmatprep.subr.mxu0 0.0
          %2149 = vmatpush1.msra.mxu0 0.0
          %2150 = vmatprep.subr.mxu0 0.0
          %2151 = vmatpush1.msra.mxu0 0.0
          %2152 = vmatprep.subr.mxu0 0.0
          %2153 = vmatpush1.msra.mxu0 0.0
          %2154 = vmatprep.subr.mxu0 0.0
          %2155 = vmatpush1.msra.mxu0 0.0
          %2156 = vmatprep.subr.mxu0 0.0
          %2157 = vmatpush1.msra.mxu0 0.0
          %2158 = vmatprep.subr.mxu0 0.0
          %2159 = vmatpush1.msra.mxu0 0.0
          %2160 = vmatprep.subr.mxu0 0.0
          %2161 = vmatpush1.msra.mxu0 0.0
          %2162 = vmatprep.mubr.f32.mxu0 0.0
          %2163 = vmatmul.mubr.f32.gmra.mrb[0].mxu0 %v2016
          %v2164 = vpop.f32.mrb[0].mxu0
          %v2165 = vadd.f32 %v2013, %v2164
          %v2166 = vpop.f32.mrb[0].mxu0
          %2167 = vdwg.mxu0
          %v2170 = vcombine.low %v2094, %v2096
          %2172 = vst [vmem:[#allocation3] sm:$0xff] %v2170
          %2173 = vst [vmem:[#allocation3 + $0x8] sm:$0xf] %v2165
          %v2174 = vld [vmem:[#allocation11] sm:$0xff]
          %v2175 = vld [vmem:[#allocation11 + $0x8] sm:$0xf]
          %v2176 = vld [vmem:[#allocation28] sm:$0xf]
          %v2177 = vld [vmem:[#allocation29] sm:$0xf]
          %v2180 = vcombine.high %v2174, %v2174
          %2181 = vrot.lane.b32.xlu0 %v2174, 1
          %v2182 = vpop.permute.xlu0 %2181
          %2183 = vrot.lane.b32.xlu0 %v2180, 1
          %v2184 = vpop.permute.xlu0 %2183
          %2185 = vrot.lane.b32.xlu0 %v2175, 1
          %v2186 = vpop.permute.xlu0 %2185
          %v2187 = vsel %vm1451, %v2182, %v2184
          %v2188 = vsel %vm1451, %v2184, %v2186
          %v2192 = vsel %vm1451, 0.0, %v2182
          %v2193 = vmul.f32 %v2192, %v1354
          %v2194 = vmul.f32 %v2187, %v1358
          %v2195 = vmul.f32 %v2188, %v1362
          %2197 = vset.pattern.permute.xlu0 0
          %2198 = vperm.xlu0 %2197, %v2176
          %v2199 = vpop.permute.xlu0 %2198
          %v2201 = vmul.f32 %v2193, %v2199
          %v2202 = vmul.f32 %v2194, %v2199
          %v2203 = vmul.f32 %v2195, %v2199
          %v2204 = vadd.f32 %v2201, 0.0
          %v2205 = vadd.f32 %v2202, 0.0
          %v2206 = vadd.f32 %v2203, 0.0
          %2207 = vset.pattern.permute.xlu0 1
          %2208 = vperm.xlu0 %2207, %v2176
          %v2209 = vpop.permute.xlu0 %2208
          %v2211 = vunpack.c.l.s4 839922192
          %v2212 = vunpack.c.0.s8 %v2211
          %v2213 = vlaneseq
          %v2214 = vshrl.u32 %v2213, 7
          %v2215 = vsub.s32 %v2212, %v2214
          %v2216 = vrot.slane %v2209, %v2215
          %v2218 = vmul.f32 %v2174, %v2216
          %v2219 = vmul.f32 %v2175, %v2216
          %v2221 = vcombine.high %v2218, %v2218
          %v2223 = vadd.f32 %v2204, %v2218
          %v2224 = vadd.f32 %v2205, %v2221
          %v2225 = vadd.f32 %v2206, %v2219
          %2226 = vrot.lane.b32.xlu0 %v2174, 127
          %v2227 = vpop.permute.xlu0 %2226
          %2228 = vrot.lane.b32.xlu0 %v2180, 127
          %v2229 = vpop.permute.xlu0 %2228
          %2230 = vrot.lane.b32.xlu0 %v2175, 127
          %v2231 = vpop.permute.xlu0 %2230
          %v2232 = vsel %vm1496, %v2227, %v2229
          %v2233 = vsel %vm1496, %v2229, %v2231
          %v2237 = vsel %vm1496, %v2231, 0.0
          %v2238 = vmul.f32 %v2232, %v1420
          %v2239 = vmul.f32 %v2233, %v1424
          %v2240 = vmul.f32 %v2237, %v1428
          %2241 = vset.pattern.permute.xlu0 2
          %2242 = vperm.xlu0 %2241, %v2176
          %v2243 = vpop.permute.xlu0 %2242
          %v2245 = vmul.f32 %v2238, %v2243
          %v2246 = vmul.f32 %v2239, %v2243
          %v2247 = vmul.f32 %v2240, %v2243
          %v2248 = vadd.f32 %v2223, %v2245
          %v2249 = vadd.f32 %v2224, %v2246
          %v2250 = vadd.f32 %v2225, %v2247
          %2252 = vset.pattern.permute.xlu0 0
          %2253 = vperm.xlu0 %2252, %v2177
          %v2254 = vpop.permute.xlu0 %2253
          %v2256 = vadd.f32 %v2248, %v2254
          %v2257 = vadd.f32 %v2249, %v2254
          %v2258 = vadd.f32 %v2250, %v2254
          %v2259 = vld [vmem:[#allocation31] sm:$0xf]
          %v2260 = vmul.f32 %v2256, 0.5
          %v2261 = vmul.f32 %v2257, 0.5
          %v2262 = vmul.f32 %v2258, 0.5
          %v2263 = vmul.f32 %v2256, 0.70710677
          %v2264 = vmul.f32 %v2257, 0.70710677
          %v2265 = vmul.f32 %v2258, 0.70710677
          %vm2266 = vcmp.ge.f32.partialorder %v2263, 0.0
          %vm2267 = vcmp.ge.f32.partialorder %v2264, 0.0
          %vm2268 = vcmp.ge.f32.partialorder %v2265, 0.0
          %v2269 = vsel %vm2266, 1.0, -1.0
          %v2270 = vsel %vm2267, 1.0, -1.0
          %v2271 = vsel %vm2268, 1.0, -1.0
          %v2272 = vand.u32 2147483647, %v2263
          %v2273 = vand.u32 2147483647, %v2264
          %v2274 = vand.u32 2147483647, %v2265
          %v2275 = vmul.f32 %v2272, 0.3275911
          %v2276 = vmul.f32 %v2273, 0.3275911
          %v2277 = vmul.f32 %v2274, 0.3275911
          %v2278 = vadd.f32 %v2275, 1.0
          %v2279 = vadd.f32 %v2276, 1.0
          %v2280 = vadd.f32 %v2277, 1.0
          %v2281 = vrcp.pop %v2278
          %v2282 = vmul.f32 1.0, %v2281
          %v2283 = vrcp.pop %v2279
          %v2284 = vmul.f32 1.0, %v2283
          %v2285 = vrcp.pop %v2280
          %v2286 = vmul.f32 1.0, %v2285
          %v2287 = vmul.f32 %v2282, 1.0614054
          %v2288 = vmul.f32 %v2284, 1.0614054
          %v2289 = vmul.f32 %v2286, 1.0614054
          %v2290 = vadd.f32 %v2287, -1.4531521
          %v2291 = vadd.f32 %v2288, -1.4531521
          %v2292 = vadd.f32 %v2289, -1.4531521
          %v2293 = vmul.f32 %v2290, %v2282
          %v2294 = vmul.f32 %v2291, %v2284
          %v2295 = vmul.f32 %v2292, %v2286
          %v2296 = vadd.f32 %v2293, 1.4214138
          %v2297 = vadd.f32 %v2294, 1.4214138
          %v2298 = vadd.f32 %v2295, 1.4214138
          %v2299 = vmul.f32 %v2296, %v2282
          %v2300 = vmul.f32 %v2297, %v2284
          %v2301 = vmul.f32 %v2298, %v2286
          %v2302 = vadd.f32 %v2299, -0.28449672
          %v2303 = vadd.f32 %v2300, -0.28449672
          %v2304 = vadd.f32 %v2301, -0.28449672
          %v2305 = vmul.f32 %v2302, %v2282
          %v2306 = vmul.f32 %v2303, %v2284
          %v2307 = vmul.f32 %v2304, %v2286
          %v2308 = vadd.f32 %v2305, 0.2548296
          %v2309 = vadd.f32 %v2306, 0.2548296
          %v2310 = vadd.f32 %v2307, 0.2548296
          %v2311 = vmul.f32 %v2308, %v2282
          %v2312 = vmul.f32 %v2309, %v2284
          %v2313 = vmul.f32 %v2310, %v2286
          %v2314 = vsub.f32 0.0, %v2272
          %v2315 = vsub.f32 0.0, %v2273
          %v2316 = vsub.f32 0.0, %v2274
          %v2317 = vmul.f32 %v2314, %v2272
          %v2318 = vmul.f32 %v2315, %v2273
          %v2319 = vmul.f32 %v2316, %v2274
          %v2320 = vmul.f32 %v2317, 1.442695
          %v2321 = vpow.pop %v2320
          %v2322 = vmul.f32 %v2318, 1.442695
          %v2323 = vpow.pop %v2322
          %v2324 = vmul.f32 %v2319, 1.442695
          %v2325 = vpow.pop %v2324
          %v2326 = vmul.f32 %v2311, %v2321
          %v2327 = vmul.f32 %v2312, %v2323
          %v2328 = vmul.f32 %v2313, %v2325
          %v2329 = vsub.f32 1.0, %v2326
          %v2330 = vsub.f32 1.0, %v2327
          %v2331 = vsub.f32 1.0, %v2328
          %v2332 = vmul.f32 %v2269, %v2329
          %v2333 = vmul.f32 %v2270, %v2330
          %v2334 = vmul.f32 %v2271, %v2331
          %v2335 = vadd.f32 %v2332, 1.0
          %v2336 = vadd.f32 %v2333, 1.0
          %v2337 = vadd.f32 %v2334, 1.0
          %v2338 = vmul.f32 %v2260, %v2335
          %v2339 = vmul.f32 %v2261, %v2336
          %v2340 = vmul.f32 %v2262, %v2337
          %v2341 = vld [vmem:[#allocation32] sm:$0xf]
          %2343 = vset.pattern.permute.xlu0 0
          %2344 = vperm.xlu0 %2343, %v2341
          %v2345 = vpop.permute.xlu0 %2344
          %v2348 = vsel %vm1687, %v2259, 0
          %v2351 = vsel %vm1691, %v2338, 0
          %v2354 = vsel %vm1691, %v2339, 0
          %v2357 = vsel %vm1691, %v2340, 0
          %2359 = vmatprep.subr.mxu0 %v2354
          %2360 = vmatpush1.msra.mxu0 %v2351
          %2361 = vmatprep.subr.mxu0 0.0
          %2362 = vmatpush1.msra.mxu0 0.0
          %2363 = vmatprep.subr.mxu0 0.0
          %2364 = vmatpush1.msra.mxu0 0.0
          %2365 = vmatprep.subr.mxu0 0.0
          %2366 = vmatpush1.msra.mxu0 0.0
          %2367 = vmatprep.subr.mxu0 0.0
          %2368 = vmatpush1.msra.mxu0 0.0
          %2369 = vmatprep.subr.mxu0 0.0
          %2370 = vmatpush1.msra.mxu0 0.0
          %2371 = vmatprep.subr.mxu0 0.0
          %2372 = vmatpush1.msra.mxu0 0.0
          %2373 = vmatprep.subr.mxu0 0.0
          %2374 = vmatpush1.msra.mxu0 0.0
          %2375 = vmatprep.subr.mxu0 0.0
          %2376 = vmatpush1.msra.mxu0 0.0
          %2377 = vmatprep.subr.mxu0 0.0
          %2378 = vmatpush1.msra.mxu0 0.0
          %2379 = vmatprep.subr.mxu0 0.0
          %2380 = vmatpush1.msra.mxu0 0.0
          %2381 = vmatprep.subr.mxu0 0.0
          %2382 = vmatpush1.msra.mxu0 0.0
          %2383 = vmatprep.subr.mxu0 0.0
          %2384 = vmatpush1.msra.mxu0 0.0
          %2385 = vmatprep.subr.mxu0 0.0
          %2386 = vmatpush1.msra.mxu0 0.0
          %2387 = vmatprep.subr.mxu0 0.0
          %2388 = vmatpush1.msra.mxu0 0.0
          %2389 = vmatprep.subr.mxu0 0.0
          %2390 = vmatpush1.msra.mxu0 0.0
          %2391 = vmatprep.subr.mxu0 0.0
          %2392 = vmatpush1.msra.mxu0 0.0
          %2393 = vmatprep.subr.mxu0 0.0
          %2394 = vmatpush1.msra.mxu0 0.0
          %2395 = vmatprep.subr.mxu0 0.0
          %2396 = vmatpush1.msra.mxu0 0.0
          %2397 = vmatprep.subr.mxu0 0.0
          %2398 = vmatpush1.msra.mxu0 0.0
          %2399 = vmatprep.subr.mxu0 0.0
          %2400 = vmatpush1.msra.mxu0 0.0
          %2401 = vmatprep.subr.mxu0 0.0
          %2402 = vmatpush1.msra.mxu0 0.0
          %2403 = vmatprep.subr.mxu0 0.0
          %2404 = vmatpush1.msra.mxu0 0.0
          %2405 = vmatprep.subr.mxu0 0.0
          %2406 = vmatpush1.msra.mxu0 0.0
          %2407 = vmatprep.subr.mxu0 0.0
          %2408 = vmatpush1.msra.mxu0 0.0
          %2409 = vmatprep.subr.mxu0 0.0
          %2410 = vmatpush1.msra.mxu0 0.0
          %2411 = vmatprep.subr.mxu0 0.0
          %2412 = vmatpush1.msra.mxu0 0.0
          %2413 = vmatprep.subr.mxu0 0.0
          %2414 = vmatpush1.msra.mxu0 0.0
          %2415 = vmatprep.subr.mxu0 0.0
          %2416 = vmatpush1.msra.mxu0 0.0
          %2417 = vmatprep.subr.mxu0 0.0
          %2418 = vmatpush1.msra.mxu0 0.0
          %2419 = vmatprep.subr.mxu0 0.0
          %2420 = vmatpush1.msra.mxu0 0.0
          %2421 = vmatprep.subr.mxu0 0.0
          %2422 = vmatpush1.msra.mxu0 0.0
          %2423 = vmatprep.mubr.f32.mxu0 0.0
          %2424 = vmatmul.mubr.f32.gmra.mrb[0].mxu0 %v2348
          %v2425 = vpop.f32.mrb[0].mxu0
          %v2426 = vadd.f32 %v2345, %v2425
          %v2427 = vpop.f32.mrb[0].mxu0
          %v2428 = vadd.f32 %v2345, %v2427
          %2429 = vdwg.mxu0
          %2430 = vmatprep.subr.mxu0 0.0
          %2431 = vmatpush1.msra.mxu0 %v2357
          %2432 = vmatprep.subr.mxu0 0.0
          %2433 = vmatpush1.msra.mxu0 0.0
          %2434 = vmatprep.subr.mxu0 0.0
          %2435 = vmatpush1.msra.mxu0 0.0
          %2436 = vmatprep.subr.mxu0 0.0
          %2437 = vmatpush1.msra.mxu0 0.0
          %2438 = vmatprep.subr.mxu0 0.0
          %2439 = vmatpush1.msra.mxu0 0.0
          %2440 = vmatprep.subr.mxu0 0.0
          %2441 = vmatpush1.msra.mxu0 0.0
          %2442 = vmatprep.subr.mxu0 0.0
          %2443 = vmatpush1.msra.mxu0 0.0
          %2444 = vmatprep.subr.mxu0 0.0
          %2445 = vmatpush1.msra.mxu0 0.0
          %2446 = vmatprep.subr.mxu0 0.0
          %2447 = vmatpush1.msra.mxu0 0.0
          %2448 = vmatprep.subr.mxu0 0.0
          %2449 = vmatpush1.msra.mxu0 0.0
          %2450 = vmatprep.subr.mxu0 0.0
          %2451 = vmatpush1.msra.mxu0 0.0
          %2452 = vmatprep.subr.mxu0 0.0
          %2453 = vmatpush1.msra.mxu0 0.0
          %2454 = vmatprep.subr.mxu0 0.0
          %2455 = vmatpush1.msra.mxu0 0.0
          %2456 = vmatprep.subr.mxu0 0.0
          %2457 = vmatpush1.msra.mxu0 0.0
          %2458 = vmatprep.subr.mxu0 0.0
          %2459 = vmatpush1.msra.mxu0 0.0
          %2460 = vmatprep.subr.mxu0 0.0
          %2461 = vmatpush1.msra.mxu0 0.0
          %2462 = vmatprep.subr.mxu0 0.0
          %2463 = vmatpush1.msra.mxu0 0.0
          %2464 = vmatprep.subr.mxu0 0.0
          %2465 = vmatpush1.msra.mxu0 0.0
          %2466 = vmatprep.subr.mxu0 0.0
          %2467 = vmatpush1.msra.mxu0 0.0
          %2468 = vmatprep.subr.mxu0 0.0
          %2469 = vmatpush1.msra.mxu0 0.0
          %2470 = vmatprep.subr.mxu0 0.0
          %2471 = vmatpush1.msra.mxu0 0.0
          %2472 = vmatprep.subr.mxu0 0.0
          %2473 = vmatpush1.msra.mxu0 0.0
          %2474 = vmatprep.subr.mxu0 0.0
          %2475 = vmatpush1.msra.mxu0 0.0
          %2476 = vmatprep.subr.mxu0 0.0
          %2477 = vmatpush1.msra.mxu0 0.0
          %2478 = vmatprep.subr.mxu0 0.0
          %2479 = vmatpush1.msra.mxu0 0.0
          %2480 = vmatprep.subr.mxu0 0.0
          %2481 = vmatpush1.msra.mxu0 0.0
          %2482 = vmatprep.subr.mxu0 0.0
          %2483 = vmatpush1.msra.mxu0 0.0
          %2484 = vmatprep.subr.mxu0 0.0
          %2485 = vmatpush1.msra.mxu0 0.0
          %2486 = vmatprep.subr.mxu0 0.0
          %2487 = vmatpush1.msra.mxu0 0.0
          %2488 = vmatprep.subr.mxu0 0.0
          %2489 = vmatpush1.msra.mxu0 0.0
          %2490 = vmatprep.subr.mxu0 0.0
          %2491 = vmatpush1.msra.mxu0 0.0
          %2492 = vmatprep.subr.mxu0 0.0
          %2493 = vmatpush1.msra.mxu0 0.0
          %2494 = vmatprep.mubr.f32.mxu0 0.0
          %2495 = vmatmul.mubr.f32.gmra.mrb[0].mxu0 %v2348
          %v2496 = vpop.f32.mrb[0].mxu0
          %v2497 = vadd.f32 %v2345, %v2496
          %v2498 = vpop.f32.mrb[0].mxu0
          %2499 = vdwg.mxu0
          %v2502 = vcombine.low %v2426, %v2428
          %2504 = vst [vmem:[#allocation4] sm:$0xff] %v2502
          %2505 = vst [vmem:[#allocation4 + $0x8] sm:$0xf] %v2497
        $region264: #{tpu_custom_call.1} parent=139 // pred_fallthru
          _
        %v2506 = vld [vmem:[%s1131] sm:$0xff]
        %v2507 = vld [vmem:[%s1131 + $0x8] sm:$0xff]
        %v2508 = vld [vmem:[%s1131 + $0x10] sm:$0xff]
        %v2509 = vld [vmem:[%s1131 + $0x18] sm:$0xff]
        %v2510 = vld [vmem:[%s1131 + $0x20] sm:$0xff]
        %v2511 = vld [vmem:[%s1131 + $0x28] sm:$0xff]
        %v2512 = vld [vmem:[#allocation40] sm:$0xff]
        %v2513 = vld [vmem:[#allocation40 + $0x8] sm:$0xff]
        %v2514 = vld [vmem:[#allocation41] sm:$0xff]
        %v2515 = vld [vmem:[#allocation41 + $0x8] sm:$0xff]
        %v2516 = vadd.f32 %v2506, %v2509
        %v2517 = vrot.slane %v2516, 4
        %v2518 = vadd.f32 %v2516, %v2517
        %v2519 = vrot.slane %v2518, 2
        %v2520 = vadd.f32 %v2518, %v2519
        %v2521 = vrot.slane %v2520, 1
        %v2522 = vadd.f32 %v2520, %v2521
        %v2523 = vadd.f32 %v2507, %v2510
        %v2524 = vrot.slane %v2523, 4
        %v2525 = vadd.f32 %v2523, %v2524
        %v2526 = vrot.slane %v2525, 2
        %v2527 = vadd.f32 %v2525, %v2526
        %v2528 = vrot.slane %v2527, 1
        %v2529 = vadd.f32 %v2527, %v2528
        %v2530 = vadd.f32 %v2508, %v2511
        %v2531 = vrot.slane %v2530, 4
        %v2532 = vadd.f32 %v2530, %v2531
        %v2533 = vrot.slane %v2532, 2
        %v2534 = vadd.f32 %v2532, %v2533
        %v2535 = vrot.slane %v2534, 1
        %v2536 = vadd.f32 %v2534, %v2535
        %v2537 = vrcp.pop 16.0
        %v2538 = vmul.f32 %v2522, %v2537
        %v2539 = vmul.f32 %v2529, %v2537
        %v2540 = vmul.f32 %v2536, %v2537
        %v2541 = vsub.f32 %v2506, %v2538
        %v2542 = vsub.f32 %v2507, %v2539
        %v2543 = vsub.f32 %v2508, %v2540
        %v2544 = vsub.f32 %v2509, %v2538
        %v2545 = vsub.f32 %v2510, %v2539
        %v2546 = vsub.f32 %v2511, %v2540
        %v2547 = vmul.f32 %v2541, %v2541
        %v2548 = vmul.f32 %v2542, %v2542
        %v2549 = vmul.f32 %v2543, %v2543
        %v2550 = vmul.f32 %v2544, %v2544
        %v2551 = vmul.f32 %v2545, %v2545
        %v2552 = vmul.f32 %v2546, %v2546
        %v2553 = vadd.f32 %v2547, %v2550
        %v2554 = vrot.slane %v2553, 4
        %v2555 = vadd.f32 %v2553, %v2554
        %v2556 = vrot.slane %v2555, 2
        %v2557 = vadd.f32 %v2555, %v2556
        %v2558 = vrot.slane %v2557, 1
        %v2559 = vadd.f32 %v2557, %v2558
        %v2560 = vadd.f32 %v2548, %v2551
        %v2561 = vrot.slane %v2560, 4
        %v2562 = vadd.f32 %v2560, %v2561
        %v2563 = vrot.slane %v2562, 2
        %v2564 = vadd.f32 %v2562, %v2563
        %v2565 = vrot.slane %v2564, 1
        %v2566 = vadd.f32 %v2564, %v2565
        %v2567 = vadd.f32 %v2549, %v2552
        %v2568 = vrot.slane %v2567, 4
        %v2569 = vadd.f32 %v2567, %v2568
        %v2570 = vrot.slane %v2569, 2
        %v2571 = vadd.f32 %v2569, %v2570
        %v2572 = vrot.slane %v2571, 1
        %v2573 = vadd.f32 %v2571, %v2572
        %v2574 = vmul.f32 %v2559, %v2537
        %v2575 = vmul.f32 %v2566, %v2537
        %v2576 = vmul.f32 %v2573, %v2537
        %v2577 = vadd.f32 %v2574, 1e-06
        %v2578 = vadd.f32 %v2575, 1e-06
        %v2579 = vadd.f32 %v2576, 1e-06
        %v2580 = vrsqrt.pop %v2577
        %v2581 = vrsqrt.pop %v2578
        %v2582 = vrsqrt.pop %v2579
        %v2583 = vmul.f32 %v2541, %v2580
        %v2584 = vmul.f32 %v2542, %v2581
        %v2585 = vmul.f32 %v2543, %v2582
        %v2586 = vmul.f32 %v2544, %v2580
        %v2587 = vmul.f32 %v2545, %v2581
        %v2588 = vmul.f32 %v2546, %v2582
        %2590 = vset.pattern.permute.xlu0 0
        %2591 = vperm.xlu0 %2590, %v2512
        %v2592 = vpop.permute.xlu0 %2591
        %2595 = vset.pattern.permute.xlu0 0
        %2596 = vperm.xlu0 %2595, %v2513
        %v2597 = vpop.permute.xlu0 %2596
        %v2599 = vmul.f32 %v2583, %v2592
        %v2600 = vmul.f32 %v2584, %v2592
        %v2601 = vmul.f32 %v2585, %v2592
        %v2602 = vmul.f32 %v2586, %v2597
        %v2603 = vmul.f32 %v2587, %v2597
        %v2604 = vmul.f32 %v2588, %v2597
        %2606 = vset.pattern.permute.xlu0 0
        %2607 = vperm.xlu0 %2606, %v2514
        %v2608 = vpop.permute.xlu0 %2607
        %2611 = vset.pattern.permute.xlu0 0
        %2612 = vperm.xlu0 %2611, %v2515
        %v2613 = vpop.permute.xlu0 %2612
        %v2615 = vadd.f32 %v2599, %v2608
        %v2616 = vadd.f32 %v2600, %v2608
        %v2617 = vadd.f32 %v2601, %v2608
        %v2618 = vadd.f32 %v2602, %v2613
        %v2619 = vadd.f32 %v2603, %v2613
        %v2620 = vadd.f32 %v2604, %v2613
        %v2621 = vld [vmem:[#allocation2] sm:$0xff]
        %v2622 = vld [vmem:[#allocation2 + $0x8] sm:$0xf]
        %v2624 = vcombine.high %v2621, %v2621
        %v2626 = vmul.f32 %v2615, %v2621
        %v2627 = vmul.f32 %v2616, %v2624
        %v2628 = vmul.f32 %v2617, %v2622
        %v2629 = vld [vmem:[#allocation3] sm:$0xff]
        %v2630 = vld [vmem:[#allocation3 + $0x8] sm:$0xf]
        %v2633 = vcombine.low %v2629, %v2629
        %v2634 = vcombine.low %v2630, %v2630
        %v2637 = vmul.f32 %v2615, %v2633
        %v2638 = vmul.f32 %v2616, %v2629
        %v2639 = vmul.f32 %v2617, %v2634
        %v2640 = vld [vmem:[#allocation4] sm:$0xff]
        %v2641 = vld [vmem:[#allocation4 + $0x8] sm:$0xf]
        %v2643 = vcombine.high %v2640, %v2640
        %v2645 = vmul.f32 %v2618, %v2640
        %v2646 = vmul.f32 %v2619, %v2643
        %v2647 = vmul.f32 %v2620, %v2641
        %v2648 = vld [vmem:[#allocation34] sm:$0xf]
        %v2649 = vld [vmem:[#allocation35] sm:$0xf]
        %2651 = vset.pattern.permute.xlu0 0
        %2652 = vperm.xlu0 %2651, %v2649
        %v2653 = vpop.permute.xlu0 %2652
        %v2658 = vrot.slane %v2618, 4
        %v2659 = vrot.slane %v2619, 4
        %v2660 = vrot.slane %v2620, 4
        %vm2661 = vcmask 31744
        %v2663 = vsel %vm2661, %v2648, 0
        %vm2665 = vcmask 1043456
        %v2666 = vsel %vm2665, %v2658, 0
        %v2668 = vsel %vm2665, %v2659, 0
        %v2670 = vsel %vm2665, %v2660, 0
        %2672 = vmatprep.subr.mxu0 %v2668
        %2673 = vmatpush1.msra.mxu0 %v2666
        %2674 = vmatprep.subr.mxu0 0.0
        %2675 = vmatpush1.msra.mxu0 0.0
        %2676 = vmatprep.subr.mxu0 0.0
        %2677 = vmatpush1.msra.mxu0 0.0
        %2678 = vmatprep.subr.mxu0 0.0
        %2679 = vmatpush1.msra.mxu0 0.0
        %2680 = vmatprep.subr.mxu0 0.0
        %2681 = vmatpush1.msra.mxu0 0.0
        %2682 = vmatprep.subr.mxu0 0.0
        %2683 = vmatpush1.msra.mxu0 0.0
        %2684 = vmatprep.subr.mxu0 0.0
        %2685 = vmatpush1.msra.mxu0 0.0
        %2686 = vmatprep.subr.mxu0 0.0
        %2687 = vmatpush1.msra.mxu0 0.0
        %2688 = vmatprep.subr.mxu0 0.0
        %2689 = vmatpush1.msra.mxu0 0.0
        %2690 = vmatprep.subr.mxu0 0.0
        %2691 = vmatpush1.msra.mxu0 0.0
        %2692 = vmatprep.subr.mxu0 0.0
        %2693 = vmatpush1.msra.mxu0 0.0
        %2694 = vmatprep.subr.mxu0 0.0
        %2695 = vmatpush1.msra.mxu0 0.0
        %2696 = vmatprep.subr.mxu0 0.0
        %2697 = vmatpush1.msra.mxu0 0.0
        %2698 = vmatprep.subr.mxu0 0.0
        %2699 = vmatpush1.msra.mxu0 0.0
        %2700 = vmatprep.subr.mxu0 0.0
        %2701 = vmatpush1.msra.mxu0 0.0
        %2702 = vmatprep.subr.mxu0 0.0
        %2703 = vmatpush1.msra.mxu0 0.0
        %2704 = vmatprep.subr.mxu0 0.0
        %2705 = vmatpush1.msra.mxu0 0.0
        %2706 = vmatprep.subr.mxu0 0.0
        %2707 = vmatpush1.msra.mxu0 0.0
        %2708 = vmatprep.subr.mxu0 0.0
        %2709 = vmatpush1.msra.mxu0 0.0
        %2710 = vmatprep.subr.mxu0 0.0
        %2711 = vmatpush1.msra.mxu0 0.0
        %2712 = vmatprep.subr.mxu0 0.0
        %2713 = vmatpush1.msra.mxu0 0.0
        %2714 = vmatprep.subr.mxu0 0.0
        %2715 = vmatpush1.msra.mxu0 0.0
        %2716 = vmatprep.subr.mxu0 0.0
        %2717 = vmatpush1.msra.mxu0 0.0
        %2718 = vmatprep.subr.mxu0 0.0
        %2719 = vmatpush1.msra.mxu0 0.0
        %2720 = vmatprep.subr.mxu0 0.0
        %2721 = vmatpush1.msra.mxu0 0.0
        %2722 = vmatprep.subr.mxu0 0.0
        %2723 = vmatpush1.msra.mxu0 0.0
        %2724 = vmatprep.subr.mxu0 0.0
        %2725 = vmatpush1.msra.mxu0 0.0
        %2726 = vmatprep.subr.mxu0 0.0
        %2727 = vmatpush1.msra.mxu0 0.0
        %2728 = vmatprep.subr.mxu0 0.0
        %2729 = vmatpush1.msra.mxu0 0.0
        %2730 = vmatprep.subr.mxu0 0.0
        %2731 = vmatpush1.msra.mxu0 0.0
        %2732 = vmatprep.subr.mxu0 0.0
        %2733 = vmatpush1.msra.mxu0 0.0
        %2734 = vmatprep.subr.mxu0 0.0
        %2735 = vmatpush1.msra.mxu0 0.0
        %2736 = vmatprep.mubr.f32.mxu0 0.0
        %2737 = vmatmul.mubr.f32.gmra.mrb[0].mxu0 %v2663
        %v2738 = vpop.f32.mrb[0].mxu0
        %v2739 = vadd.f32 %v2653, %v2738
        %v2740 = vpop.f32.mrb[0].mxu0
        %v2741 = vadd.f32 %v2653, %v2740
        %2742 = vdwg.mxu0
        %2743 = vmatprep.subr.mxu0 0.0
        %2744 = vmatpush1.msra.mxu0 %v2670
        %2745 = vmatprep.subr.mxu0 0.0
        %2746 = vmatpush1.msra.mxu0 0.0
        %2747 = vmatprep.subr.mxu0 0.0
        %2748 = vmatpush1.msra.mxu0 0.0
        %2749 = vmatprep.subr.mxu0 0.0
        %2750 = vmatpush1.msra.mxu0 0.0
        %2751 = vmatprep.subr.mxu0 0.0
        %2752 = vmatpush1.msra.mxu0 0.0
        %2753 = vmatprep.subr.mxu0 0.0
        %2754 = vmatpush1.msra.mxu0 0.0
        %2755 = vmatprep.subr.mxu0 0.0
        %2756 = vmatpush1.msra.mxu0 0.0
        %2757 = vmatprep.subr.mxu0 0.0
        %2758 = vmatpush1.msra.mxu0 0.0
        %2759 = vmatprep.subr.mxu0 0.0
        %2760 = vmatpush1.msra.mxu0 0.0
        %2761 = vmatprep.subr.mxu0 0.0
        %2762 = vmatpush1.msra.mxu0 0.0
        %2763 = vmatprep.subr.mxu0 0.0
        %2764 = vmatpush1.msra.mxu0 0.0
        %2765 = vmatprep.subr.mxu0 0.0
        %2766 = vmatpush1.msra.mxu0 0.0
        %2767 = vmatprep.subr.mxu0 0.0
        %2768 = vmatpush1.msra.mxu0 0.0
        %2769 = vmatprep.subr.mxu0 0.0
        %2770 = vmatpush1.msra.mxu0 0.0
        %2771 = vmatprep.subr.mxu0 0.0
        %2772 = vmatpush1.msra.mxu0 0.0
        %2773 = vmatprep.subr.mxu0 0.0
        %2774 = vmatpush1.msra.mxu0 0.0
        %2775 = vmatprep.subr.mxu0 0.0
        %2776 = vmatpush1.msra.mxu0 0.0
        %2777 = vmatprep.subr.mxu0 0.0
        %2778 = vmatpush1.msra.mxu0 0.0
        %2779 = vmatprep.subr.mxu0 0.0
        %2780 = vmatpush1.msra.mxu0 0.0
        %2781 = vmatprep.subr.mxu0 0.0
        %2782 = vmatpush1.msra.mxu0 0.0
        %2783 = vmatprep.subr.mxu0 0.0
        %2784 = vmatpush1.msra.mxu0 0.0
        %2785 = vmatprep.subr.mxu0 0.0
        %2786 = vmatpush1.msra.mxu0 0.0
        %2787 = vmatprep.subr.mxu0 0.0
        %2788 = vmatpush1.msra.mxu0 0.0
        %2789 = vmatprep.subr.mxu0 0.0
        %2790 = vmatpush1.msra.mxu0 0.0
        %2791 = vmatprep.subr.mxu0 0.0
        %2792 = vmatpush1.msra.mxu0 0.0
        %2793 = vmatprep.subr.mxu0 0.0
        %2794 = vmatpush1.msra.mxu0 0.0
        %2795 = vmatprep.subr.mxu0 0.0
        %2796 = vmatpush1.msra.mxu0 0.0
        %2797 = vmatprep.subr.mxu0 0.0
        %2798 = vmatpush1.msra.mxu0 0.0
        %2799 = vmatprep.subr.mxu0 0.0
        %2800 = vmatpush1.msra.mxu0 0.0
        %2801 = vmatprep.subr.mxu0 0.0
        %2802 = vmatpush1.msra.mxu0 0.0
        %2803 = vmatprep.subr.mxu0 0.0
        %2804 = vmatpush1.msra.mxu0 0.0
        %2805 = vmatprep.subr.mxu0 0.0
        %2806 = vmatpush1.msra.mxu0 0.0
        %2807 = vmatprep.mubr.f32.mxu0 0.0
        %2808 = vmatmul.mubr.f32.gmra.mrb[0].mxu0 %v2663
        %v2809 = vpop.f32.mrb[0].mxu0
        %v2810 = vadd.f32 %v2653, %v2809
        %v2811 = vpop.f32.mrb[0].mxu0
        %2812 = vdwg.mxu0
        %v2813 = vmul.f32 %v2739, 0.5
        %v2814 = vmul.f32 %v2741, 0.5
        %v2815 = vmul.f32 %v2810, 0.5
        %v2816 = vmul.f32 %v2739, 0.70710677
        %v2817 = vmul.f32 %v2741, 0.70710677
        %v2818 = vmul.f32 %v2810, 0.70710677
        %vm2819 = vcmp.ge.f32.partialorder %v2816, 0.0
        %vm2820 = vcmp.ge.f32.partialorder %v2817, 0.0
        %vm2821 = vcmp.ge.f32.partialorder %v2818, 0.0
        %v2822 = vsel %vm2819, 1.0, -1.0
        %v2823 = vsel %vm2820, 1.0, -1.0
        %v2824 = vsel %vm2821, 1.0, -1.0
        %v2825 = vand.u32 2147483647, %v2816
        %v2826 = vand.u32 2147483647, %v2817
        %v2827 = vand.u32 2147483647, %v2818
        %v2828 = vmul.f32 %v2825, 0.3275911
        %v2829 = vmul.f32 %v2826, 0.3275911
        %v2830 = vmul.f32 %v2827, 0.3275911
        %v2831 = vadd.f32 %v2828, 1.0
        %v2832 = vadd.f32 %v2829, 1.0
        %v2833 = vadd.f32 %v2830, 1.0
        %v2834 = vrcp.pop %v2831
        %v2835 = vmul.f32 1.0, %v2834
        %v2836 = vrcp.pop %v2832
        %v2837 = vmul.f32 1.0, %v2836
        %v2838 = vrcp.pop %v2833
        %v2839 = vmul.f32 1.0, %v2838
        %v2840 = vmul.f32 %v2835, 1.0614054
        %v2841 = vmul.f32 %v2837, 1.0614054
        %v2842 = vmul.f32 %v2839, 1.0614054
        %v2843 = vadd.f32 %v2840, -1.4531521
        %v2844 = vadd.f32 %v2841, -1.4531521
        %v2845 = vadd.f32 %v2842, -1.4531521
        %v2846 = vmul.f32 %v2843, %v2835
        %v2847 = vmul.f32 %v2844, %v2837
        %v2848 = vmul.f32 %v2845, %v2839
        %v2849 = vadd.f32 %v2846, 1.4214138
        %v2850 = vadd.f32 %v2847, 1.4214138
        %v2851 = vadd.f32 %v2848, 1.4214138
        %v2852 = vmul.f32 %v2849, %v2835
        %v2853 = vmul.f32 %v2850, %v2837
        %v2854 = vmul.f32 %v2851, %v2839
        %v2855 = vadd.f32 %v2852, -0.28449672
        %v2856 = vadd.f32 %v2853, -0.28449672
        %v2857 = vadd.f32 %v2854, -0.28449672
        %v2858 = vmul.f32 %v2855, %v2835
        %v2859 = vmul.f32 %v2856, %v2837
        %v2860 = vmul.f32 %v2857, %v2839
        %v2861 = vadd.f32 %v2858, 0.2548296
        %v2862 = vadd.f32 %v2859, 0.2548296
        %v2863 = vadd.f32 %v2860, 0.2548296
        %v2864 = vmul.f32 %v2861, %v2835
        %v2865 = vmul.f32 %v2862, %v2837
        %v2866 = vmul.f32 %v2863, %v2839
        %v2867 = vsub.f32 0.0, %v2825
        %v2868 = vsub.f32 0.0, %v2826
        %v2869 = vsub.f32 0.0, %v2827
        %v2870 = vmul.f32 %v2867, %v2825
        %v2871 = vmul.f32 %v2868, %v2826
        %v2872 = vmul.f32 %v2869, %v2827
        %v2873 = vmul.f32 %v2870, 1.442695
        %v2874 = vpow.pop %v2873
        %v2875 = vmul.f32 %v2871, 1.442695
        %v2876 = vpow.pop %v2875
        %v2877 = vmul.f32 %v2872, 1.442695
        %v2878 = vpow.pop %v2877
        %v2879 = vmul.f32 %v2864, %v2874
        %v2880 = vmul.f32 %v2865, %v2876
        %v2881 = vmul.f32 %v2866, %v2878
        %v2882 = vsub.f32 1.0, %v2879
        %v2883 = vsub.f32 1.0, %v2880
        %v2884 = vsub.f32 1.0, %v2881
        %v2885 = vmul.f32 %v2822, %v2882
        %v2886 = vmul.f32 %v2823, %v2883
        %v2887 = vmul.f32 %v2824, %v2884
        %v2888 = vadd.f32 %v2885, 1.0
        %v2889 = vadd.f32 %v2886, 1.0
        %v2890 = vadd.f32 %v2887, 1.0
        %v2891 = vmul.f32 %v2813, %v2888
        %v2892 = vmul.f32 %v2814, %v2889
        %v2893 = vmul.f32 %v2815, %v2890
        %v2894 = vld [vmem:[#allocation37] sm:$0xf]
        %v2895 = vld [vmem:[#allocation38] sm:$0xf]
        %2899 = vrot.lane.b32.xlu0 %v2891, 25
        %v2900 = vpop.permute.xlu0 %2899
        %2901 = vrot.lane.b32.xlu0 %v2892, 25
        %v2902 = vpop.permute.xlu0 %2901
        %2903 = vrot.lane.b32.xlu0 %v2893, 25
        %v2904 = vpop.permute.xlu0 %2903
        %vm2905 = vcmask 203776
        %v2906 = vsel %vm2905, %v2900, %v2902
        %v2907 = vsel %vm2905, %v2902, %v2904
        %v2911 = vsel %vm2905, 0.0, %v2900
        %v2913 = vlaneseq
        %v2914 = vshrl.u32 %v2913, 7
        %v2915 = vsub.s32 0, %v2914
        %v2916 = vrot.slane %v1324, %v2915
        %v2917 = vlaneseq
        %v2918 = vshrl.u32 %v2917, 7
        %v2919 = vsub.s32 1, %v2918
        %v2920 = vrot.slane %v1324, %v2919
        %v2921 = vlaneseq
        %v2922 = vshrl.u32 %v2921, 7
        %v2923 = vsub.s32 2, %v2922
        %v2924 = vrot.slane %v1324, %v2923
        %v2928 = vmul.f32 %v2911, %v2916
        %v2929 = vmul.f32 %v2906, %v2920
        %v2930 = vmul.f32 %v2907, %v2924
        %2932 = vset.pattern.permute.xlu0 0
        %2933 = vperm.xlu0 %2932, %v2894
        %v2934 = vpop.permute.xlu0 %2933
        %v2936 = vmul.f32 %v2928, %v2934
        %v2937 = vmul.f32 %v2929, %v2934
        %v2938 = vmul.f32 %v2930, %v2934
        %v2939 = vadd.f32 %v2936, 0.0
        %v2940 = vadd.f32 %v2937, 0.0
        %v2941 = vadd.f32 %v2938, 0.0
        %2942 = vrot.lane.b32.xlu0 %v2891, 24
        %v2943 = vpop.permute.xlu0 %2942
        %2944 = vrot.lane.b32.xlu0 %v2892, 24
        %v2945 = vpop.permute.xlu0 %2944
        %2946 = vrot.lane.b32.xlu0 %v2893, 24
        %v2947 = vpop.permute.xlu0 %2946
        %vm2948 = vcmask 195584
        %v2949 = vsel %vm2948, %v2943, %v2945
        %v2950 = vsel %vm2948, %v2945, %v2947
        %v2954 = vsel %vm2948, 0.0, %v2943
        %2955 = vset.pattern.permute.xlu0 1
        %2956 = vperm.xlu0 %2955, %v2894
        %v2957 = vpop.permute.xlu0 %2956
        %v2959 = vmul.f32 %v2954, %v2957
        %v2960 = vmul.f32 %v2949, %v2957
        %v2961 = vmul.f32 %v2950, %v2957
        %v2962 = vadd.f32 %v2939, %v2959
        %v2963 = vadd.f32 %v2940, %v2960
        %v2964 = vadd.f32 %v2941, %v2961
        %2965 = vrot.lane.b32.xlu0 %v2891, 23
        %v2966 = vpop.permute.xlu0 %2965
        %2967 = vrot.lane.b32.xlu0 %v2892, 23
        %v2968 = vpop.permute.xlu0 %2967
        %2969 = vrot.lane.b32.xlu0 %v2893, 23
        %v2970 = vpop.permute.xlu0 %2969
        %vm2971 = vcmask 187392
        %v2972 = vsel %vm2971, %v2966, %v2968
        %v2973 = vsel %vm2971, %v2968, %v2970
        %v2977 = vsel %vm2971, 0.0, %v2966
        %v2979 = vlaneseq
        %v2980 = vshrl.u32 %v2979, 7
        %v2981 = vsub.s32 0, %v2980
        %v2982 = vrot.slane %v1325, %v2981
        %v2983 = vlaneseq
        %v2984 = vshrl.u32 %v2983, 7
        %v2985 = vsub.s32 1, %v2984
        %v2986 = vrot.slane %v1325, %v2985
        %v2987 = vlaneseq
        %v2988 = vshrl.u32 %v2987, 7
        %v2989 = vsub.s32 2, %v2988
        %v2990 = vrot.slane %v1325, %v2989
        %v2994 = vmul.f32 %v2977, %v2982
        %v2995 = vmul.f32 %v2972, %v2986
        %v2996 = vmul.f32 %v2973, %v2990
        %2997 = vset.pattern.permute.xlu0 2
        %2998 = vperm.xlu0 %2997, %v2894
        %v2999 = vpop.permute.xlu0 %2998
        %v3001 = vmul.f32 %v2994, %v2999
        %v3002 = vmul.f32 %v2995, %v2999
        %v3003 = vmul.f32 %v2996, %v2999
        %v3004 = vadd.f32 %v2962, %v3001
        %v3005 = vadd.f32 %v2963, %v3002
        %v3006 = vadd.f32 %v2964, %v3003
        %3007 = vrot.lane.b32.xlu0 %v2891, 1
        %v3008 = vpop.permute.xlu0 %3007
        %3009 = vrot.lane.b32.xlu0 %v2892, 1
        %v3010 = vpop.permute.xlu0 %3009
        %3011 = vrot.lane.b32.xlu0 %v2893, 1
        %v3012 = vpop.permute.xlu0 %3011
        %vm3013 = vcmask 7168
        %v3014 = vsel %vm3013, %v3008, %v3010
        %v3015 = vsel %vm3013, %v3010, %v3012
        %v3019 = vsel %vm3013, 0.0, %v3008
        %v3020 = vmul.f32 %v3019, %v2916
        %v3021 = vmul.f32 %v3014, %v2920
        %v3022 = vmul.f32 %v3015, %v2924
        %3023 = vset.pattern.permute.xlu0 3
        %3024 = vperm.xlu0 %3023, %v2894
        %v3025 = vpop.permute.xlu0 %3024
        %v3027 = vmul.f32 %v3020, %v3025
        %v3028 = vmul.f32 %v3021, %v3025
        %v3029 = vmul.f32 %v3022, %v3025
        %v3030 = vadd.f32 %v3004, %v3027
        %v3031 = vadd.f32 %v3005, %v3028
        %v3032 = vadd.f32 %v3006, %v3029
        %3033 = vset.pattern.permute.xlu0 4
        %3034 = vperm.xlu0 %3033, %v2894
        %v3035 = vpop.permute.xlu0 %3034
        %v3037 = vmul.f32 %v2891, %v3035
        %v3038 = vmul.f32 %v2892, %v3035
        %v3039 = vmul.f32 %v2893, %v3035
        %v3040 = vadd.f32 %v3030, %v3037
        %v3041 = vadd.f32 %v3031, %v3038
        %v3042 = vadd.f32 %v3032, %v3039
        %3043 = vrot.lane.b32.xlu0 %v2891, 127
        %v3044 = vpop.permute.xlu0 %3043
        %3045 = vrot.lane.b32.xlu0 %v2892, 127
        %v3046 = vpop.permute.xlu0 %3045
        %3047 = vrot.lane.b32.xlu0 %v2893, 127
        %v3048 = vpop.permute.xlu0 %3047
        %vm3049 = vcmask 1039360
        %v3050 = vsel %vm3049, %v3044, %v3046
        %v3051 = vsel %vm3049, %v3046, %v3048
        %v3055 = vsel %vm3049, %v3048, 0.0
        %v3056 = vmul.f32 %v3050, %v2982
        %v3057 = vmul.f32 %v3051, %v2986
        %v3058 = vmul.f32 %v3055, %v2990
        %3059 = vset.pattern.permute.xlu0 5
        %3060 = vperm.xlu0 %3059, %v2894
        %v3061 = vpop.permute.xlu0 %3060
        %v3063 = vmul.f32 %v3056, %v3061
        %v3064 = vmul.f32 %v3057, %v3061
        %v3065 = vmul.f32 %v3058, %v3061
        %v3066 = vadd.f32 %v3040, %v3063
        %v3067 = vadd.f32 %v3041, %v3064
        %v3068 = vadd.f32 %v3042, %v3065
        %3069 = vrot.lane.b32.xlu0 %v2891, 105
        %v3070 = vpop.permute.xlu0 %3069
        %3071 = vrot.lane.b32.xlu0 %v2892, 105
        %v3072 = vpop.permute.xlu0 %3071
        %3073 = vrot.lane.b32.xlu0 %v2893, 105
        %v3074 = vpop.permute.xlu0 %3073
        %vm3075 = vcmask 859136
        %v3076 = vsel %vm3075, %v3070, %v3072
        %v3077 = vsel %vm3075, %v3072, %v3074
        %v3081 = vsel %vm3075, %v3074, 0.0
        %v3082 = vmul.f32 %v3076, %v2916
        %v3083 = vmul.f32 %v3077, %v2920
        %v3084 = vmul.f32 %v3081, %v2924
        %3085 = vset.pattern.permute.xlu0 6
        %3086 = vperm.xlu0 %3085, %v2894
        %v3087 = vpop.permute.xlu0 %3086
        %v3089 = vmul.f32 %v3082, %v3087
        %v3090 = vmul.f32 %v3083, %v3087
        %v3091 = vmul.f32 %v3084, %v3087
        %v3092 = vadd.f32 %v3066, %v3089
        %v3093 = vadd.f32 %v3067, %v3090
        %v3094 = vadd.f32 %v3068, %v3091
        %3095 = vrot.lane.b32.xlu0 %v2891, 104
        %v3096 = vpop.permute.xlu0 %3095
        %3097 = vrot.lane.b32.xlu0 %v2892, 104
        %v3098 = vpop.permute.xlu0 %3097
        %3099 = vrot.lane.b32.xlu0 %v2893, 104
        %v3100 = vpop.permute.xlu0 %3099
        %vm3101 = vcmask 850944
        %v3102 = vsel %vm3101, %v3096, %v3098
        %v3103 = vsel %vm3101, %v3098, %v3100
        %v3107 = vsel %vm3101, %v3100, 0.0
        %3108 = vset.pattern.permute.xlu0 7
        %3109 = vperm.xlu0 %3108, %v2894
        %v3110 = vpop.permute.xlu0 %3109
        %v3112 = vmul.f32 %v3102, %v3110
        %v3113 = vmul.f32 %v3103, %v3110
        %v3114 = vmul.f32 %v3107, %v3110
        %v3115 = vadd.f32 %v3092, %v3112
        %v3116 = vadd.f32 %v3093, %v3113
        %v3117 = vadd.f32 %v3094, %v3114
        %3118 = vrot.lane.b32.xlu0 %v2891, 103
        %v3119 = vpop.permute.xlu0 %3118
        %3120 = vrot.lane.b32.xlu0 %v2892, 103
        %v3121 = vpop.permute.xlu0 %3120
        %3122 = vrot.lane.b32.xlu0 %v2893, 103
        %v3123 = vpop.permute.xlu0 %3122
        %vm3124 = vcmask 842752
        %v3125 = vsel %vm3124, %v3119, %v3121
        %v3126 = vsel %vm3124, %v3121, %v3123
        %v3130 = vsel %vm3124, %v3123, 0.0
        %v3131 = vmul.f32 %v3125, %v2982
        %v3132 = vmul.f32 %v3126, %v2986
        %v3133 = vmul.f32 %v3130, %v2990
        %3134 = vset.pattern.permute.xlu0 8
        %3135 = vperm.xlu0 %3134, %v2894
        %v3136 = vpop.permute.xlu0 %3135
        %v3138 = vmul.f32 %v3131, %v3136
        %v3139 = vmul.f32 %v3132, %v3136
        %v3140 = vmul.f32 %v3133, %v3136
        %v3141 = vadd.f32 %v3115, %v3138
        %v3142 = vadd.f32 %v3116, %v3139
        %v3143 = vadd.f32 %v3117, %v3140
        %3145 = vset.pattern.permute.xlu0 0
        %3146 = vperm.xlu0 %3145, %v2895
        %v3147 = vpop.permute.xlu0 %3146
        %v3149 = vadd.f32 %v3141, %v3147
        %v3150 = vadd.f32 %v3142, %v3147
        %v3151 = vadd.f32 %v3143, %v3147
        %v3155 = vrot.slane %v3149, 4
        %v3156 = vrot.slane %v3150, 4
        %v3157 = vrot.slane %v3151, 4
        %v3161 = vsel %vm2665, %v2626, %v2637
        %v3162 = vsel %vm2665, %v2627, %v2638
        %v3163 = vsel %vm2665, %v2628, %v2639
        %v3164 = vsel %vm2665, %v2645, %v3155
        %v3165 = vsel %vm2665, %v2646, %v3156
        %v3166 = vsel %vm2665, %v2647, %v3157
        %v3167 = vld [vmem:[#allocation43] sm:$0xff]
        %v3168 = vld [vmem:[#allocation43 + $0x8] sm:$0xff]
        %v3169 = vld [vmem:[#allocation44] sm:$0xff]
        %v3170 = vld [vmem:[#allocation44 + $0x8] sm:$0xff]
        %v3171 = vadd.f32 %v3161, %v3164
        %v3172 = vrot.slane %v3171, 4
        %v3173 = vadd.f32 %v3171, %v3172
        %v3174 = vrot.slane %v3173, 2
        %v3175 = vadd.f32 %v3173, %v3174
        %v3176 = vrot.slane %v3175, 1
        %v3177 = vadd.f32 %v3175, %v3176
        %v3178 = vadd.f32 %v3162, %v3165
        %v3179 = vrot.slane %v3178, 4
        %v3180 = vadd.f32 %v3178, %v3179
        %v3181 = vrot.slane %v3180, 2
        %v3182 = vadd.f32 %v3180, %v3181
        %v3183 = vrot.slane %v3182, 1
        %v3184 = vadd.f32 %v3182, %v3183
        %v3185 = vadd.f32 %v3163, %v3166
        %v3186 = vrot.slane %v3185, 4
        %v3187 = vadd.f32 %v3185, %v3186
        %v3188 = vrot.slane %v3187, 2
        %v3189 = vadd.f32 %v3187, %v3188
        %v3190 = vrot.slane %v3189, 1
        %v3191 = vadd.f32 %v3189, %v3190
        %v3192 = vmul.f32 %v3177, %v2537
        %v3193 = vmul.f32 %v3184, %v2537
        %v3194 = vmul.f32 %v3191, %v2537
        %v3195 = vsub.f32 %v3161, %v3192
        %v3196 = vsub.f32 %v3162, %v3193
        %v3197 = vsub.f32 %v3163, %v3194
        %v3198 = vsub.f32 %v3164, %v3192
        %v3199 = vsub.f32 %v3165, %v3193
        %v3200 = vsub.f32 %v3166, %v3194
        %v3201 = vmul.f32 %v3195, %v3195
        %v3202 = vmul.f32 %v3196, %v3196
        %v3203 = vmul.f32 %v3197, %v3197
        %v3204 = vmul.f32 %v3198, %v3198
        %v3205 = vmul.f32 %v3199, %v3199
        %v3206 = vmul.f32 %v3200, %v3200
        %v3207 = vadd.f32 %v3201, %v3204
        %v3208 = vrot.slane %v3207, 4
        %v3209 = vadd.f32 %v3207, %v3208
        %v3210 = vrot.slane %v3209, 2
        %v3211 = vadd.f32 %v3209, %v3210
        %v3212 = vrot.slane %v3211, 1
        %v3213 = vadd.f32 %v3211, %v3212
        %v3214 = vadd.f32 %v3202, %v3205
        %v3215 = vrot.slane %v3214, 4
        %v3216 = vadd.f32 %v3214, %v3215
        %v3217 = vrot.slane %v3216, 2
        %v3218 = vadd.f32 %v3216, %v3217
        %v3219 = vrot.slane %v3218, 1
        %v3220 = vadd.f32 %v3218, %v3219
        %v3221 = vadd.f32 %v3203, %v3206
        %v3222 = vrot.slane %v3221, 4
        %v3223 = vadd.f32 %v3221, %v3222
        %v3224 = vrot.slane %v3223, 2
        %v3225 = vadd.f32 %v3223, %v3224
        %v3226 = vrot.slane %v3225, 1
        %v3227 = vadd.f32 %v3225, %v3226
        %v3228 = vmul.f32 %v3213, %v2537
        %v3229 = vmul.f32 %v3220, %v2537
        %v3230 = vmul.f32 %v3227, %v2537
        %v3231 = vadd.f32 %v3228, 1e-06
        %v3232 = vadd.f32 %v3229, 1e-06
        %v3233 = vadd.f32 %v3230, 1e-06
        %v3234 = vrsqrt.pop %v3231
        %v3235 = vrsqrt.pop %v3232
        %v3236 = vrsqrt.pop %v3233
        %v3237 = vmul.f32 %v3195, %v3234
        %v3238 = vmul.f32 %v3196, %v3235
        %v3239 = vmul.f32 %v3197, %v3236
        %v3240 = vmul.f32 %v3198, %v3234
        %v3241 = vmul.f32 %v3199, %v3235
        %v3242 = vmul.f32 %v3200, %v3236
        %3244 = vset.pattern.permute.xlu0 0
        %3245 = vperm.xlu0 %3244, %v3167
        %v3246 = vpop.permute.xlu0 %3245
        %3249 = vset.pattern.permute.xlu0 0
        %3250 = vperm.xlu0 %3249, %v3168
        %v3251 = vpop.permute.xlu0 %3250
        %v3253 = vmul.f32 %v3237, %v3246
        %v3254 = vmul.f32 %v3238, %v3246
        %v3255 = vmul.f32 %v3239, %v3246
        %v3256 = vmul.f32 %v3240, %v3251
        %v3257 = vmul.f32 %v3241, %v3251
        %v3258 = vmul.f32 %v3242, %v3251
        %3260 = vset.pattern.permute.xlu0 0
        %3261 = vperm.xlu0 %3260, %v3169
        %v3262 = vpop.permute.xlu0 %3261
        %3265 = vset.pattern.permute.xlu0 0
        %3266 = vperm.xlu0 %3265, %v3170
        %v3267 = vpop.permute.xlu0 %3266
        %v3269 = vadd.f32 %v3253, %v3262
        %v3270 = vadd.f32 %v3254, %v3262
        %v3271 = vadd.f32 %v3255, %v3262
        %v3272 = vadd.f32 %v3256, %v3267
        %v3273 = vadd.f32 %v3257, %v3267
        %v3274 = vadd.f32 %v3258, %v3267
        %v3275 = vld [vmem:[#allocation46] sm:$0xff]
        %v3276 = vld [vmem:[#allocation46 + $0x8] sm:$0xff]
        %v3277 = vld [vmem:[#allocation47] sm:$0xff]
        %v3278 = vld [vmem:[#allocation47 + $0x8] sm:$0xff]
        %3285 = vrot.lane.b32.xlu0 %v3269, 25
        %v3286 = vpop.permute.xlu0 %3285
        %3287 = vrot.lane.b32.xlu0 %v3270, 25
        %v3288 = vpop.permute.xlu0 %3287
        %3289 = vrot.lane.b32.xlu0 %v3271, 25
        %v3290 = vpop.permute.xlu0 %3289
        %3291 = vrot.lane.b32.xlu0 %v3272, 25
        %v3292 = vpop.permute.xlu0 %3291
        %3293 = vrot.lane.b32.xlu0 %v3273, 25
        %v3294 = vpop.permute.xlu0 %3293
        %3295 = vrot.lane.b32.xlu0 %v3274, 25
        %v3296 = vpop.permute.xlu0 %3295
        %v3297 = vsel %vm2905, %v3286, %v3288
        %v3298 = vsel %vm2905, %v3288, %v3290
        %v3299 = vsel %vm2905, %v3292, %v3294
        %v3300 = vsel %vm2905, %v3294, %v3296
        %v3307 = vsel %vm2905, 0.0, %v3286
        %v3308 = vsel %vm2905, 0.0, %v3292
        %v3309 = vmul.f32 %v3307, %v2916
        %v3310 = vmul.f32 %v3297, %v2920
        %v3311 = vmul.f32 %v3298, %v2924
        %v3312 = vmul.f32 %v3308, %v2916
        %v3313 = vmul.f32 %v3299, %v2920
        %v3314 = vmul.f32 %v3300, %v2924
        %3316 = vset.pattern.permute.xlu0 0
        %3317 = vperm.xlu0 %3316, %v3275
        %v3318 = vpop.permute.xlu0 %3317
        %3321 = vset.pattern.permute.xlu0 0
        %3322 = vperm.xlu0 %3321, %v3276
        %v3323 = vpop.permute.xlu0 %3322
        %v3325 = vmul.f32 %v3309, %v3318
        %v3326 = vmul.f32 %v3310, %v3318
        %v3327 = vmul.f32 %v3311, %v3318
        %v3328 = vmul.f32 %v3312, %v3323
        %v3329 = vmul.f32 %v3313, %v3323
        %v3330 = vmul.f32 %v3314, %v3323
        %v3331 = vadd.f32 %v3325, 0.0
        %v3332 = vadd.f32 %v3326, 0.0
        %v3333 = vadd.f32 %v3327, 0.0
        %v3334 = vadd.f32 %v3328, 0.0
        %v3335 = vadd.f32 %v3329, 0.0
        %v3336 = vadd.f32 %v3330, 0.0
        %3337 = vrot.lane.b32.xlu0 %v3269, 24
        %v3338 = vpop.permute.xlu0 %3337
        %3339 = vrot.lane.b32.xlu0 %v3270, 24
        %v3340 = vpop.permute.xlu0 %3339
        %3341 = vrot.lane.b32.xlu0 %v3271, 24
        %v3342 = vpop.permute.xlu0 %3341
        %3343 = vrot.lane.b32.xlu0 %v3272, 24
        %v3344 = vpop.permute.xlu0 %3343
        %3345 = vrot.lane.b32.xlu0 %v3273, 24
        %v3346 = vpop.permute.xlu0 %3345
        %3347 = vrot.lane.b32.xlu0 %v3274, 24
        %v3348 = vpop.permute.xlu0 %3347
        %v3349 = vsel %vm2948, %v3338, %v3340
        %v3350 = vsel %vm2948, %v3340, %v3342
        %v3351 = vsel %vm2948, %v3344, %v3346
        %v3352 = vsel %vm2948, %v3346, %v3348
        %v3359 = vsel %vm2948, 0.0, %v3338
        %v3360 = vsel %vm2948, 0.0, %v3344
        %3361 = vset.pattern.permute.xlu0 1
        %3362 = vperm.xlu0 %3361, %v3275
        %v3363 = vpop.permute.xlu0 %3362
        %3365 = vset.pattern.permute.xlu0 1
        %3366 = vperm.xlu0 %3365, %v3276
        %v3367 = vpop.permute.xlu0 %3366
        %v3369 = vmul.f32 %v3359, %v3363
        %v3370 = vmul.f32 %v3349, %v3363
        %v3371 = vmul.f32 %v3350, %v3363
        %v3372 = vmul.f32 %v3360, %v3367
        %v3373 = vmul.f32 %v3351, %v3367
        %v3374 = vmul.f32 %v3352, %v3367
        %v3375 = vadd.f32 %v3331, %v3369
        %v3376 = vadd.f32 %v3332, %v3370
        %v3377 = vadd.f32 %v3333, %v3371
        %v3378 = vadd.f32 %v3334, %v3372
        %v3379 = vadd.f32 %v3335, %v3373
        %v3380 = vadd.f32 %v3336, %v3374
        %3381 = vrot.lane.b32.xlu0 %v3269, 23
        %v3382 = vpop.permute.xlu0 %3381
        %3383 = vrot.lane.b32.xlu0 %v3270, 23
        %v3384 = vpop.permute.xlu0 %3383
        %3385 = vrot.lane.b32.xlu0 %v3271, 23
        %v3386 = vpop.permute.xlu0 %3385
        %3387 = vrot.lane.b32.xlu0 %v3272, 23
        %v3388 = vpop.permute.xlu0 %3387
        %3389 = vrot.lane.b32.xlu0 %v3273, 23
        %v3390 = vpop.permute.xlu0 %3389
        %3391 = vrot.lane.b32.xlu0 %v3274, 23
        %v3392 = vpop.permute.xlu0 %3391
        %v3393 = vsel %vm2971, %v3382, %v3384
        %v3394 = vsel %vm2971, %v3384, %v3386
        %v3395 = vsel %vm2971, %v3388, %v3390
        %v3396 = vsel %vm2971, %v3390, %v3392
        %v3403 = vsel %vm2971, 0.0, %v3382
        %v3404 = vsel %vm2971, 0.0, %v3388
        %v3405 = vmul.f32 %v3403, %v2982
        %v3406 = vmul.f32 %v3393, %v2986
        %v3407 = vmul.f32 %v3394, %v2990
        %v3408 = vmul.f32 %v3404, %v2982
        %v3409 = vmul.f32 %v3395, %v2986
        %v3410 = vmul.f32 %v3396, %v2990
        %3411 = vset.pattern.permute.xlu0 2
        %3412 = vperm.xlu0 %3411, %v3275
        %v3413 = vpop.permute.xlu0 %3412
        %3415 = vset.pattern.permute.xlu0 2
        %3416 = vperm.xlu0 %3415, %v3276
        %v3417 = vpop.permute.xlu0 %3416
        %v3419 = vmul.f32 %v3405, %v3413
        %v3420 = vmul.f32 %v3406, %v3413
        %v3421 = vmul.f32 %v3407, %v3413
        %v3422 = vmul.f32 %v3408, %v3417
        %v3423 = vmul.f32 %v3409, %v3417
        %v3424 = vmul.f32 %v3410, %v3417
        %v3425 = vadd.f32 %v3375, %v3419
        %v3426 = vadd.f32 %v3376, %v3420
        %v3427 = vadd.f32 %v3377, %v3421
        %v3428 = vadd.f32 %v3378, %v3422
        %v3429 = vadd.f32 %v3379, %v3423
        %v3430 = vadd.f32 %v3380, %v3424
        %3431 = vrot.lane.b32.xlu0 %v3269, 1
        %v3432 = vpop.permute.xlu0 %3431
        %3433 = vrot.lane.b32.xlu0 %v3270, 1
        %v3434 = vpop.permute.xlu0 %3433
        %3435 = vrot.lane.b32.xlu0 %v3271, 1
        %v3436 = vpop.permute.xlu0 %3435
        %3437 = vrot.lane.b32.xlu0 %v3272, 1
        %v3438 = vpop.permute.xlu0 %3437
        %3439 = vrot.lane.b32.xlu0 %v3273, 1
        %v3440 = vpop.permute.xlu0 %3439
        %3441 = vrot.lane.b32.xlu0 %v3274, 1
        %v3442 = vpop.permute.xlu0 %3441
        %v3443 = vsel %vm3013, %v3432, %v3434
        %v3444 = vsel %vm3013, %v3434, %v3436
        %v3445 = vsel %vm3013, %v3438, %v3440
        %v3446 = vsel %vm3013, %v3440, %v3442
        %v3453 = vsel %vm3013, 0.0, %v3432
        %v3454 = vsel %vm3013, 0.0, %v3438
        %v3455 = vmul.f32 %v3453, %v2916
        %v3456 = vmul.f32 %v3443, %v2920
        %v3457 = vmul.f32 %v3444, %v2924
        %v3458 = vmul.f32 %v3454, %v2916
        %v3459 = vmul.f32 %v3445, %v2920
        %v3460 = vmul.f32 %v3446, %v2924
        %3461 = vset.pattern.permute.xlu0 3
        %3462 = vperm.xlu0 %3461, %v3275
        %v3463 = vpop.permute.xlu0 %3462
        %3465 = vset.pattern.permute.xlu0 3
        %3466 = vperm.xlu0 %3465, %v3276
        %v3467 = vpop.permute.xlu0 %3466
        %v3469 = vmul.f32 %v3455, %v3463
        %v3470 = vmul.f32 %v3456, %v3463
        %v3471 = vmul.f32 %v3457, %v3463
        %v3472 = vmul.f32 %v3458, %v3467
        %v3473 = vmul.f32 %v3459, %v3467
        %v3474 = vmul.f32 %v3460, %v3467
        %v3475 = vadd.f32 %v3425, %v3469
        %v3476 = vadd.f32 %v3426, %v3470
        %v3477 = vadd.f32 %v3427, %v3471
        %v3478 = vadd.f32 %v3428, %v3472
        %v3479 = vadd.f32 %v3429, %v3473
        %v3480 = vadd.f32 %v3430, %v3474
        %3481 = vset.pattern.permute.xlu0 4
        %3482 = vperm.xlu0 %3481, %v3275
        %v3483 = vpop.permute.xlu0 %3482
        %3485 = vset.pattern.permute.xlu0 4
        %3486 = vperm.xlu0 %3485, %v3276
        %v3487 = vpop.permute.xlu0 %3486
        %v3489 = vmul.f32 %v3269, %v3483
        %v3490 = vmul.f32 %v3270, %v3483
        %v3491 = vmul.f32 %v3271, %v3483
        %v3492 = vmul.f32 %v3272, %v3487
        %v3493 = vmul.f32 %v3273, %v3487
        %v3494 = vmul.f32 %v3274, %v3487
        %v3495 = vadd.f32 %v3475, %v3489
        %v3496 = vadd.f32 %v3476, %v3490
        %v3497 = vadd.f32 %v3477, %v3491
        %v3498 = vadd.f32 %v3478, %v3492
        %v3499 = vadd.f32 %v3479, %v3493
        %v3500 = vadd.f32 %v3480, %v3494
        %3501 = vrot.lane.b32.xlu0 %v3269, 127
        %v3502 = vpop.permute.xlu0 %3501
        %3503 = vrot.lane.b32.xlu0 %v3270, 127
        %v3504 = vpop.permute.xlu0 %3503
        %3505 = vrot.lane.b32.xlu0 %v3271, 127
        %v3506 = vpop.permute.xlu0 %3505
        %3507 = vrot.lane.b32.xlu0 %v3272, 127
        %v3508 = vpop.permute.xlu0 %3507
        %3509 = vrot.lane.b32.xlu0 %v3273, 127
        %v3510 = vpop.permute.xlu0 %3509
        %3511 = vrot.lane.b32.xlu0 %v3274, 127
        %v3512 = vpop.permute.xlu0 %3511
        %v3513 = vsel %vm3049, %v3502, %v3504
        %v3514 = vsel %vm3049, %v3504, %v3506
        %v3515 = vsel %vm3049, %v3508, %v3510
        %v3516 = vsel %vm3049, %v3510, %v3512
        %v3523 = vsel %vm3049, %v3506, 0.0
        %v3524 = vsel %vm3049, %v3512, 0.0
        %v3525 = vmul.f32 %v3513, %v2982
        %v3526 = vmul.f32 %v3514, %v2986
        %v3527 = vmul.f32 %v3523, %v2990
        %v3528 = vmul.f32 %v3515, %v2982
        %v3529 = vmul.f32 %v3516, %v2986
        %v3530 = vmul.f32 %v3524, %v2990
        %3531 = vset.pattern.permute.xlu0 5
        %3532 = vperm.xlu0 %3531, %v3275
        %v3533 = vpop.permute.xlu0 %3532
        %3535 = vset.pattern.permute.xlu0 5
        %3536 = vperm.xlu0 %3535, %v3276
        %v3537 = vpop.permute.xlu0 %3536
        %v3539 = vmul.f32 %v3525, %v3533
        %v3540 = vmul.f32 %v3526, %v3533
        %v3541 = vmul.f32 %v3527, %v3533
        %v3542 = vmul.f32 %v3528, %v3537
        %v3543 = vmul.f32 %v3529, %v3537
        %v3544 = vmul.f32 %v3530, %v3537
        %v3545 = vadd.f32 %v3495, %v3539
        %v3546 = vadd.f32 %v3496, %v3540
        %v3547 = vadd.f32 %v3497, %v3541
        %v3548 = vadd.f32 %v3498, %v3542
        %v3549 = vadd.f32 %v3499, %v3543
        %v3550 = vadd.f32 %v3500, %v3544
        %3551 = vrot.lane.b32.xlu0 %v3269, 105
        %v3552 = vpop.permute.xlu0 %3551
        %3553 = vrot.lane.b32.xlu0 %v3270, 105
        %v3554 = vpop.permute.xlu0 %3553
        %3555 = vrot.lane.b32.xlu0 %v3271, 105
        %v3556 = vpop.permute.xlu0 %3555
        %3557 = vrot.lane.b32.xlu0 %v3272, 105
        %v3558 = vpop.permute.xlu0 %3557
        %3559 = vrot.lane.b32.xlu0 %v3273, 105
        %v3560 = vpop.permute.xlu0 %3559
        %3561 = vrot.lane.b32.xlu0 %v3274, 105
        %v3562 = vpop.permute.xlu0 %3561
        %v3563 = vsel %vm3075, %v3552, %v3554
        %v3564 = vsel %vm3075, %v3554, %v3556
        %v3565 = vsel %vm3075, %v3558, %v3560
        %v3566 = vsel %vm3075, %v3560, %v3562
        %v3573 = vsel %vm3075, %v3556, 0.0
        %v3574 = vsel %vm3075, %v3562, 0.0
        %v3575 = vmul.f32 %v3563, %v2916
        %v3576 = vmul.f32 %v3564, %v2920
        %v3577 = vmul.f32 %v3573, %v2924
        %v3578 = vmul.f32 %v3565, %v2916
        %v3579 = vmul.f32 %v3566, %v2920
        %v3580 = vmul.f32 %v3574, %v2924
        %3581 = vset.pattern.permute.xlu0 6
        %3582 = vperm.xlu0 %3581, %v3275
        %v3583 = vpop.permute.xlu0 %3582
        %3585 = vset.pattern.permute.xlu0 6
        %3586 = vperm.xlu0 %3585, %v3276
        %v3587 = vpop.permute.xlu0 %3586
        %v3589 = vmul.f32 %v3575, %v3583
        %v3590 = vmul.f32 %v3576, %v3583
        %v3591 = vmul.f32 %v3577, %v3583
        %v3592 = vmul.f32 %v3578, %v3587
        %v3593 = vmul.f32 %v3579, %v3587
        %v3594 = vmul.f32 %v3580, %v3587
        %v3595 = vadd.f32 %v3545, %v3589
        %v3596 = vadd.f32 %v3546, %v3590
        %v3597 = vadd.f32 %v3547, %v3591
        %v3598 = vadd.f32 %v3548, %v3592
        %v3599 = vadd.f32 %v3549, %v3593
        %v3600 = vadd.f32 %v3550, %v3594
        %3601 = vrot.lane.b32.xlu0 %v3269, 104
        %v3602 = vpop.permute.xlu0 %3601
        %3603 = vrot.lane.b32.xlu0 %v3270, 104
        %v3604 = vpop.permute.xlu0 %3603
        %3605 = vrot.lane.b32.xlu0 %v3271, 104
        %v3606 = vpop.permute.xlu0 %3605
        %3607 = vrot.lane.b32.xlu0 %v3272, 104
        %v3608 = vpop.permute.xlu0 %3607
        %3609 = vrot.lane.b32.xlu0 %v3273, 104
        %v3610 = vpop.permute.xlu0 %3609
        %3611 = vrot.lane.b32.xlu0 %v3274, 104
        %v3612 = vpop.permute.xlu0 %3611
        %v3613 = vsel %vm3101, %v3602, %v3604
        %v3614 = vsel %vm3101, %v3604, %v3606
        %v3615 = vsel %vm3101, %v3608, %v3610
        %v3616 = vsel %vm3101, %v3610, %v3612
        %v3623 = vsel %vm3101, %v3606, 0.0
        %v3624 = vsel %vm3101, %v3612, 0.0
        %3625 = vset.pattern.permute.xlu0 7
        %3626 = vperm.xlu0 %3625, %v3275
        %v3627 = vpop.permute.xlu0 %3626
        %3629 = vset.pattern.permute.xlu0 7
        %3630 = vperm.xlu0 %3629, %v3276
        %v3631 = vpop.permute.xlu0 %3630
        %v3633 = vmul.f32 %v3613, %v3627
        %v3634 = vmul.f32 %v3614, %v3627
        %v3635 = vmul.f32 %v3623, %v3627
        %v3636 = vmul.f32 %v3615, %v3631
        %v3637 = vmul.f32 %v3616, %v3631
        %v3638 = vmul.f32 %v3624, %v3631
        %v3639 = vadd.f32 %v3595, %v3633
        %v3640 = vadd.f32 %v3596, %v3634
        %v3641 = vadd.f32 %v3597, %v3635
        %v3642 = vadd.f32 %v3598, %v3636
        %v3643 = vadd.f32 %v3599, %v3637
        %v3644 = vadd.f32 %v3600, %v3638
        %3645 = vrot.lane.b32.xlu0 %v3269, 103
        %v3646 = vpop.permute.xlu0 %3645
        %3647 = vrot.lane.b32.xlu0 %v3270, 103
        %v3648 = vpop.permute.xlu0 %3647
        %3649 = vrot.lane.b32.xlu0 %v3271, 103
        %v3650 = vpop.permute.xlu0 %3649
        %3651 = vrot.lane.b32.xlu0 %v3272, 103
        %v3652 = vpop.permute.xlu0 %3651
        %3653 = vrot.lane.b32.xlu0 %v3273, 103
        %v3654 = vpop.permute.xlu0 %3653
        %3655 = vrot.lane.b32.xlu0 %v3274, 103
        %v3656 = vpop.permute.xlu0 %3655
        %v3657 = vsel %vm3124, %v3646, %v3648
        %v3658 = vsel %vm3124, %v3648, %v3650
        %v3659 = vsel %vm3124, %v3652, %v3654
        %v3660 = vsel %vm3124, %v3654, %v3656
        %v3667 = vsel %vm3124, %v3650, 0.0
        %v3668 = vsel %vm3124, %v3656, 0.0
        %v3669 = vmul.f32 %v3657, %v2982
        %v3670 = vmul.f32 %v3658, %v2986
        %v3671 = vmul.f32 %v3667, %v2990
        %v3672 = vmul.f32 %v3659, %v2982
        %v3673 = vmul.f32 %v3660, %v2986
        %v3674 = vmul.f32 %v3668, %v2990
        %3675 = vset.pattern.permute.xlu0 8
        %3676 = vperm.xlu0 %3675, %v3275
        %v3677 = vpop.permute.xlu0 %3676
        %3679 = vset.pattern.permute.xlu0 8
        %3680 = vperm.xlu0 %3679, %v3276
        %v3681 = vpop.permute.xlu0 %3680
        %v3683 = vmul.f32 %v3669, %v3677
        %v3684 = vmul.f32 %v3670, %v3677
        %v3685 = vmul.f32 %v3671, %v3677
        %v3686 = vmul.f32 %v3672, %v3681
        %v3687 = vmul.f32 %v3673, %v3681
        %v3688 = vmul.f32 %v3674, %v3681
        %v3689 = vadd.f32 %v3639, %v3683
        %v3690 = vadd.f32 %v3640, %v3684
        %v3691 = vadd.f32 %v3641, %v3685
        %v3692 = vadd.f32 %v3642, %v3686
        %v3693 = vadd.f32 %v3643, %v3687
        %v3694 = vadd.f32 %v3644, %v3688
        %3696 = vset.pattern.permute.xlu0 0
        %3697 = vperm.xlu0 %3696, %v3277
        %v3698 = vpop.permute.xlu0 %3697
        %3701 = vset.pattern.permute.xlu0 0
        %3702 = vperm.xlu0 %3701, %v3278
        %v3703 = vpop.permute.xlu0 %3702
        %v3705 = vadd.f32 %v3689, %v3698
        %v3706 = vadd.f32 %v3690, %v3698
        %v3707 = vadd.f32 %v3691, %v3698
        %v3708 = vadd.f32 %v3692, %v3703
        %v3709 = vadd.f32 %v3693, %v3703
        %v3710 = vadd.f32 %v3694, %v3703
        %v3711 = vmul.f32 %v3705, 0.5
        %v3712 = vmul.f32 %v3706, 0.5
        %v3713 = vmul.f32 %v3707, 0.5
        %v3714 = vmul.f32 %v3708, 0.5
        %v3715 = vmul.f32 %v3709, 0.5
        %v3716 = vmul.f32 %v3710, 0.5
        %v3717 = vmul.f32 %v3705, 0.70710677
        %v3718 = vmul.f32 %v3706, 0.70710677
        %v3719 = vmul.f32 %v3707, 0.70710677
        %v3720 = vmul.f32 %v3708, 0.70710677
        %v3721 = vmul.f32 %v3709, 0.70710677
        %v3722 = vmul.f32 %v3710, 0.70710677
        %vm3723 = vcmp.ge.f32.partialorder %v3717, 0.0
        %vm3724 = vcmp.ge.f32.partialorder %v3718, 0.0
        %vm3725 = vcmp.ge.f32.partialorder %v3719, 0.0
        %vm3726 = vcmp.ge.f32.partialorder %v3720, 0.0
        %vm3727 = vcmp.ge.f32.partialorder %v3721, 0.0
        %vm3728 = vcmp.ge.f32.partialorder %v3722, 0.0
        %v3729 = vsel %vm3723, 1.0, -1.0
        %v3730 = vsel %vm3724, 1.0, -1.0
        %v3731 = vsel %vm3725, 1.0, -1.0
        %v3732 = vsel %vm3726, 1.0, -1.0
        %v3733 = vsel %vm3727, 1.0, -1.0
        %v3734 = vsel %vm3728, 1.0, -1.0
        %v3735 = vand.u32 2147483647, %v3717
        %v3736 = vand.u32 2147483647, %v3718
        %v3737 = vand.u32 2147483647, %v3719
        %v3738 = vand.u32 2147483647, %v3720
        %v3739 = vand.u32 2147483647, %v3721
        %v3740 = vand.u32 2147483647, %v3722
        %v3741 = vmul.f32 %v3735, 0.3275911
        %v3742 = vmul.f32 %v3736, 0.3275911
        %v3743 = vmul.f32 %v3737, 0.3275911
        %v3744 = vmul.f32 %v3738, 0.3275911
        %v3745 = vmul.f32 %v3739, 0.3275911
        %v3746 = vmul.f32 %v3740, 0.3275911
        %v3747 = vadd.f32 %v3741, 1.0
        %v3748 = vadd.f32 %v3742, 1.0
        %v3749 = vadd.f32 %v3743, 1.0
        %v3750 = vadd.f32 %v3744, 1.0
        %v3751 = vadd.f32 %v3745, 1.0
        %v3752 = vadd.f32 %v3746, 1.0
        %v3753 = vrcp.pop %v3747
        %v3754 = vmul.f32 1.0, %v3753
        %v3755 = vrcp.pop %v3748
        %v3756 = vmul.f32 1.0, %v3755
        %v3757 = vrcp.pop %v3749
        %v3758 = vmul.f32 1.0, %v3757
        %v3759 = vrcp.pop %v3750
        %v3760 = vmul.f32 1.0, %v3759
        %v3761 = vrcp.pop %v3751
        %v3762 = vmul.f32 1.0, %v3761
        %v3763 = vrcp.pop %v3752
        %v3764 = vmul.f32 1.0, %v3763
        %v3765 = vmul.f32 %v3754, 1.0614054
        %v3766 = vmul.f32 %v3756, 1.0614054
        %v3767 = vmul.f32 %v3758, 1.0614054
        %v3768 = vmul.f32 %v3760, 1.0614054
        %v3769 = vmul.f32 %v3762, 1.0614054
        %v3770 = vmul.f32 %v3764, 1.0614054
        %v3771 = vadd.f32 %v3765, -1.4531521
        %v3772 = vadd.f32 %v3766, -1.4531521
        %v3773 = vadd.f32 %v3767, -1.4531521
        %v3774 = vadd.f32 %v3768, -1.4531521
        %v3775 = vadd.f32 %v3769, -1.4531521
        %v3776 = vadd.f32 %v3770, -1.4531521
        %v3777 = vmul.f32 %v3771, %v3754
        %v3778 = vmul.f32 %v3772, %v3756
        %v3779 = vmul.f32 %v3773, %v3758
        %v3780 = vmul.f32 %v3774, %v3760
        %v3781 = vmul.f32 %v3775, %v3762
        %v3782 = vmul.f32 %v3776, %v3764
        %v3783 = vadd.f32 %v3777, 1.4214138
        %v3784 = vadd.f32 %v3778, 1.4214138
        %v3785 = vadd.f32 %v3779, 1.4214138
        %v3786 = vadd.f32 %v3780, 1.4214138
        %v3787 = vadd.f32 %v3781, 1.4214138
        %v3788 = vadd.f32 %v3782, 1.4214138
        %v3789 = vmul.f32 %v3783, %v3754
        %v3790 = vmul.f32 %v3784, %v3756
        %v3791 = vmul.f32 %v3785, %v3758
        %v3792 = vmul.f32 %v3786, %v3760
        %v3793 = vmul.f32 %v3787, %v3762
        %v3794 = vmul.f32 %v3788, %v3764
        %v3795 = vadd.f32 %v3789, -0.28449672
        %v3796 = vadd.f32 %v3790, -0.28449672
        %v3797 = vadd.f32 %v3791, -0.28449672
        %v3798 = vadd.f32 %v3792, -0.28449672
        %v3799 = vadd.f32 %v3793, -0.28449672
        %v3800 = vadd.f32 %v3794, -0.28449672
        %v3801 = vmul.f32 %v3795, %v3754
        %v3802 = vmul.f32 %v3796, %v3756
        %v3803 = vmul.f32 %v3797, %v3758
        %v3804 = vmul.f32 %v3798, %v3760
        %v3805 = vmul.f32 %v3799, %v3762
        %v3806 = vmul.f32 %v3800, %v3764
        %v3807 = vadd.f32 %v3801, 0.2548296
        %v3808 = vadd.f32 %v3802, 0.2548296
        %v3809 = vadd.f32 %v3803, 0.2548296
        %v3810 = vadd.f32 %v3804, 0.2548296
        %v3811 = vadd.f32 %v3805, 0.2548296
        %v3812 = vadd.f32 %v3806, 0.2548296
        %v3813 = vmul.f32 %v3807, %v3754
        %v3814 = vmul.f32 %v3808, %v3756
        %v3815 = vmul.f32 %v3809, %v3758
        %v3816 = vmul.f32 %v3810, %v3760
        %v3817 = vmul.f32 %v3811, %v3762
        %v3818 = vmul.f32 %v3812, %v3764
        %v3819 = vsub.f32 0.0, %v3735
        %v3820 = vsub.f32 0.0, %v3736
        %v3821 = vsub.f32 0.0, %v3737
        %v3822 = vsub.f32 0.0, %v3738
        %v3823 = vsub.f32 0.0, %v3739
        %v3824 = vsub.f32 0.0, %v3740
        %v3825 = vmul.f32 %v3819, %v3735
        %v3826 = vmul.f32 %v3820, %v3736
        %v3827 = vmul.f32 %v3821, %v3737
        %v3828 = vmul.f32 %v3822, %v3738
        %v3829 = vmul.f32 %v3823, %v3739
        %v3830 = vmul.f32 %v3824, %v3740
        %v3831 = vmul.f32 %v3825, 1.442695
        %v3832 = vpow.pop %v3831
        %v3833 = vmul.f32 %v3826, 1.442695
        %v3834 = vpow.pop %v3833
        %v3835 = vmul.f32 %v3827, 1.442695
        %v3836 = vpow.pop %v3835
        %v3837 = vmul.f32 %v3828, 1.442695
        %v3838 = vpow.pop %v3837
        %v3839 = vmul.f32 %v3829, 1.442695
        %v3840 = vpow.pop %v3839
        %v3841 = vmul.f32 %v3830, 1.442695
        %v3842 = vpow.pop %v3841
        %v3843 = vmul.f32 %v3813, %v3832
        %v3844 = vmul.f32 %v3814, %v3834
        %v3845 = vmul.f32 %v3815, %v3836
        %v3846 = vmul.f32 %v3816, %v3838
        %v3847 = vmul.f32 %v3817, %v3840
        %v3848 = vmul.f32 %v3818, %v3842
        %v3849 = vsub.f32 1.0, %v3843
        %v3850 = vsub.f32 1.0, %v3844
        %v3851 = vsub.f32 1.0, %v3845
        %v3852 = vsub.f32 1.0, %v3846
        %v3853 = vsub.f32 1.0, %v3847
        %v3854 = vsub.f32 1.0, %v3848
        %v3855 = vmul.f32 %v3729, %v3849
        %v3856 = vmul.f32 %v3730, %v3850
        %v3857 = vmul.f32 %v3731, %v3851
        %v3858 = vmul.f32 %v3732, %v3852
        %v3859 = vmul.f32 %v3733, %v3853
        %v3860 = vmul.f32 %v3734, %v3854
        %v3861 = vadd.f32 %v3855, 1.0
        %v3862 = vadd.f32 %v3856, 1.0
        %v3863 = vadd.f32 %v3857, 1.0
        %v3864 = vadd.f32 %v3858, 1.0
        %v3865 = vadd.f32 %v3859, 1.0
        %v3866 = vadd.f32 %v3860, 1.0
        %v3867 = vmul.f32 %v3711, %v3861
        %v3868 = vmul.f32 %v3712, %v3862
        %v3869 = vmul.f32 %v3713, %v3863
        %v3870 = vmul.f32 %v3714, %v3864
        %v3871 = vmul.f32 %v3715, %v3865
        %v3872 = vmul.f32 %v3716, %v3866
        %v3873 = vld [vmem:[#allocation49] sm:$0xff]
        %v3874 = vld [vmem:[#allocation50] sm:$0xff]
        %3876 = vset.pattern.permute.xlu0 0
        %3877 = vperm.xlu0 %3876, %v3874
        %v3878 = vpop.permute.xlu0 %3877
        %vm3880 = vcmask 130048
        %v3882 = vsel %vm3880, %v3873, 0
        %3884 = vmatprep.subr.mxu0 %v3868
        %3885 = vmatpush1.msra.mxu0 %v3867
        %3886 = vmatprep.subr.mxu0 %v3871
        %3887 = vmatpush1.msra.mxu0 %v3870
        %3888 = vmatprep.subr.mxu0 0.0
        %3889 = vmatpush1.msra.mxu0 0.0
        %3890 = vmatprep.subr.mxu0 0.0
        %3891 = vmatpush1.msra.mxu0 0.0
        %3892 = vmatprep.subr.mxu0 0.0
        %3893 = vmatpush1.msra.mxu0 0.0
        %3894 = vmatprep.subr.mxu0 0.0
        %3895 = vmatpush1.msra.mxu0 0.0
        %3896 = vmatprep.subr.mxu0 0.0
        %3897 = vmatpush1.msra.mxu0 0.0
        %3898 = vmatprep.subr.mxu0 0.0
        %3899 = vmatpush1.msra.mxu0 0.0
        %3900 = vmatprep.subr.mxu0 0.0
        %3901 = vmatpush1.msra.mxu0 0.0
        %3902 = vmatprep.subr.mxu0 0.0
        %3903 = vmatpush1.msra.mxu0 0.0
        %3904 = vmatprep.subr.mxu0 0.0
        %3905 = vmatpush1.msra.mxu0 0.0
        %3906 = vmatprep.subr.mxu0 0.0
        %3907 = vmatpush1.msra.mxu0 0.0
        %3908 = vmatprep.subr.mxu0 0.0
        %3909 = vmatpush1.msra.mxu0 0.0
        %3910 = vmatprep.subr.mxu0 0.0
        %3911 = vmatpush1.msra.mxu0 0.0
        %3912 = vmatprep.subr.mxu0 0.0
        %3913 = vmatpush1.msra.mxu0 0.0
        %3914 = vmatprep.subr.mxu0 0.0
        %3915 = vmatpush1.msra.mxu0 0.0
        %3916 = vmatprep.subr.mxu0 0.0
        %3917 = vmatpush1.msra.mxu0 0.0
        %3918 = vmatprep.subr.mxu0 0.0
        %3919 = vmatpush1.msra.mxu0 0.0
        %3920 = vmatprep.subr.mxu0 0.0
        %3921 = vmatpush1.msra.mxu0 0.0
        %3922 = vmatprep.subr.mxu0 0.0
        %3923 = vmatpush1.msra.mxu0 0.0
        %3924 = vmatprep.subr.mxu0 0.0
        %3925 = vmatpush1.msra.mxu0 0.0
        %3926 = vmatprep.subr.mxu0 0.0
        %3927 = vmatpush1.msra.mxu0 0.0
        %3928 = vmatprep.subr.mxu0 0.0
        %3929 = vmatpush1.msra.mxu0 0.0
        %3930 = vmatprep.subr.mxu0 0.0
        %3931 = vmatpush1.msra.mxu0 0.0
        %3932 = vmatprep.subr.mxu0 0.0
        %3933 = vmatpush1.msra.mxu0 0.0
        %3934 = vmatprep.subr.mxu0 0.0
        %3935 = vmatpush1.msra.mxu0 0.0
        %3936 = vmatprep.subr.mxu0 0.0
        %3937 = vmatpush1.msra.mxu0 0.0
        %3938 = vmatprep.subr.mxu0 0.0
        %3939 = vmatpush1.msra.mxu0 0.0
        %3940 = vmatprep.subr.mxu0 0.0
        %3941 = vmatpush1.msra.mxu0 0.0
        %3942 = vmatprep.subr.mxu0 0.0
        %3943 = vmatpush1.msra.mxu0 0.0
        %3944 = vmatprep.subr.mxu0 0.0
        %3945 = vmatpush1.msra.mxu0 0.0
        %3946 = vmatprep.subr.mxu0 0.0
        %3947 = vmatpush1.msra.mxu0 0.0
        %3948 = vmatprep.mubr.f32.mxu0 0.0
        %3949 = vmatmul.mubr.f32.gmra.mrb[0].mxu0 %v3882
        %v3950 = vpop.f32.mrb[0].mxu0
        %v3951 = vadd.f32 %v3878, %v3950
        %v3952 = vpop.f32.mrb[0].mxu0
        %v3953 = vadd.f32 %v3878, %v3952
        %3954 = vdwg.mxu0
        %3955 = vmatprep.subr.mxu0 0.0
        %3956 = vmatpush1.msra.mxu0 %v3869
        %3957 = vmatprep.subr.mxu0 0.0
        %3958 = vmatpush1.msra.mxu0 %v3872
        %3959 = vmatprep.subr.mxu0 0.0
        %3960 = vmatpush1.msra.mxu0 0.0
        %3961 = vmatprep.subr.mxu0 0.0
        %3962 = vmatpush1.msra.mxu0 0.0
        %3963 = vmatprep.subr.mxu0 0.0
        %3964 = vmatpush1.msra.mxu0 0.0
        %3965 = vmatprep.subr.mxu0 0.0
        %3966 = vmatpush1.msra.mxu0 0.0
        %3967 = vmatprep.subr.mxu0 0.0
        %3968 = vmatpush1.msra.mxu0 0.0
        %3969 = vmatprep.subr.mxu0 0.0
        %3970 = vmatpush1.msra.mxu0 0.0
        %3971 = vmatprep.subr.mxu0 0.0
        %3972 = vmatpush1.msra.mxu0 0.0
        %3973 = vmatprep.subr.mxu0 0.0
        %3974 = vmatpush1.msra.mxu0 0.0
        %3975 = vmatprep.subr.mxu0 0.0
        %3976 = vmatpush1.msra.mxu0 0.0
        %3977 = vmatprep.subr.mxu0 0.0
        %3978 = vmatpush1.msra.mxu0 0.0
        %3979 = vmatprep.subr.mxu0 0.0
        %3980 = vmatpush1.msra.mxu0 0.0
        %3981 = vmatprep.subr.mxu0 0.0
        %3982 = vmatpush1.msra.mxu0 0.0
        %3983 = vmatprep.subr.mxu0 0.0
        %3984 = vmatpush1.msra.mxu0 0.0
        %3985 = vmatprep.subr.mxu0 0.0
        %3986 = vmatpush1.msra.mxu0 0.0
        %3987 = vmatprep.subr.mxu0 0.0
        %3988 = vmatpush1.msra.mxu0 0.0
        %3989 = vmatprep.subr.mxu0 0.0
        %3990 = vmatpush1.msra.mxu0 0.0
        %3991 = vmatprep.subr.mxu0 0.0
        %3992 = vmatpush1.msra.mxu0 0.0
        %3993 = vmatprep.subr.mxu0 0.0
        %3994 = vmatpush1.msra.mxu0 0.0
        %3995 = vmatprep.subr.mxu0 0.0
        %3996 = vmatpush1.msra.mxu0 0.0
        %3997 = vmatprep.subr.mxu0 0.0
        %3998 = vmatpush1.msra.mxu0 0.0
        %3999 = vmatprep.subr.mxu0 0.0
        %4000 = vmatpush1.msra.mxu0 0.0
        %4001 = vmatprep.subr.mxu0 0.0
        %4002 = vmatpush1.msra.mxu0 0.0
        %4003 = vmatprep.subr.mxu0 0.0
        %4004 = vmatpush1.msra.mxu0 0.0
        %4005 = vmatprep.subr.mxu0 0.0
        %4006 = vmatpush1.msra.mxu0 0.0
        %4007 = vmatprep.subr.mxu0 0.0
        %4008 = vmatpush1.msra.mxu0 0.0
        %4009 = vmatprep.subr.mxu0 0.0
        %4010 = vmatpush1.msra.mxu0 0.0
        %4011 = vmatprep.subr.mxu0 0.0
        %4012 = vmatpush1.msra.mxu0 0.0
        %4013 = vmatprep.subr.mxu0 0.0
        %4014 = vmatpush1.msra.mxu0 0.0
        %4015 = vmatprep.subr.mxu0 0.0
        %4016 = vmatpush1.msra.mxu0 0.0
        %4017 = vmatprep.subr.mxu0 0.0
        %4018 = vmatpush1.msra.mxu0 0.0
        %4019 = vmatprep.mubr.f32.mxu0 0.0
        %4020 = vmatmul.mubr.f32.gmra.mrb[0].mxu0 %v3882
        %v4021 = vpop.f32.mrb[0].mxu0
        %v4022 = vadd.f32 %v3878, %v4021
        %v4023 = vpop.f32.mrb[0].mxu0
        %4024 = vdwg.mxu0
        %4025 = vst [vmem:[%s1323] sm:$0xff] %v3951
        %4026 = vst [vmem:[%s1323 + $0x8] sm:$0xff] %v3953
        %4027 = vst [vmem:[%s1323 + $0x10] sm:$0xff] %v4022
        %s4028 = sand.u32 %s736, 1
        %s4029 = scalar_lea.sflag [#allocation7], %s4028
        %s4030 = sand.u32 %s736, 1
        %s4031 = smul.addr %s4030, 24
        %s4032 = scalar_lea.vmem [#allocation52], %s4031
        // Predicated region
        $region265: #{tpu_custom_call.1} parent=139 // pred_check
          %p4033 = pneg %p746
        $region266: #{tpu_custom_call.1} parent=139 // pred_check_branch
          %4035 = sbr.rel (%p4033) target = $region268
        $region267: #{tpu_custom_call.1} parent=139 // pred_region
          %s4037 = ssub.s32 384, 384
          %4038 = vsyncadd %s4029, %s4037
          %s4039 = smul.addr %s93, 3
          %s4040 = smul.addr %s4039, 128
          %s4041 = scalar_lea.hbm %s61, %s4040
          %s4043 = sshll.u32 %s4032, 4
          %s4044 = int_to_ptr.vmem [resolvable:$true] %s4043
          %4046 = dma.vmem_to_hbm [thread:$0]  %s4044, 384, %s4041, %s4029
        $region268: #{tpu_custom_call.1} parent=139 // pred_fallthru
          _
      $region140: #{tpu_custom_call.1} parent=5 // pred_fallthru
        _
      %p4047 = scmp.le.s32.totalorder 2, %s88
      // Predicated region
      $region269: #{tpu_custom_call.1} parent=5 // pred_check
        %p4048 = pneg %p4047
      $region270: #{tpu_custom_call.1} parent=5 // pred_check_branch
        %4050 = sbr.rel (%p4048) target = $region272
      $region271: #{tpu_custom_call.1} parent=5 // pred_region
        %s4051 = ssub.s32 %s88, 2
        // Predicated region
        $region273: #{tpu_custom_call.1} parent=271 // pred_check
          %p4052 = pneg %p752
        $region274: #{tpu_custom_call.1} parent=271 // pred_check_branch
          %4054 = sbr.rel (%p4052) target = $region276
        $region275: #{tpu_custom_call.1} parent=271 // pred_region
          %s4055 = sand.u32 %s737, 1
          %s4056 = scalar_lea.sflag [#allocation7], %s4055
          %s4057 = sand.u32 %s737, 1
          %s4058 = smul.addr %s4057, 24
          %s4059 = scalar_lea.vmem [#allocation52], %s4058
          %4060 = dma.done %s4056, 384
        $region276: #{tpu_custom_call.1} parent=271 // pred_fallthru
          _
      $region272: #{tpu_custom_call.1} parent=5 // pred_fallthru
        _
    $region6: #{tpu_custom_call.1} parent=1 // loop_footer
      %s92 = sadd.s32 1, %s88
    $region7: #{tpu_custom_call.1} parent=1 // loop_footer_branch
      %87 = sbr.rel target = $region3
    $region8: #{tpu_custom_call.1} parent=1 // loop_exit
      _
    %4061 = vsyncpa [#allocation6], 1
    %s4062 = scalar_lea.sflag [#allocation6], 1
    %4063 = vsyncpa %s4062, 1
    %4064 = vsyncpa [#allocation9], 1
    %4065 = vsyncpa [#allocation12], 1
    %4066 = vsyncpa [#allocation15], 1
    %4067 = vsyncpa [#allocation18], 1
    %4068 = vsyncpa [#allocation21], 1
    %4069 = vsyncpa [#allocation24], 1
    %4070 = vsyncpa [#allocation27], 1
    %4071 = vsyncpa [#allocation30], 1
    %4072 = vsyncpa [#allocation33], 1
    %4073 = vsyncpa [#allocation36], 1
    %4074 = vsyncpa [#allocation39], 1
    %4075 = vsyncpa [#allocation42], 1
    %4076 = vsyncpa [#allocation45], 1
    %4077 = vsyncpa [#allocation48], 1
    %4078 = vsyncpa [#allocation51], 1
    %4079 = vsyncpa [#allocation7], 1
    %s4080 = scalar_lea.sflag [#allocation7], 1
    %4081 = vsyncpa %s4080, 1

</llo_original>
